<compile_context>
chip_gen: v6e
topology: v6e:2x2x1
jax: 0.10.0
libtpu: 0.0.40
codegen_flags: <defaults>
</compile_context>

<pallas_src>
import jax
import jax.numpy as jnp
from jax.experimental import pallas as pl
from jax.experimental.pallas import tpu as pltpu

LANE = 128
LATENT = 3  # SANController latent dim (mean / log_std output size)


def _round8(n):
    return ((n + 7) // 8) * 8


def _layer_shapes(input_n, num_actions, h_size=24):
    """(name, (fan_in, fan_out)) for every Linear in the torch module."""
    return [
        # SANController encoder
        ("e1", (input_n, 24)), ("e2", (24, 12)), ("e3", (12, 6)), ("e4", (6, 3)),
        # heads
        ("m", (3, LATENT)), ("s", (3, LATENT)),
        # SANController decoder
        ("d1", (LATENT, 6)), ("d2", (6, 12)), ("d3", (12, 24)), ("d4", (24, input_n)),
        # ExtractNet fc
        ("f1", (input_n, h_size)), ("f2", (h_size, num_actions)),
    ]


def pack_params(params, input_n, num_actions, h_size=24):
    """Pack all weights/biases into one zero-padded (rows, 128) f32 slab.

    Each layer's weight occupies rows [r0, r0+fan_in) of an 8-row-aligned
    block and its bias is stored in the first padded row directly below it
    (row r0+fan_in), so biases do not cost their own 8x128 blocks.  Padding
    is zero-filled so dot contractions never see garbage lanes.
    Returns (slab, layout) with layout[name] = (row0, nrows, ncols).
    """
    layout = {}
    blocks = []
    row = 0
    for name, (fi, fo) in _layer_shapes(input_n, num_actions, h_size):
        w = jnp.asarray(params[name + "w"], jnp.float32)
        b = jnp.asarray(params[name + "b"], jnp.float32)
        assert w.shape == (fi, fo) and b.shape == (fo,)
        assert fo <= LANE, f"{name}: fan_out {fo} > {LANE} lanes not supported"
        nrows = _round8(fi + 1)                      # weight rows + 1 bias row
        block = jnp.zeros((nrows, LANE), jnp.float32)
        block = block.at[:fi, :fo].set(w)
        block = block.at[fi, :fo].set(b)
        layout[name + "w"] = (row, fi, fo)
        layout[name + "b"] = (row + fi, 1, fo)
        blocks.append(block)
        row += nrows
    slab = jnp.concatenate(blocks, axis=0)           # (184, 128) for defaults
    return slab, layout


def make_kernel(layout, input_n, latent=LATENT):
    """Build the kernel body with the (static) slab layout baked in."""
    PREC = jax.lax.Precision.HIGHEST   # keep f32 through the MXU

    def kernel(xe_ref, p_ref, o_ref):
        def view(name):
            r0, r, c = layout[name]
            return p_ref[r0:r0 + r, :c]              # static slice: free

        def lin(v, name):
            w = view(name + "w")
            b = view(name + "b")                     # (1, fan_out) row, broadcasts
            return jnp.dot(v, w, precision=PREC,
                           preferred_element_type=jnp.float32) + b

        xe = xe_ref[...]                             # (Bt, input_n + latent)
        x = xe[:, :input_n]
        eps = xe[:, input_n:input_n + latent]

        # --- SANController encoder ---
        h = jnp.tanh(lin(x, "e1"))
        h = jnp.tanh(lin(h, "e2"))
        h = jnp.tanh(lin(h, "e3"))
        h = jnp.tanh(lin(h, "e4"))

        # --- reparameterized latent: z = mean + exp(log_std) * eps ---
        z = lin(h, "m") + jnp.exp(lin(h, "s")) * eps

        # --- SANController decoder ---
        n = jnp.tanh(lin(z, "d1"))
        n = jnp.tanh(lin(n, "d2"))
        n = jnp.tanh(lin(n, "d3"))
        noise = lin(n, "d4")

        # noise = noise / (100 * ||noise||)  via rsqrt (EUP slot) + multiply.
        inv = jax.lax.rsqrt(jnp.sum(noise * noise, axis=-1, keepdims=True))
        noise = noise * (0.01 * inv)

        # --- ExtractNet ---  (normalize_state(x) result is discarded in torch)
        xp = x + noise
        o_ref[...] = lin(lin(xp, "f1"), "f2")

    return kernel


class SANExtractorPallas:
    """SANExtractor forward as one fused Pallas TPU kernel.

    Param packing and kernel construction happen once in __init__; pallas_call
    construction happens once per batch shape at jax.jit trace time.  The
    steady-state per-call path is a single compiled dispatch.
    """

    # Batch tile for the gridded (large-B) path.  (tile, 6) input + (tile, A)
    # output, double-buffered, plus the ~92 KiB slab stays far below the
    # 16 / 32 MiB default scoped VMEM on v5e / v6e / v7x.
    TILE_B = 1024

    def __init__(self, params, input_n, num_actions, h_size=24):
        self.input_n = int(input_n)
        self.num_actions = int(num_actions)
        self.slab, layout = pack_params(params, input_n, num_actions, h_size)
        self._kernel = make_kernel(layout, self.input_n)
        self._forward = jax.jit(self._traced_forward)

    def _build_call(self, batch):
        out_shape = jax.ShapeDtypeStruct((batch, self.num_actions), jnp.float32)
        in_cols = self.input_n + LATENT
        tile = self.TILE_B
        if batch >= 2 * tile and batch % tile == 0:
            # Large batch: shard the batch axis over a parallel grid.  On v7x
            # this splits across both TensorCores; on single-TC v5e/v6e it is
            # a cheap pipelined loop with >=1024-row tiles.
            return pl.pallas_call(
                self._kernel,
                out_shape=out_shape,
                grid=(batch // tile,),
                in_specs=[
                    pl.BlockSpec((tile, in_cols), lambda i: (i, 0)),
                    pl.BlockSpec(self.slab.shape, lambda i: (0, 0)),
                ],
                out_specs=pl.BlockSpec((tile, self.num_actions),
                                       lambda i: (i, 0)),
                compiler_params=pltpu.CompilerParams(
                    dimension_semantics=("parallel",)),
            )
        # Small batch: grid-less, everything resident in VMEM (no grid-step
        # overhead on single-TC chips; kernel is latency-bound at these sizes).
        vspec = pl.BlockSpec(memory_space=pltpu.MemorySpace.VMEM)
        return pl.pallas_call(
            self._kernel,
            out_shape=out_shape,
            in_specs=[vspec, vspec],
            out_specs=vspec,
        )

    def _traced_forward(self, x, eps, slab):
        # Fuse x and eps into one (B, input_n + latent) slab -> single input
        # DMA stream per grid step.
        xe = jnp.concatenate(
            [x.astype(jnp.float32), eps.astype(jnp.float32)], axis=1)
        return self._build_call(x.shape[0])(xe, slab)

    def __call__(self, x, eps):
        return self._forward(x, eps, self.slab)


def init_params(key, input_n, num_actions, h_size=24):
    """Deterministic PyTorch-style uniform(-1/sqrt(fan_in), +) init."""
    params = {}
    for name, (fan_in, fan_out) in _layer_shapes(input_n, num_actions, h_size):
        key, kw, kb = jax.random.split(key, 3)
        bound = 1.0 / (fan_in ** 0.5)
        params[name + "w"] = jax.random.uniform(
            kw, (fan_in, fan_out), jnp.float32, -bound, bound)
        params[name + "b"] = jax.random.uniform(
            kb, (fan_out,), jnp.float32, -bound, bound)
    return params


def san_extractor_reference(x, eps, p):
    """Pure-JAX reference of the same forward pass (for validation)."""
    prec = jax.lax.Precision.HIGHEST
    lin = lambda v, w, b: jnp.dot(v, w, precision=prec) + b
    h = jnp.tanh(lin(x, p["e1w"], p["e1b"]))
    h = jnp.tanh(lin(h, p["e2w"], p["e2b"]))
    h = jnp.tanh(lin(h, p["e3w"], p["e3b"]))
    h = jnp.tanh(lin(h, p["e4w"], p["e4b"]))
    z = lin(h, p["mw"], p["mb"]) + jnp.exp(lin(h, p["sw"], p["sb"])) * eps
    n = jnp.tanh(lin(z, p["d1w"], p["d1b"]))
    n = jnp.tanh(lin(n, p["d2w"], p["d2b"]))
    n = jnp.tanh(lin(n, p["d3w"], p["d3b"]))
    noise = lin(n, p["d4w"], p["d4b"])
    noise = noise / (100.0 * jnp.linalg.norm(noise, axis=-1, keepdims=True))
    xp = x + noise
    return lin(lin(xp, p["f1w"], p["f1b"]), p["f2w"], p["f2b"])


if __name__ == "__main__":
    input_n = 3        # Pendulum-v0 observation dim
    num_actions = 8    # discretized action bins
    batch = 8

    key = jax.random.PRNGKey(0)
    kp, kx, ke = jax.random.split(key, 3)
    params = init_params(kp, input_n, num_actions)
    model = SANExtractorPallas(params, input_n, num_actions)

    # Small-batch (grid-less) path.
    x = jax.random.normal(kx, (batch, input_n), jnp.float32)
    eps = jax.random.normal(ke, (batch, LATENT), jnp.float32)  # torch.randn_like
    out = jax.block_until_ready(model(x, eps))
    ref = san_extractor_reference(x, eps, params)
    assert out.shape == (batch, num_actions)
    assert jnp.allclose(out, ref, atol=1e-4, rtol=1e-4), \
        "mismatch vs reference (small batch)"

    # Gridded (parallel batch) path — same compiled model object, new shape.
    big = 2 * SANExtractorPallas.TILE_B
    kx2, ke2 = jax.random.split(ke)
    xb = jax.random.normal(kx2, (big, input_n), jnp.float32)
    eb = jax.random.normal(ke2, (big, LATENT), jnp.float32)
    outb = jax.block_until_ready(model(xb, eb))
    refb = san_extractor_reference(xb, eb, params)
    assert outb.shape == (big, num_actions)
    assert jnp.allclose(outb, refb, atol=1e-4, rtol=1e-4), \
        "mismatch vs reference (gridded batch)"

    print("KERNEL_OK")
</pallas_src>

<mosaic_0001>
module attributes {stable_mosaic.version = 11 : i64} {
  func.func @kernel(%arg0: memref<8x6xf32, #tpu.memory_space<vmem>>, %arg1: memref<184x128xf32, #tpu.memory_space<vmem>>, %arg2: memref<8x8xf32, #tpu.memory_space<vmem>>) attributes {dimension_semantics = [], scalar_prefetch = 0 : i64, scratch_operands = 0 : i64, tpu.core_type = #tpu.core_type<tc>} {
    %c0 = arith.constant 0 : index
    %c0_0 = arith.constant 0 : index
    %0 = vector.load %arg0[%c0, %c0_0] : memref<8x6xf32, #tpu.memory_space<vmem>>, vector<8x6xf32>
    %1 = vector.extract_strided_slice %0 {offsets = [0, 0], sizes = [8, 3], strides = [1, 1]} : vector<8x6xf32> to vector<8x3xf32>
    %2 = vector.extract_strided_slice %0 {offsets = [0, 3], sizes = [8, 3], strides = [1, 1]} : vector<8x6xf32> to vector<8x3xf32>
    %c0_1 = arith.constant 0 : index
    %c0_2 = arith.constant 0 : index
    %3 = vector.load %arg1[%c0_1, %c0_2] : memref<184x128xf32, #tpu.memory_space<vmem>>, vector<3x24xf32>
    %c3 = arith.constant 3 : index
    %c0_3 = arith.constant 0 : index
    %4 = vector.load %arg1[%c3, %c0_3] : memref<184x128xf32, #tpu.memory_space<vmem>>, vector<1x24xf32>
    %cst = arith.constant dense<0.000000e+00> : vector<8x24xf32>
    %5 = tpu.matmul %1, %3, %cst {dimension_numbers = #tpu.dot_dimension_numbers<[1], [0], [0], [1], [0, 0, 1, 1], [], []>, precision = #tpu.contract_precision<fp32>} : vector<8x3xf32>, vector<3x24xf32>, vector<8x24xf32> -> vector<8x24xf32>
    %6 = vector.broadcast %4 : vector<1x24xf32> to vector<8x24xf32>
    %7 = arith.addf %5, %6 : vector<8x24xf32>
    %8 = math.tanh %7 : vector<8x24xf32>
    %c8 = arith.constant 8 : index
    %c0_4 = arith.constant 0 : index
    %9 = vector.load %arg1[%c8, %c0_4] : memref<184x128xf32, #tpu.memory_space<vmem>>, vector<24x12xf32>
    %c32 = arith.constant 32 : index
    %c0_5 = arith.constant 0 : index
    %10 = vector.load %arg1[%c32, %c0_5] : memref<184x128xf32, #tpu.memory_space<vmem>>, vector<1x12xf32>
    %cst_6 = arith.constant dense<0.000000e+00> : vector<8x12xf32>
    %11 = tpu.matmul %8, %9, %cst_6 {dimension_numbers = #tpu.dot_dimension_numbers<[1], [0], [0], [1], [0, 0, 1, 1], [], []>, precision = #tpu.contract_precision<fp32>} : vector<8x24xf32>, vector<24x12xf32>, vector<8x12xf32> -> vector<8x12xf32>
    %12 = vector.broadcast %10 : vector<1x12xf32> to vector<8x12xf32>
    %13 = arith.addf %11, %12 : vector<8x12xf32>
    %14 = math.tanh %13 : vector<8x12xf32>
    %c40 = arith.constant 40 : index
    %c0_7 = arith.constant 0 : index
    %15 = vector.load %arg1[%c40, %c0_7] : memref<184x128xf32, #tpu.memory_space<vmem>>, vector<12x6xf32>
    %c52 = arith.constant 52 : index
    %c0_8 = arith.constant 0 : index
    %16 = vector.load %arg1[%c52, %c0_8] : memref<184x128xf32, #tpu.memory_space<vmem>>, vector<1x6xf32>
    %cst_9 = arith.constant dense<0.000000e+00> : vector<8x6xf32>
    %17 = tpu.matmul %14, %15, %cst_9 {dimension_numbers = #tpu.dot_dimension_numbers<[1], [0], [0], [1], [0, 0, 1, 1], [], []>, precision = #tpu.contract_precision<fp32>} : vector<8x12xf32>, vector<12x6xf32>, vector<8x6xf32> -> vector<8x6xf32>
    %18 = vector.broadcast %16 : vector<1x6xf32> to vector<8x6xf32>
    %19 = arith.addf %17, %18 : vector<8x6xf32>
    %20 = math.tanh %19 : vector<8x6xf32>
    %c56 = arith.constant 56 : index
    %c0_10 = arith.constant 0 : index
    %21 = vector.load %arg1[%c56, %c0_10] : memref<184x128xf32, #tpu.memory_space<vmem>>, vector<6x3xf32>
    %c62 = arith.constant 62 : index
    %c0_11 = arith.constant 0 : index
    %22 = vector.load %arg1[%c62, %c0_11] : memref<184x128xf32, #tpu.memory_space<vmem>>, vector<1x3xf32>
    %cst_12 = arith.constant dense<0.000000e+00> : vector<8x3xf32>
    %23 = tpu.matmul %20, %21, %cst_12 {dimension_numbers = #tpu.dot_dimension_numbers<[1], [0], [0], [1], [0, 0, 1, 1], [], []>, precision = #tpu.contract_precision<fp32>} : vector<8x6xf32>, vector<6x3xf32>, vector<8x3xf32> -> vector<8x3xf32>
    %24 = vector.broadcast %22 : vector<1x3xf32> to vector<8x3xf32>
    %25 = arith.addf %23, %24 : vector<8x3xf32>
    %26 = math.tanh %25 : vector<8x3xf32>
    %c64 = arith.constant 64 : index
    %c0_13 = arith.constant 0 : index
    %27 = vector.load %arg1[%c64, %c0_13] : memref<184x128xf32, #tpu.memory_space<vmem>>, vector<3x3xf32>
    %c67 = arith.constant 67 : index
    %c0_14 = arith.constant 0 : index
    %28 = vector.load %arg1[%c67, %c0_14] : memref<184x128xf32, #tpu.memory_space<vmem>>, vector<1x3xf32>
    %cst_15 = arith.constant dense<0.000000e+00> : vector<8x3xf32>
    %29 = tpu.matmul %26, %27, %cst_15 {dimension_numbers = #tpu.dot_dimension_numbers<[1], [0], [0], [1], [0, 0, 1, 1], [], []>, precision = #tpu.contract_precision<fp32>} : vector<8x3xf32>, vector<3x3xf32>, vector<8x3xf32> -> vector<8x3xf32>
    %30 = vector.broadcast %28 : vector<1x3xf32> to vector<8x3xf32>
    %31 = arith.addf %29, %30 : vector<8x3xf32>
    %c72 = arith.constant 72 : index
    %c0_16 = arith.constant 0 : index
    %32 = vector.load %arg1[%c72, %c0_16] : memref<184x128xf32, #tpu.memory_space<vmem>>, vector<3x3xf32>
    %c75 = arith.constant 75 : index
    %c0_17 = arith.constant 0 : index
    %33 = vector.load %arg1[%c75, %c0_17] : memref<184x128xf32, #tpu.memory_space<vmem>>, vector<1x3xf32>
    %cst_18 = arith.constant dense<0.000000e+00> : vector<8x3xf32>
    %34 = tpu.matmul %26, %32, %cst_18 {dimension_numbers = #tpu.dot_dimension_numbers<[1], [0], [0], [1], [0, 0, 1, 1], [], []>, precision = #tpu.contract_precision<fp32>} : vector<8x3xf32>, vector<3x3xf32>, vector<8x3xf32> -> vector<8x3xf32>
    %35 = vector.broadcast %33 : vector<1x3xf32> to vector<8x3xf32>
    %36 = arith.addf %34, %35 : vector<8x3xf32>
    %37 = math.exp %36 : vector<8x3xf32>
    %38 = arith.mulf %37, %2 : vector<8x3xf32>
    %39 = arith.addf %31, %38 : vector<8x3xf32>
    %c80 = arith.constant 80 : index
    %c0_19 = arith.constant 0 : index
    %40 = vector.load %arg1[%c80, %c0_19] : memref<184x128xf32, #tpu.memory_space<vmem>>, vector<3x6xf32>
    %c83 = arith.constant 83 : index
    %c0_20 = arith.constant 0 : index
    %41 = vector.load %arg1[%c83, %c0_20] : memref<184x128xf32, #tpu.memory_space<vmem>>, vector<1x6xf32>
    %cst_21 = arith.constant dense<0.000000e+00> : vector<8x6xf32>
    %42 = tpu.matmul %39, %40, %cst_21 {dimension_numbers = #tpu.dot_dimension_numbers<[1], [0], [0], [1], [0, 0, 1, 1], [], []>, precision = #tpu.contract_precision<fp32>} : vector<8x3xf32>, vector<3x6xf32>, vector<8x6xf32> -> vector<8x6xf32>
    %43 = vector.broadcast %41 : vector<1x6xf32> to vector<8x6xf32>
    %44 = arith.addf %42, %43 : vector<8x6xf32>
    %45 = math.tanh %44 : vector<8x6xf32>
    %c88 = arith.constant 88 : index
    %c0_22 = arith.constant 0 : index
    %46 = vector.load %arg1[%c88, %c0_22] : memref<184x128xf32, #tpu.memory_space<vmem>>, vector<6x12xf32>
    %c94 = arith.constant 94 : index
    %c0_23 = arith.constant 0 : index
    %47 = vector.load %arg1[%c94, %c0_23] : memref<184x128xf32, #tpu.memory_space<vmem>>, vector<1x12xf32>
    %cst_24 = arith.constant dense<0.000000e+00> : vector<8x12xf32>
    %48 = tpu.matmul %45, %46, %cst_24 {dimension_numbers = #tpu.dot_dimension_numbers<[1], [0], [0], [1], [0, 0, 1, 1], [], []>, precision = #tpu.contract_precision<fp32>} : vector<8x6xf32>, vector<6x12xf32>, vector<8x12xf32> -> vector<8x12xf32>
    %49 = vector.broadcast %47 : vector<1x12xf32> to vector<8x12xf32>
    %50 = arith.addf %48, %49 : vector<8x12xf32>
    %51 = math.tanh %50 : vector<8x12xf32>
    %c96 = arith.constant 96 : index
    %c0_25 = arith.constant 0 : index
    %52 = vector.load %arg1[%c96, %c0_25] : memref<184x128xf32, #tpu.memory_space<vmem>>, vector<12x24xf32>
    %c108 = arith.constant 108 : index
    %c0_26 = arith.constant 0 : index
    %53 = vector.load %arg1[%c108, %c0_26] : memref<184x128xf32, #tpu.memory_space<vmem>>, vector<1x24xf32>
    %cst_27 = arith.constant dense<0.000000e+00> : vector<8x24xf32>
    %54 = tpu.matmul %51, %52, %cst_27 {dimension_numbers = #tpu.dot_dimension_numbers<[1], [0], [0], [1], [0, 0, 1, 1], [], []>, precision = #tpu.contract_precision<fp32>} : vector<8x12xf32>, vector<12x24xf32>, vector<8x24xf32> -> vector<8x24xf32>
    %55 = vector.broadcast %53 : vector<1x24xf32> to vector<8x24xf32>
    %56 = arith.addf %54, %55 : vector<8x24xf32>
    %57 = math.tanh %56 : vector<8x24xf32>
    %c112 = arith.constant 112 : index
    %c0_28 = arith.constant 0 : index
    %58 = vector.load %arg1[%c112, %c0_28] : memref<184x128xf32, #tpu.memory_space<vmem>>, vector<24x3xf32>
    %c136 = arith.constant 136 : index
    %c0_29 = arith.constant 0 : index
    %59 = vector.load %arg1[%c136, %c0_29] : memref<184x128xf32, #tpu.memory_space<vmem>>, vector<1x3xf32>
    %cst_30 = arith.constant dense<0.000000e+00> : vector<8x3xf32>
    %60 = tpu.matmul %57, %58, %cst_30 {dimension_numbers = #tpu.dot_dimension_numbers<[1], [0], [0], [1], [0, 0, 1, 1], [], []>, precision = #tpu.contract_precision<fp32>} : vector<8x24xf32>, vector<24x3xf32>, vector<8x3xf32> -> vector<8x3xf32>
    %61 = vector.broadcast %59 : vector<1x3xf32> to vector<8x3xf32>
    %62 = arith.addf %60, %61 : vector<8x3xf32>
    %63 = arith.mulf %62, %62 : vector<8x3xf32>
    %cst_31 = arith.constant dense<0.000000e+00> : vector<8xf32>
    %64 = vector.multi_reduction <add>, %63, %cst_31 [1] : vector<8x3xf32> to vector<8xf32>
    %65 = vector.shape_cast %64 : vector<8xf32> to vector<8x1xf32>
    %66 = math.rsqrt %65 : vector<8x1xf32>
    %cst_32 = arith.constant 0.00999999977 : f32
    %67 = vector.broadcast %cst_32 : f32 to vector<8x1xf32>
    %68 = arith.mulf %67, %66 : vector<8x1xf32>
    %69 = vector.broadcast %68 : vector<8x1xf32> to vector<8x3xf32>
    %70 = arith.mulf %62, %69 : vector<8x3xf32>
    %71 = arith.addf %1, %70 : vector<8x3xf32>
    %c144 = arith.constant 144 : index
    %c0_33 = arith.constant 0 : index
    %72 = vector.load %arg1[%c144, %c0_33] : memref<184x128xf32, #tpu.memory_space<vmem>>, vector<3x24xf32>
    %c147 = arith.constant 147 : index
    %c0_34 = arith.constant 0 : index
    %73 = vector.load %arg1[%c147, %c0_34] : memref<184x128xf32, #tpu.memory_space<vmem>>, vector<1x24xf32>
    %cst_35 = arith.constant dense<0.000000e+00> : vector<8x24xf32>
    %74 = tpu.matmul %71, %72, %cst_35 {dimension_numbers = #tpu.dot_dimension_numbers<[1], [0], [0], [1], [0, 0, 1, 1], [], []>, precision = #tpu.contract_precision<fp32>} : vector<8x3xf32>, vector<3x24xf32>, vector<8x24xf32> -> vector<8x24xf32>
    %75 = vector.broadcast %73 : vector<1x24xf32> to vector<8x24xf32>
    %76 = arith.addf %74, %75 : vector<8x24xf32>
    %c152 = arith.constant 152 : index
    %c0_36 = arith.constant 0 : index
    %77 = vector.load %arg1[%c152, %c0_36] : memref<184x128xf32, #tpu.memory_space<vmem>>, vector<24x8xf32>
    %c176 = arith.constant 176 : index
    %c0_37 = arith.constant 0 : index
    %78 = vector.load %arg1[%c176, %c0_37] : memref<184x128xf32, #tpu.memory_space<vmem>>, vector<1x8xf32>
    %cst_38 = arith.constant dense<0.000000e+00> : vector<8x8xf32>
    %79 = tpu.matmul %76, %77, %cst_38 {dimension_numbers = #tpu.dot_dimension_numbers<[1], [0], [0], [1], [0, 0, 1, 1], [], []>, precision = #tpu.contract_precision<fp32>} : vector<8x24xf32>, vector<24x8xf32>, vector<8x8xf32> -> vector<8x8xf32>
    %80 = vector.broadcast %78 : vector<1x8xf32> to vector<8x8xf32>
    %81 = arith.addf %79, %80 : vector<8x8xf32>
    %c0_39 = arith.constant 0 : index
    %c0_40 = arith.constant 0 : index
    %82 = vector.load %arg2[%c0_39, %c0_40] : memref<8x8xf32, #tpu.memory_space<vmem>>, vector<8x8xf32>
    tpu.vector_store %arg2[%c0_39, %c0_40], %81 {strides = array<i32>} : memref<8x8xf32, #tpu.memory_space<vmem>>, vector<8x8xf32>,
    return
  }
}

</mosaic_0001>

<llo_original>
// kernel: _traced_forward.1
$region0: #{_traced_forward.1}
  #allocation0 [shape = 'u32[]', space=smem, size = 0x4, offset = 0x4, fixed_abs, tag = 'smem constant byte address 0x4 - core index']
  #allocation1 [shape = 'u32[144,128]{1,0:T(1,128)}', space=vmem, size = 0x12000, scoped, tag = 'internal scratch']
  %s0 = inlined_call_operand.vmem [shape: f32[8,6], index: 0, kind: input, shape index: {}]
  %s1 = inlined_call_operand.hbm [shape: f32[184,128], index: 1, kind: input, shape index: {}]
  %s2 = inlined_call_operand.hbm [shape: f32[8,8], index: 2, kind: output, shape index: {}]
  %s3 = sld [smem:[#allocation0]]
  $region22: #{_traced_forward.1} parent=0
    _
  %s5 = ssub.s32 1, %s3
  %s6 = scalar_select 0, %s5, %s3
  $region1: #{_traced_forward.1} parent=0
    #allocation2 [shape = 'u8[94208]{0}', space=vmem, size = 0x17000, scoped, tag = 'input window, operand 1, single buffered']
    #allocation3 [shape = 's32[1]{0}', space=sflag, size = 0x4, scoped, tag = 'scoped memory for _traced_forward.1']
    #allocation4 [shape = 's32[1]{0}', space=sflag, size = 0x4, scoped, tag = 'scoped memory for _traced_forward.1']
    #allocation5 [shape = 'u8[4096]{0}', space=vmem, size = 0x1000, scoped, tag = 'output window, operand 0, single buffered']
    %7 = vsyncpa [#allocation3], 0
    %8 = vsyncpa [#allocation4], 0
    // Predicated region
    $region2: #{_traced_forward.1} parent=1 // pred_check
      _
    $region3: #{_traced_forward.1} parent=1 // pred_check_branch
      %10 = sbr.rel (0) target = $region5
    $region4: #{_traced_forward.1} parent=1 // pred_region
      _
    $region5: #{_traced_forward.1} parent=1 // pred_fallthru
      _
    // Predicated region
    $region6: #{_traced_forward.1} parent=1 // pred_check
      _
    $region7: #{_traced_forward.1} parent=1 // pred_check_branch
      %12 = sbr.rel (0) target = $region9
    $region8: #{_traced_forward.1} parent=1 // pred_region
      %s14 = ssub.s32 2944, 2944
      %15 = vsyncadd [#allocation3], %s14
      %s16 = sshll.u32 [#allocation2], 4
      %s17 = int_to_ptr.vmem [resolvable:$true] %s16
      %22 = dma.hbm_to_vmem [thread:$0]  %s1, 2944, %s17, [#allocation3], 128, 128, 8
    $region9: #{_traced_forward.1} parent=1 // pred_fallthru
      _
    // Predicated region
    $region10: #{_traced_forward.1} parent=1 // pred_check
      _
    $region11: #{_traced_forward.1} parent=1 // pred_check_branch
      %24 = sbr.rel (0) target = $region13
    $region12: #{_traced_forward.1} parent=1 // pred_region
      %25 = dma.done [#allocation3], 2944
    $region13: #{_traced_forward.1} parent=1 // pred_fallthru
      _
    %v26 = vld [vmem:[%s0] sm:$0xff]
    %v27 = vld [vmem:[#allocation2] sm:$0x7]
    %v28 = vld [vmem:[#allocation2 + $0x3] sm:$0x1]
    %v29 = vlaneseq
    %v30 = vshrl.u32 %v29, 7
    %v31 = vsub.s32 0, %v30
    %v32 = vrot.slane %v28, %v31
    %vm33 = vcmask 23552
    %v35 = vsel %vm33, %v26, 0
    %vm37 = vcmask 1042432
    %v39 = vsel %vm37, %v27, 0
    %41 = vmatprep.subr.mxu0 0.0
    %42 = vmatpush1.msra.mxu0 0.0
    %43 = vmatprep.subr.mxu0 0.0
    %44 = vmatpush1.msra.mxu0 0.0
    %45 = vmatprep.subr.mxu0 0.0
    %46 = vmatpush1.msra.mxu0 0.0
    %47 = vmatprep.subr.mxu0 0.0
    %48 = vmatpush1.msra.mxu0 0.0
    %49 = vmatprep.subr.mxu0 0.0
    %50 = vmatpush1.msra.mxu0 0.0
    %51 = vmatprep.subr.mxu0 0.0
    %52 = vmatpush1.msra.mxu0 0.0
    %53 = vmatprep.subr.mxu0 0.0
    %54 = vmatpush1.msra.mxu0 0.0
    %55 = vmatprep.subr.mxu0 0.0
    %56 = vmatpush1.msra.mxu0 0.0
    %57 = vmatprep.subr.mxu0 0.0
    %58 = vmatpush1.msra.mxu0 0.0
    %59 = vmatprep.subr.mxu0 0.0
    %60 = vmatpush1.msra.mxu0 0.0
    %61 = vmatprep.subr.mxu0 0.0
    %62 = vmatpush1.msra.mxu0 0.0
    %63 = vmatprep.subr.mxu0 0.0
    %64 = vmatpush1.msra.mxu0 0.0
    %65 = vmatprep.subr.mxu0 0.0
    %66 = vmatpush1.msra.mxu0 0.0
    %67 = vmatprep.subr.mxu0 0.0
    %68 = vmatpush1.msra.mxu0 0.0
    %69 = vmatprep.subr.mxu0 0.0
    %70 = vmatpush1.msra.mxu0 0.0
    %71 = vmatprep.subr.mxu0 0.0
    %v72 = vand.u32 %v39, 4294901760
    %73 = vmatpush1.msra.mxu0 %v72
    %74 = vmatprep.subr.mxu0 0.0
    %75 = vmatpush2.msra.mxu0 0.0
    %76 = vmatprep.subr.mxu0 0.0
    %77 = vmatpush2.msra.mxu0 0.0
    %78 = vmatprep.subr.mxu0 0.0
    %79 = vmatpush2.msra.mxu0 0.0
    %80 = vmatprep.subr.mxu0 0.0
    %81 = vmatpush2.msra.mxu0 0.0
    %82 = vmatprep.subr.mxu0 0.0
    %83 = vmatpush2.msra.mxu0 0.0
    %84 = vmatprep.subr.mxu0 0.0
    %85 = vmatpush2.msra.mxu0 0.0
    %86 = vmatprep.subr.mxu0 0.0
    %87 = vmatpush2.msra.mxu0 0.0
    %88 = vmatprep.subr.mxu0 0.0
    %89 = vmatpush2.msra.mxu0 0.0
    %90 = vmatprep.subr.mxu0 0.0
    %91 = vmatpush2.msra.mxu0 0.0
    %92 = vmatprep.subr.mxu0 0.0
    %93 = vmatpush2.msra.mxu0 0.0
    %94 = vmatprep.subr.mxu0 0.0
    %95 = vmatpush2.msra.mxu0 0.0
    %96 = vmatprep.subr.mxu0 0.0
    %97 = vmatpush2.msra.mxu0 0.0
    %98 = vmatprep.subr.mxu0 0.0
    %99 = vmatpush2.msra.mxu0 0.0
    %100 = vmatprep.subr.mxu0 0.0
    %101 = vmatpush2.msra.mxu0 0.0
    %102 = vmatprep.subr.mxu0 0.0
    %103 = vmatpush2.msra.mxu0 0.0
    %104 = vmatprep.subr.mxu0 0.0
    %105 = vmatpush2.msra.mxu0 0.0
    %106 = vmatprep.mubr.f32.mxu0 0.0
    %v107 = vand.u32 %v35, 4294901760
    %v108 = vsub.f32 %v35, %v107
    %v109 = vand.u32 %v108, 4294901760
    %v110 = vsub.f32 %v108, %v109
    %v111 = vand.u32 %v110, 4294901760
    %112 = vmatmul.mubr.f32.gmra.mxu0 %v111
    %v113 = vpop.f32.mrf.mxu0
    %v114 = vadd.f32 %v32, %v113
    %v115 = vpop.f32.mrf.mxu0
    %116 = vdwg.mxu0
    %117 = vmatprep.subr.mxu0 0.0
    %118 = vmatpush1.msra.mxu0 0.0
    %119 = vmatprep.subr.mxu0 0.0
    %120 = vmatpush1.msra.mxu0 0.0
    %121 = vmatprep.subr.mxu0 0.0
    %122 = vmatpush1.msra.mxu0 0.0
    %123 = vmatprep.subr.mxu0 0.0
    %124 = vmatpush1.msra.mxu0 0.0
    %125 = vmatprep.subr.mxu0 0.0
    %126 = vmatpush1.msra.mxu0 0.0
    %127 = vmatprep.subr.mxu0 0.0
    %128 = vmatpush1.msra.mxu0 0.0
    %129 = vmatprep.subr.mxu0 0.0
    %130 = vmatpush1.msra.mxu0 0.0
    %131 = vmatprep.subr.mxu0 0.0
    %132 = vmatpush1.msra.mxu0 0.0
    %133 = vmatprep.subr.mxu0 0.0
    %134 = vmatpush1.msra.mxu0 0.0
    %135 = vmatprep.subr.mxu0 0.0
    %136 = vmatpush1.msra.mxu0 0.0
    %137 = vmatprep.subr.mxu0 0.0
    %138 = vmatpush1.msra.mxu0 0.0
    %139 = vmatprep.subr.mxu0 0.0
    %140 = vmatpush1.msra.mxu0 0.0
    %141 = vmatprep.subr.mxu0 0.0
    %142 = vmatpush1.msra.mxu0 0.0
    %143 = vmatprep.subr.mxu0 0.0
    %144 = vmatpush1.msra.mxu0 0.0
    %145 = vmatprep.subr.mxu0 0.0
    %146 = vmatpush1.msra.mxu0 0.0
    %147 = vmatprep.subr.mxu0 0.0
    %v148 = vand.u32 %v39, 4294901760
    %v149 = vsub.f32 %v39, %v148
    %v150 = vand.u32 %v149, 4294901760
    %v151 = vsub.f32 %v149, %v150
    %v152 = vand.u32 %v151, 4294901760
    %153 = vmatpush1.msra.mxu0 %v152
    %154 = vmatprep.subr.mxu0 0.0
    %155 = vmatpush2.msra.mxu0 0.0
    %156 = vmatprep.subr.mxu0 0.0
    %157 = vmatpush2.msra.mxu0 0.0
    %158 = vmatprep.subr.mxu0 0.0
    %159 = vmatpush2.msra.mxu0 0.0
    %160 = vmatprep.subr.mxu0 0.0
    %161 = vmatpush2.msra.mxu0 0.0
    %162 = vmatprep.subr.mxu0 0.0
    %163 = vmatpush2.msra.mxu0 0.0
    %164 = vmatprep.subr.mxu0 0.0
    %165 = vmatpush2.msra.mxu0 0.0
    %166 = vmatprep.subr.mxu0 0.0
    %167 = vmatpush2.msra.mxu0 0.0
    %168 = vmatprep.subr.mxu0 0.0
    %169 = vmatpush2.msra.mxu0 0.0
    %170 = vmatprep.subr.mxu0 0.0
    %171 = vmatpush2.msra.mxu0 0.0
    %172 = vmatprep.subr.mxu0 0.0
    %173 = vmatpush2.msra.mxu0 0.0
    %174 = vmatprep.subr.mxu0 0.0
    %175 = vmatpush2.msra.mxu0 0.0
    %176 = vmatprep.subr.mxu0 0.0
    %177 = vmatpush2.msra.mxu0 0.0
    %178 = vmatprep.subr.mxu0 0.0
    %179 = vmatpush2.msra.mxu0 0.0
    %180 = vmatprep.subr.mxu0 0.0
    %181 = vmatpush2.msra.mxu0 0.0
    %182 = vmatprep.subr.mxu0 0.0
    %183 = vmatpush2.msra.mxu0 0.0
    %184 = vmatprep.subr.mxu0 0.0
    %185 = vmatpush2.msra.mxu0 0.0
    %186 = vmatprep.mubr.f32.mxu0 0.0
    %v187 = vand.u32 %v35, 4294901760
    %188 = vmatmul.mubr.f32.gmra.mxu0 %v187
    %v189 = vpop.f32.mrf.mxu0
    %v190 = vadd.f32 %v114, %v189
    %v191 = vpop.f32.mrf.mxu0
    %192 = vdwg.mxu0
    %193 = vmatprep.subr.mxu0 0.0
    %194 = vmatpush1.msra.mxu0 0.0
    %195 = vmatprep.subr.mxu0 0.0
    %196 = vmatpush1.msra.mxu0 0.0
    %197 = vmatprep.subr.mxu0 0.0
    %198 = vmatpush1.msra.mxu0 0.0
    %199 = vmatprep.subr.mxu0 0.0
    %200 = vmatpush1.msra.mxu0 0.0
    %201 = vmatprep.subr.mxu0 0.0
    %202 = vmatpush1.msra.mxu0 0.0
    %203 = vmatprep.subr.mxu0 0.0
    %204 = vmatpush1.msra.mxu0 0.0
    %205 = vmatprep.subr.mxu0 0.0
    %206 = vmatpush1.msra.mxu0 0.0
    %207 = vmatprep.subr.mxu0 0.0
    %208 = vmatpush1.msra.mxu0 0.0
    %209 = vmatprep.subr.mxu0 0.0
    %210 = vmatpush1.msra.mxu0 0.0
    %211 = vmatprep.subr.mxu0 0.0
    %212 = vmatpush1.msra.mxu0 0.0
    %213 = vmatprep.subr.mxu0 0.0
    %214 = vmatpush1.msra.mxu0 0.0
    %215 = vmatprep.subr.mxu0 0.0
    %216 = vmatpush1.msra.mxu0 0.0
    %217 = vmatprep.subr.mxu0 0.0
    %218 = vmatpush1.msra.mxu0 0.0
    %219 = vmatprep.subr.mxu0 0.0
    %220 = vmatpush1.msra.mxu0 0.0
    %221 = vmatprep.subr.mxu0 0.0
    %222 = vmatpush1.msra.mxu0 0.0
    %223 = vmatprep.subr.mxu0 0.0
    %v224 = vand.u32 %v39, 4294901760
    %v225 = vsub.f32 %v39, %v224
    %226 = vmatpush1.msra.mxu0 %v225
    %227 = vmatprep.subr.mxu0 0.0
    %228 = vmatpush2.msra.mxu0 0.0
    %229 = vmatprep.subr.mxu0 0.0
    %230 = vmatpush2.msra.mxu0 0.0
    %231 = vmatprep.subr.mxu0 0.0
    %232 = vmatpush2.msra.mxu0 0.0
    %233 = vmatprep.subr.mxu0 0.0
    %234 = vmatpush2.msra.mxu0 0.0
    %235 = vmatprep.subr.mxu0 0.0
    %236 = vmatpush2.msra.mxu0 0.0
    %237 = vmatprep.subr.mxu0 0.0
    %238 = vmatpush2.msra.mxu0 0.0
    %239 = vmatprep.subr.mxu0 0.0
    %240 = vmatpush2.msra.mxu0 0.0
    %241 = vmatprep.subr.mxu0 0.0
    %242 = vmatpush2.msra.mxu0 0.0
    %243 = vmatprep.subr.mxu0 0.0
    %244 = vmatpush2.msra.mxu0 0.0
    %245 = vmatprep.subr.mxu0 0.0
    %246 = vmatpush2.msra.mxu0 0.0
    %247 = vmatprep.subr.mxu0 0.0
    %248 = vmatpush2.msra.mxu0 0.0
    %249 = vmatprep.subr.mxu0 0.0
    %250 = vmatpush2.msra.mxu0 0.0
    %251 = vmatprep.subr.mxu0 0.0
    %252 = vmatpush2.msra.mxu0 0.0
    %253 = vmatprep.subr.mxu0 0.0
    %254 = vmatpush2.msra.mxu0 0.0
    %255 = vmatprep.subr.mxu0 0.0
    %256 = vmatpush2.msra.mxu0 0.0
    %257 = vmatprep.subr.mxu0 0.0
    %258 = vmatpush2.msra.mxu0 0.0
    %259 = vmatprep.mubr.f32.mxu0 0.0
    %v260 = vand.u32 %v35, 4294901760
    %v261 = vsub.f32 %v35, %v260
    %262 = vmatmul.mubr.f32.gmra.mxu0 %v261
    %v263 = vpop.f32.mrf.mxu0
    %v264 = vadd.f32 %v190, %v263
    %v265 = vpop.f32.mrf.mxu0
    %266 = vdwg.mxu0
    %267 = vmatprep.subr.mxu0 0.0
    %268 = vmatpush1.msra.mxu0 0.0
    %269 = vmatprep.subr.mxu0 0.0
    %270 = vmatpush1.msra.mxu0 0.0
    %271 = vmatprep.subr.mxu0 0.0
    %272 = vmatpush1.msra.mxu0 0.0
    %273 = vmatprep.subr.mxu0 0.0
    %274 = vmatpush1.msra.mxu0 0.0
    %275 = vmatprep.subr.mxu0 0.0
    %276 = vmatpush1.msra.mxu0 0.0
    %277 = vmatprep.subr.mxu0 0.0
    %278 = vmatpush1.msra.mxu0 0.0
    %279 = vmatprep.subr.mxu0 0.0
    %280 = vmatpush1.msra.mxu0 0.0
    %281 = vmatprep.subr.mxu0 0.0
    %282 = vmatpush1.msra.mxu0 0.0
    %283 = vmatprep.subr.mxu0 0.0
    %284 = vmatpush1.msra.mxu0 0.0
    %285 = vmatprep.subr.mxu0 0.0
    %286 = vmatpush1.msra.mxu0 0.0
    %287 = vmatprep.subr.mxu0 0.0
    %288 = vmatpush1.msra.mxu0 0.0
    %289 = vmatprep.subr.mxu0 0.0
    %290 = vmatpush1.msra.mxu0 0.0
    %291 = vmatprep.subr.mxu0 0.0
    %292 = vmatpush1.msra.mxu0 0.0
    %293 = vmatprep.subr.mxu0 0.0
    %294 = vmatpush1.msra.mxu0 0.0
    %295 = vmatprep.subr.mxu0 0.0
    %296 = vmatpush1.msra.mxu0 0.0
    %297 = vmatprep.subr.mxu0 0.0
    %v298 = vand.u32 %v39, 4294901760
    %299 = vmatpush1.msra.mxu0 %v298
    %300 = vmatprep.subr.mxu0 0.0
    %301 = vmatpush2.msra.mxu0 0.0
    %302 = vmatprep.subr.mxu0 0.0
    %303 = vmatpush2.msra.mxu0 0.0
    %304 = vmatprep.subr.mxu0 0.0
    %305 = vmatpush2.msra.mxu0 0.0
    %306 = vmatprep.subr.mxu0 0.0
    %307 = vmatpush2.msra.mxu0 0.0
    %308 = vmatprep.subr.mxu0 0.0
    %309 = vmatpush2.msra.mxu0 0.0
    %310 = vmatprep.subr.mxu0 0.0
    %311 = vmatpush2.msra.mxu0 0.0
    %312 = vmatprep.subr.mxu0 0.0
    %313 = vmatpush2.msra.mxu0 0.0
    %314 = vmatprep.subr.mxu0 0.0
    %315 = vmatpush2.msra.mxu0 0.0
    %316 = vmatprep.subr.mxu0 0.0
    %317 = vmatpush2.msra.mxu0 0.0
    %318 = vmatprep.subr.mxu0 0.0
    %319 = vmatpush2.msra.mxu0 0.0
    %320 = vmatprep.subr.mxu0 0.0
    %321 = vmatpush2.msra.mxu0 0.0
    %322 = vmatprep.subr.mxu0 0.0
    %323 = vmatpush2.msra.mxu0 0.0
    %324 = vmatprep.subr.mxu0 0.0
    %325 = vmatpush2.msra.mxu0 0.0
    %326 = vmatprep.subr.mxu0 0.0
    %327 = vmatpush2.msra.mxu0 0.0
    %328 = vmatprep.subr.mxu0 0.0
    %329 = vmatpush2.msra.mxu0 0.0
    %330 = vmatprep.subr.mxu0 0.0
    %331 = vmatpush2.msra.mxu0 0.0
    %332 = vmatprep.mubr.f32.mxu0 0.0
    %v333 = vand.u32 %v35, 4294901760
    %v334 = vsub.f32 %v35, %v333
    %v335 = vand.u32 %v334, 4294901760
    %336 = vmatmul.mubr.f32.gmra.mxu0 %v335
    %v337 = vpop.f32.mrf.mxu0
    %v338 = vadd.f32 %v264, %v337
    %v339 = vpop.f32.mrf.mxu0
    %340 = vdwg.mxu0
    %341 = vmatprep.subr.mxu0 0.0
    %342 = vmatpush1.msra.mxu0 0.0
    %343 = vmatprep.subr.mxu0 0.0
    %344 = vmatpush1.msra.mxu0 0.0
    %345 = vmatprep.subr.mxu0 0.0
    %346 = vmatpush1.msra.mxu0 0.0
    %347 = vmatprep.subr.mxu0 0.0
    %348 = vmatpush1.msra.mxu0 0.0
    %349 = vmatprep.subr.mxu0 0.0
    %350 = vmatpush1.msra.mxu0 0.0
    %351 = vmatprep.subr.mxu0 0.0
    %352 = vmatpush1.msra.mxu0 0.0
    %353 = vmatprep.subr.mxu0 0.0
    %354 = vmatpush1.msra.mxu0 0.0
    %355 = vmatprep.subr.mxu0 0.0
    %356 = vmatpush1.msra.mxu0 0.0
    %357 = vmatprep.subr.mxu0 0.0
    %358 = vmatpush1.msra.mxu0 0.0
    %359 = vmatprep.subr.mxu0 0.0
    %360 = vmatpush1.msra.mxu0 0.0
    %361 = vmatprep.subr.mxu0 0.0
    %362 = vmatpush1.msra.mxu0 0.0
    %363 = vmatprep.subr.mxu0 0.0
    %364 = vmatpush1.msra.mxu0 0.0
    %365 = vmatprep.subr.mxu0 0.0
    %366 = vmatpush1.msra.mxu0 0.0
    %367 = vmatprep.subr.mxu0 0.0
    %368 = vmatpush1.msra.mxu0 0.0
    %369 = vmatprep.subr.mxu0 0.0
    %370 = vmatpush1.msra.mxu0 0.0
    %371 = vmatprep.subr.mxu0 0.0
    %v372 = vand.u32 %v39, 4294901760
    %v373 = vsub.f32 %v39, %v372
    %v374 = vand.u32 %v373, 4294901760
    %375 = vmatpush1.msra.mxu0 %v374
    %376 = vmatprep.subr.mxu0 0.0
    %377 = vmatpush2.msra.mxu0 0.0
    %378 = vmatprep.subr.mxu0 0.0
    %379 = vmatpush2.msra.mxu0 0.0
    %380 = vmatprep.subr.mxu0 0.0
    %381 = vmatpush2.msra.mxu0 0.0
    %382 = vmatprep.subr.mxu0 0.0
    %383 = vmatpush2.msra.mxu0 0.0
    %384 = vmatprep.subr.mxu0 0.0
    %385 = vmatpush2.msra.mxu0 0.0
    %386 = vmatprep.subr.mxu0 0.0
    %387 = vmatpush2.msra.mxu0 0.0
    %388 = vmatprep.subr.mxu0 0.0
    %389 = vmatpush2.msra.mxu0 0.0
    %390 = vmatprep.subr.mxu0 0.0
    %391 = vmatpush2.msra.mxu0 0.0
    %392 = vmatprep.subr.mxu0 0.0
    %393 = vmatpush2.msra.mxu0 0.0
    %394 = vmatprep.subr.mxu0 0.0
    %395 = vmatpush2.msra.mxu0 0.0
    %396 = vmatprep.subr.mxu0 0.0
    %397 = vmatpush2.msra.mxu0 0.0
    %398 = vmatprep.subr.mxu0 0.0
    %399 = vmatpush2.msra.mxu0 0.0
    %400 = vmatprep.subr.mxu0 0.0
    %401 = vmatpush2.msra.mxu0 0.0
    %402 = vmatprep.subr.mxu0 0.0
    %403 = vmatpush2.msra.mxu0 0.0
    %404 = vmatprep.subr.mxu0 0.0
    %405 = vmatpush2.msra.mxu0 0.0
    %406 = vmatprep.subr.mxu0 0.0
    %407 = vmatpush2.msra.mxu0 0.0
    %408 = vmatprep.mubr.f32.mxu0 0.0
    %v409 = vand.u32 %v35, 4294901760
    %410 = vmatmul.mubr.f32.gmra.mxu0 %v409
    %v411 = vpop.f32.mrf.mxu0
    %v412 = vadd.f32 %v338, %v411
    %v413 = vpop.f32.mrf.mxu0
    %414 = vdwg.mxu0
    %415 = vmatprep.subr.mxu0 0.0
    %416 = vmatpush1.msra.mxu0 0.0
    %417 = vmatprep.subr.mxu0 0.0
    %418 = vmatpush1.msra.mxu0 0.0
    %419 = vmatprep.subr.mxu0 0.0
    %420 = vmatpush1.msra.mxu0 0.0
    %421 = vmatprep.subr.mxu0 0.0
    %422 = vmatpush1.msra.mxu0 0.0
    %423 = vmatprep.subr.mxu0 0.0
    %424 = vmatpush1.msra.mxu0 0.0
    %425 = vmatprep.subr.mxu0 0.0
    %426 = vmatpush1.msra.mxu0 0.0
    %427 = vmatprep.subr.mxu0 0.0
    %428 = vmatpush1.msra.mxu0 0.0
    %429 = vmatprep.subr.mxu0 0.0
    %430 = vmatpush1.msra.mxu0 0.0
    %431 = vmatprep.subr.mxu0 0.0
    %432 = vmatpush1.msra.mxu0 0.0
    %433 = vmatprep.subr.mxu0 0.0
    %434 = vmatpush1.msra.mxu0 0.0
    %435 = vmatprep.subr.mxu0 0.0
    %436 = vmatpush1.msra.mxu0 0.0
    %437 = vmatprep.subr.mxu0 0.0
    %438 = vmatpush1.msra.mxu0 0.0
    %439 = vmatprep.subr.mxu0 0.0
    %440 = vmatpush1.msra.mxu0 0.0
    %441 = vmatprep.subr.mxu0 0.0
    %442 = vmatpush1.msra.mxu0 0.0
    %443 = vmatprep.subr.mxu0 0.0
    %444 = vmatpush1.msra.mxu0 0.0
    %445 = vmatprep.subr.mxu0 0.0
    %v446 = vand.u32 %v39, 4294901760
    %447 = vmatpush1.msra.mxu0 %v446
    %448 = vmatprep.subr.mxu0 0.0
    %449 = vmatpush2.msra.mxu0 0.0
    %450 = vmatprep.subr.mxu0 0.0
    %451 = vmatpush2.msra.mxu0 0.0
    %452 = vmatprep.subr.mxu0 0.0
    %453 = vmatpush2.msra.mxu0 0.0
    %454 = vmatprep.subr.mxu0 0.0
    %455 = vmatpush2.msra.mxu0 0.0
    %456 = vmatprep.subr.mxu0 0.0
    %457 = vmatpush2.msra.mxu0 0.0
    %458 = vmatprep.subr.mxu0 0.0
    %459 = vmatpush2.msra.mxu0 0.0
    %460 = vmatprep.subr.mxu0 0.0
    %461 = vmatpush2.msra.mxu0 0.0
    %462 = vmatprep.subr.mxu0 0.0
    %463 = vmatpush2.msra.mxu0 0.0
    %464 = vmatprep.subr.mxu0 0.0
    %465 = vmatpush2.msra.mxu0 0.0
    %466 = vmatprep.subr.mxu0 0.0
    %467 = vmatpush2.msra.mxu0 0.0
    %468 = vmatprep.subr.mxu0 0.0
    %469 = vmatpush2.msra.mxu0 0.0
    %470 = vmatprep.subr.mxu0 0.0
    %471 = vmatpush2.msra.mxu0 0.0
    %472 = vmatprep.subr.mxu0 0.0
    %473 = vmatpush2.msra.mxu0 0.0
    %474 = vmatprep.subr.mxu0 0.0
    %475 = vmatpush2.msra.mxu0 0.0
    %476 = vmatprep.subr.mxu0 0.0
    %477 = vmatpush2.msra.mxu0 0.0
    %478 = vmatprep.subr.mxu0 0.0
    %479 = vmatpush2.msra.mxu0 0.0
    %480 = vmatprep.mubr.f32.mxu0 0.0
    %v481 = vand.u32 %v35, 4294901760
    %482 = vmatmul.mubr.f32.gmra.mxu0 %v481
    %v483 = vpop.f32.mrf.mxu0
    %v484 = vadd.f32 %v412, %v483
    %v485 = vpop.f32.mrf.mxu0
    %486 = vdwg.mxu0
    %v487 = vtanh.pop %v484
    %v488 = vld [vmem:[#allocation2 + $0x8] sm:$0xff]
    %v489 = vld [vmem:[#allocation2 + $0x10] sm:$0xff]
    %v490 = vld [vmem:[#allocation2 + $0x18] sm:$0xff]
    %v491 = vld [vmem:[#allocation2 + $0x20] sm:$0x1]
    %v492 = vlaneseq
    %v493 = vshrl.u32 %v492, 7
    %v494 = vsub.s32 0, %v493
    %v495 = vrot.slane %v491, %v494
    %vm496 = vcmask 195584
    %v498 = vsel %vm496, %v487, 0
    %500 = vmatprep.subr.mxu0 0.0
    %501 = vmatpush1.msra.mxu0 0.0
    %502 = vmatprep.subr.mxu0 0.0
    %503 = vmatpush1.msra.mxu0 0.0
    %504 = vmatprep.subr.mxu0 0.0
    %505 = vmatpush1.msra.mxu0 0.0
    %506 = vmatprep.subr.mxu0 0.0
    %507 = vmatpush1.msra.mxu0 0.0
    %508 = vmatprep.subr.mxu0 0.0
    %509 = vmatpush1.msra.mxu0 0.0
    %510 = vmatprep.subr.mxu0 0.0
    %511 = vmatpush1.msra.mxu0 0.0
    %512 = vmatprep.subr.mxu0 0.0
    %513 = vmatpush1.msra.mxu0 0.0
    %514 = vmatprep.subr.mxu0 0.0
    %515 = vmatpush1.msra.mxu0 0.0
    %516 = vmatprep.subr.mxu0 0.0
    %517 = vmatpush1.msra.mxu0 0.0
    %518 = vmatprep.subr.mxu0 0.0
    %519 = vmatpush1.msra.mxu0 0.0
    %520 = vmatprep.subr.mxu0 0.0
    %521 = vmatpush1.msra.mxu0 0.0
    %522 = vmatprep.subr.mxu0 0.0
    %523 = vmatpush1.msra.mxu0 0.0
    %524 = vmatprep.subr.mxu0 0.0
    %525 = vmatpush1.msra.mxu0 0.0
    %526 = vmatprep.subr.mxu0 0.0
    %v527 = vand.u32 %v490, 4294901760
    %528 = vmatpush1.msra.mxu0 %v527
    %529 = vmatprep.subr.mxu0 0.0
    %v530 = vand.u32 %v489, 4294901760
    %531 = vmatpush1.msra.mxu0 %v530
    %532 = vmatprep.subr.mxu0 0.0
    %v533 = vand.u32 %v488, 4294901760
    %534 = vmatpush1.msra.mxu0 %v533
    %535 = vmatprep.subr.mxu0 0.0
    %536 = vmatpush2.msra.mxu0 0.0
    %537 = vmatprep.subr.mxu0 0.0
    %538 = vmatpush2.msra.mxu0 0.0
    %539 = vmatprep.subr.mxu0 0.0
    %540 = vmatpush2.msra.mxu0 0.0
    %541 = vmatprep.subr.mxu0 0.0
    %542 = vmatpush2.msra.mxu0 0.0
    %543 = vmatprep.subr.mxu0 0.0
    %544 = vmatpush2.msra.mxu0 0.0
    %545 = vmatprep.subr.mxu0 0.0
    %546 = vmatpush2.msra.mxu0 0.0
    %547 = vmatprep.subr.mxu0 0.0
    %548 = vmatpush2.msra.mxu0 0.0
    %549 = vmatprep.subr.mxu0 0.0
    %550 = vmatpush2.msra.mxu0 0.0
    %551 = vmatprep.subr.mxu0 0.0
    %552 = vmatpush2.msra.mxu0 0.0
    %553 = vmatprep.subr.mxu0 0.0
    %554 = vmatpush2.msra.mxu0 0.0
    %555 = vmatprep.subr.mxu0 0.0
    %556 = vmatpush2.msra.mxu0 0.0
    %557 = vmatprep.subr.mxu0 0.0
    %558 = vmatpush2.msra.mxu0 0.0
    %559 = vmatprep.subr.mxu0 0.0
    %560 = vmatpush2.msra.mxu0 0.0
    %561 = vmatprep.subr.mxu0 0.0
    %562 = vmatpush2.msra.mxu0 0.0
    %563 = vmatprep.subr.mxu0 0.0
    %564 = vmatpush2.msra.mxu0 0.0
    %565 = vmatprep.subr.mxu0 0.0
    %566 = vmatpush2.msra.mxu0 0.0
    %567 = vmatprep.mubr.f32.mxu0 0.0
    %v568 = vand.u32 %v498, 4294901760
    %v569 = vsub.f32 %v498, %v568
    %v570 = vand.u32 %v569, 4294901760
    %v571 = vsub.f32 %v569, %v570
    %v572 = vand.u32 %v571, 4294901760
    %573 = vmatmul.mubr.f32.gmra.mxu0 %v572
    %v574 = vpop.f32.mrf.mxu0
    %v575 = vadd.f32 %v495, %v574
    %v576 = vpop.f32.mrf.mxu0
    %577 = vdwg.mxu0
    %578 = vmatprep.subr.mxu0 0.0
    %579 = vmatpush1.msra.mxu0 0.0
    %580 = vmatprep.subr.mxu0 0.0
    %581 = vmatpush1.msra.mxu0 0.0
    %582 = vmatprep.subr.mxu0 0.0
    %583 = vmatpush1.msra.mxu0 0.0
    %584 = vmatprep.subr.mxu0 0.0
    %585 = vmatpush1.msra.mxu0 0.0
    %586 = vmatprep.subr.mxu0 0.0
    %587 = vmatpush1.msra.mxu0 0.0
    %588 = vmatprep.subr.mxu0 0.0
    %589 = vmatpush1.msra.mxu0 0.0
    %590 = vmatprep.subr.mxu0 0.0
    %591 = vmatpush1.msra.mxu0 0.0
    %592 = vmatprep.subr.mxu0 0.0
    %593 = vmatpush1.msra.mxu0 0.0
    %594 = vmatprep.subr.mxu0 0.0
    %595 = vmatpush1.msra.mxu0 0.0
    %596 = vmatprep.subr.mxu0 0.0
    %597 = vmatpush1.msra.mxu0 0.0
    %598 = vmatprep.subr.mxu0 0.0
    %599 = vmatpush1.msra.mxu0 0.0
    %600 = vmatprep.subr.mxu0 0.0
    %601 = vmatpush1.msra.mxu0 0.0
    %602 = vmatprep.subr.mxu0 0.0
    %603 = vmatpush1.msra.mxu0 0.0
    %604 = vmatprep.subr.mxu0 0.0
    %v605 = vand.u32 %v490, 4294901760
    %v606 = vsub.f32 %v490, %v605
    %v607 = vand.u32 %v606, 4294901760
    %v608 = vsub.f32 %v606, %v607
    %v609 = vand.u32 %v608, 4294901760
    %610 = vmatpush1.msra.mxu0 %v609
    %611 = vmatprep.subr.mxu0 0.0
    %v612 = vand.u32 %v489, 4294901760
    %v613 = vsub.f32 %v489, %v612
    %v614 = vand.u32 %v613, 4294901760
    %v615 = vsub.f32 %v613, %v614
    %v616 = vand.u32 %v615, 4294901760
    %617 = vmatpush1.msra.mxu0 %v616
    %618 = vmatprep.subr.mxu0 0.0
    %v619 = vand.u32 %v488, 4294901760
    %v620 = vsub.f32 %v488, %v619
    %v621 = vand.u32 %v620, 4294901760
    %v622 = vsub.f32 %v620, %v621
    %v623 = vand.u32 %v622, 4294901760
    %624 = vmatpush1.msra.mxu0 %v623
    %625 = vmatprep.subr.mxu0 0.0
    %626 = vmatpush2.msra.mxu0 0.0
    %627 = vmatprep.subr.mxu0 0.0
    %628 = vmatpush2.msra.mxu0 0.0
    %629 = vmatprep.subr.mxu0 0.0
    %630 = vmatpush2.msra.mxu0 0.0
    %631 = vmatprep.subr.mxu0 0.0
    %632 = vmatpush2.msra.mxu0 0.0
    %633 = vmatprep.subr.mxu0 0.0
    %634 = vmatpush2.msra.mxu0 0.0
    %635 = vmatprep.subr.mxu0 0.0
    %636 = vmatpush2.msra.mxu0 0.0
    %637 = vmatprep.subr.mxu0 0.0
    %638 = vmatpush2.msra.mxu0 0.0
    %639 = vmatprep.subr.mxu0 0.0
    %640 = vmatpush2.msra.mxu0 0.0
    %641 = vmatprep.subr.mxu0 0.0
    %642 = vmatpush2.msra.mxu0 0.0
    %643 = vmatprep.subr.mxu0 0.0
    %644 = vmatpush2.msra.mxu0 0.0
    %645 = vmatprep.subr.mxu0 0.0
    %646 = vmatpush2.msra.mxu0 0.0
    %647 = vmatprep.subr.mxu0 0.0
    %648 = vmatpush2.msra.mxu0 0.0
    %649 = vmatprep.subr.mxu0 0.0
    %650 = vmatpush2.msra.mxu0 0.0
    %651 = vmatprep.subr.mxu0 0.0
    %652 = vmatpush2.msra.mxu0 0.0
    %653 = vmatprep.subr.mxu0 0.0
    %654 = vmatpush2.msra.mxu0 0.0
    %655 = vmatprep.subr.mxu0 0.0
    %656 = vmatpush2.msra.mxu0 0.0
    %657 = vmatprep.mubr.f32.mxu0 0.0
    %v658 = vand.u32 %v498, 4294901760
    %659 = vmatmul.mubr.f32.gmra.mxu0 %v658
    %v660 = vpop.f32.mrf.mxu0
    %v661 = vadd.f32 %v575, %v660
    %v662 = vpop.f32.mrf.mxu0
    %663 = vdwg.mxu0
    %664 = vmatprep.subr.mxu0 0.0
    %665 = vmatpush1.msra.mxu0 0.0
    %666 = vmatprep.subr.mxu0 0.0
    %667 = vmatpush1.msra.mxu0 0.0
    %668 = vmatprep.subr.mxu0 0.0
    %669 = vmatpush1.msra.mxu0 0.0
    %670 = vmatprep.subr.mxu0 0.0
    %671 = vmatpush1.msra.mxu0 0.0
    %672 = vmatprep.subr.mxu0 0.0
    %673 = vmatpush1.msra.mxu0 0.0
    %674 = vmatprep.subr.mxu0 0.0
    %675 = vmatpush1.msra.mxu0 0.0
    %676 = vmatprep.subr.mxu0 0.0
    %677 = vmatpush1.msra.mxu0 0.0
    %678 = vmatprep.subr.mxu0 0.0
    %679 = vmatpush1.msra.mxu0 0.0
    %680 = vmatprep.subr.mxu0 0.0
    %681 = vmatpush1.msra.mxu0 0.0
    %682 = vmatprep.subr.mxu0 0.0
    %683 = vmatpush1.msra.mxu0 0.0
    %684 = vmatprep.subr.mxu0 0.0
    %685 = vmatpush1.msra.mxu0 0.0
    %686 = vmatprep.subr.mxu0 0.0
    %687 = vmatpush1.msra.mxu0 0.0
    %688 = vmatprep.subr.mxu0 0.0
    %689 = vmatpush1.msra.mxu0 0.0
    %690 = vmatprep.subr.mxu0 0.0
    %v691 = vand.u32 %v490, 4294901760
    %v692 = vsub.f32 %v490, %v691
    %693 = vmatpush1.msra.mxu0 %v692
    %694 = vmatprep.subr.mxu0 0.0
    %v695 = vand.u32 %v489, 4294901760
    %v696 = vsub.f32 %v489, %v695
    %697 = vmatpush1.msra.mxu0 %v696
    %698 = vmatprep.subr.mxu0 0.0
    %v699 = vand.u32 %v488, 4294901760
    %v700 = vsub.f32 %v488, %v699
    %701 = vmatpush1.msra.mxu0 %v700
    %702 = vmatprep.subr.mxu0 0.0
    %703 = vmatpush2.msra.mxu0 0.0
    %704 = vmatprep.subr.mxu0 0.0
    %705 = vmatpush2.msra.mxu0 0.0
    %706 = vmatprep.subr.mxu0 0.0
    %707 = vmatpush2.msra.mxu0 0.0
    %708 = vmatprep.subr.mxu0 0.0
    %709 = vmatpush2.msra.mxu0 0.0
    %710 = vmatprep.subr.mxu0 0.0
    %711 = vmatpush2.msra.mxu0 0.0
    %712 = vmatprep.subr.mxu0 0.0
    %713 = vmatpush2.msra.mxu0 0.0
    %714 = vmatprep.subr.mxu0 0.0
    %715 = vmatpush2.msra.mxu0 0.0
    %716 = vmatprep.subr.mxu0 0.0
    %717 = vmatpush2.msra.mxu0 0.0
    %718 = vmatprep.subr.mxu0 0.0
    %719 = vmatpush2.msra.mxu0 0.0
    %720 = vmatprep.subr.mxu0 0.0
    %721 = vmatpush2.msra.mxu0 0.0
    %722 = vmatprep.subr.mxu0 0.0
    %723 = vmatpush2.msra.mxu0 0.0
    %724 = vmatprep.subr.mxu0 0.0
    %725 = vmatpush2.msra.mxu0 0.0
    %726 = vmatprep.subr.mxu0 0.0
    %727 = vmatpush2.msra.mxu0 0.0
    %728 = vmatprep.subr.mxu0 0.0
    %729 = vmatpush2.msra.mxu0 0.0
    %730 = vmatprep.subr.mxu0 0.0
    %731 = vmatpush2.msra.mxu0 0.0
    %732 = vmatprep.subr.mxu0 0.0
    %733 = vmatpush2.msra.mxu0 0.0
    %734 = vmatprep.mubr.f32.mxu0 0.0
    %v735 = vand.u32 %v498, 4294901760
    %v736 = vsub.f32 %v498, %v735
    %737 = vmatmul.mubr.f32.gmra.mxu0 %v736
    %v738 = vpop.f32.mrf.mxu0
    %v739 = vadd.f32 %v661, %v738
    %v740 = vpop.f32.mrf.mxu0
    %741 = vdwg.mxu0
    %742 = vmatprep.subr.mxu0 0.0
    %743 = vmatpush1.msra.mxu0 0.0
    %744 = vmatprep.subr.mxu0 0.0
    %745 = vmatpush1.msra.mxu0 0.0
    %746 = vmatprep.subr.mxu0 0.0
    %747 = vmatpush1.msra.mxu0 0.0
    %748 = vmatprep.subr.mxu0 0.0
    %749 = vmatpush1.msra.mxu0 0.0
    %750 = vmatprep.subr.mxu0 0.0
    %751 = vmatpush1.msra.mxu0 0.0
    %752 = vmatprep.subr.mxu0 0.0
    %753 = vmatpush1.msra.mxu0 0.0
    %754 = vmatprep.subr.mxu0 0.0
    %755 = vmatpush1.msra.mxu0 0.0
    %756 = vmatprep.subr.mxu0 0.0
    %757 = vmatpush1.msra.mxu0 0.0
    %758 = vmatprep.subr.mxu0 0.0
    %759 = vmatpush1.msra.mxu0 0.0
    %760 = vmatprep.subr.mxu0 0.0
    %761 = vmatpush1.msra.mxu0 0.0
    %762 = vmatprep.subr.mxu0 0.0
    %763 = vmatpush1.msra.mxu0 0.0
    %764 = vmatprep.subr.mxu0 0.0
    %765 = vmatpush1.msra.mxu0 0.0
    %766 = vmatprep.subr.mxu0 0.0
    %767 = vmatpush1.msra.mxu0 0.0
    %768 = vmatprep.subr.mxu0 0.0
    %v769 = vand.u32 %v490, 4294901760
    %770 = vmatpush1.msra.mxu0 %v769
    %771 = vmatprep.subr.mxu0 0.0
    %v772 = vand.u32 %v489, 4294901760
    %773 = vmatpush1.msra.mxu0 %v772
    %774 = vmatprep.subr.mxu0 0.0
    %v775 = vand.u32 %v488, 4294901760
    %776 = vmatpush1.msra.mxu0 %v775
    %777 = vmatprep.subr.mxu0 0.0
    %778 = vmatpush2.msra.mxu0 0.0
    %779 = vmatprep.subr.mxu0 0.0
    %780 = vmatpush2.msra.mxu0 0.0
    %781 = vmatprep.subr.mxu0 0.0
    %782 = vmatpush2.msra.mxu0 0.0
    %783 = vmatprep.subr.mxu0 0.0
    %784 = vmatpush2.msra.mxu0 0.0
    %785 = vmatprep.subr.mxu0 0.0
    %786 = vmatpush2.msra.mxu0 0.0
    %787 = vmatprep.subr.mxu0 0.0
    %788 = vmatpush2.msra.mxu0 0.0
    %789 = vmatprep.subr.mxu0 0.0
    %790 = vmatpush2.msra.mxu0 0.0
    %791 = vmatprep.subr.mxu0 0.0
    %792 = vmatpush2.msra.mxu0 0.0
    %793 = vmatprep.subr.mxu0 0.0
    %794 = vmatpush2.msra.mxu0 0.0
    %795 = vmatprep.subr.mxu0 0.0
    %796 = vmatpush2.msra.mxu0 0.0
    %797 = vmatprep.subr.mxu0 0.0
    %798 = vmatpush2.msra.mxu0 0.0
    %799 = vmatprep.subr.mxu0 0.0
    %800 = vmatpush2.msra.mxu0 0.0
    %801 = vmatprep.subr.mxu0 0.0
    %802 = vmatpush2.msra.mxu0 0.0
    %803 = vmatprep.subr.mxu0 0.0
    %804 = vmatpush2.msra.mxu0 0.0
    %805 = vmatprep.subr.mxu0 0.0
    %806 = vmatpush2.msra.mxu0 0.0
    %807 = vmatprep.subr.mxu0 0.0
    %808 = vmatpush2.msra.mxu0 0.0
    %809 = vmatprep.mubr.f32.mxu0 0.0
    %v810 = vand.u32 %v498, 4294901760
    %v811 = vsub.f32 %v498, %v810
    %v812 = vand.u32 %v811, 4294901760
    %813 = vmatmul.mubr.f32.gmra.mxu0 %v812
    %v814 = vpop.f32.mrf.mxu0
    %v815 = vadd.f32 %v739, %v814
    %v816 = vpop.f32.mrf.mxu0
    %817 = vdwg.mxu0
    %818 = vmatprep.subr.mxu0 0.0
    %819 = vmatpush1.msra.mxu0 0.0
    %820 = vmatprep.subr.mxu0 0.0
    %821 = vmatpush1.msra.mxu0 0.0
    %822 = vmatprep.subr.mxu0 0.0
    %823 = vmatpush1.msra.mxu0 0.0
    %824 = vmatprep.subr.mxu0 0.0
    %825 = vmatpush1.msra.mxu0 0.0
    %826 = vmatprep.subr.mxu0 0.0
    %827 = vmatpush1.msra.mxu0 0.0
    %828 = vmatprep.subr.mxu0 0.0
    %829 = vmatpush1.msra.mxu0 0.0
    %830 = vmatprep.subr.mxu0 0.0
    %831 = vmatpush1.msra.mxu0 0.0
    %832 = vmatprep.subr.mxu0 0.0
    %833 = vmatpush1.msra.mxu0 0.0
    %834 = vmatprep.subr.mxu0 0.0
    %835 = vmatpush1.msra.mxu0 0.0
    %836 = vmatprep.subr.mxu0 0.0
    %837 = vmatpush1.msra.mxu0 0.0
    %838 = vmatprep.subr.mxu0 0.0
    %839 = vmatpush1.msra.mxu0 0.0
    %840 = vmatprep.subr.mxu0 0.0
    %841 = vmatpush1.msra.mxu0 0.0
    %842 = vmatprep.subr.mxu0 0.0
    %843 = vmatpush1.msra.mxu0 0.0
    %844 = vmatprep.subr.mxu0 0.0
    %v845 = vand.u32 %v490, 4294901760
    %v846 = vsub.f32 %v490, %v845
    %v847 = vand.u32 %v846, 4294901760
    %848 = vmatpush1.msra.mxu0 %v847
    %849 = vmatprep.subr.mxu0 0.0
    %v850 = vand.u32 %v489, 4294901760
    %v851 = vsub.f32 %v489, %v850
    %v852 = vand.u32 %v851, 4294901760
    %853 = vmatpush1.msra.mxu0 %v852
    %854 = vmatprep.subr.mxu0 0.0
    %v855 = vand.u32 %v488, 4294901760
    %v856 = vsub.f32 %v488, %v855
    %v857 = vand.u32 %v856, 4294901760
    %858 = vmatpush1.msra.mxu0 %v857
    %859 = vmatprep.subr.mxu0 0.0
    %860 = vmatpush2.msra.mxu0 0.0
    %861 = vmatprep.subr.mxu0 0.0
    %862 = vmatpush2.msra.mxu0 0.0
    %863 = vmatprep.subr.mxu0 0.0
    %864 = vmatpush2.msra.mxu0 0.0
    %865 = vmatprep.subr.mxu0 0.0
    %866 = vmatpush2.msra.mxu0 0.0
    %867 = vmatprep.subr.mxu0 0.0
    %868 = vmatpush2.msra.mxu0 0.0
    %869 = vmatprep.subr.mxu0 0.0
    %870 = vmatpush2.msra.mxu0 0.0
    %871 = vmatprep.subr.mxu0 0.0
    %872 = vmatpush2.msra.mxu0 0.0
    %873 = vmatprep.subr.mxu0 0.0
    %874 = vmatpush2.msra.mxu0 0.0
    %875 = vmatprep.subr.mxu0 0.0
    %876 = vmatpush2.msra.mxu0 0.0
    %877 = vmatprep.subr.mxu0 0.0
    %878 = vmatpush2.msra.mxu0 0.0
    %879 = vmatprep.subr.mxu0 0.0
    %880 = vmatpush2.msra.mxu0 0.0
    %881 = vmatprep.subr.mxu0 0.0
    %882 = vmatpush2.msra.mxu0 0.0
    %883 = vmatprep.subr.mxu0 0.0
    %884 = vmatpush2.msra.mxu0 0.0
    %885 = vmatprep.subr.mxu0 0.0
    %886 = vmatpush2.msra.mxu0 0.0
    %887 = vmatprep.subr.mxu0 0.0
    %888 = vmatpush2.msra.mxu0 0.0
    %889 = vmatprep.subr.mxu0 0.0
    %890 = vmatpush2.msra.mxu0 0.0
    %891 = vmatprep.mubr.f32.mxu0 0.0
    %v892 = vand.u32 %v498, 4294901760
    %893 = vmatmul.mubr.f32.gmra.mxu0 %v892
    %v894 = vpop.f32.mrf.mxu0
    %v895 = vadd.f32 %v815, %v894
    %v896 = vpop.f32.mrf.mxu0
    %897 = vdwg.mxu0
    %898 = vmatprep.subr.mxu0 0.0
    %899 = vmatpush1.msra.mxu0 0.0
    %900 = vmatprep.subr.mxu0 0.0
    %901 = vmatpush1.msra.mxu0 0.0
    %902 = vmatprep.subr.mxu0 0.0
    %903 = vmatpush1.msra.mxu0 0.0
    %904 = vmatprep.subr.mxu0 0.0
    %905 = vmatpush1.msra.mxu0 0.0
    %906 = vmatprep.subr.mxu0 0.0
    %907 = vmatpush1.msra.mxu0 0.0
    %908 = vmatprep.subr.mxu0 0.0
    %909 = vmatpush1.msra.mxu0 0.0
    %910 = vmatprep.subr.mxu0 0.0
    %911 = vmatpush1.msra.mxu0 0.0
    %912 = vmatprep.subr.mxu0 0.0
    %913 = vmatpush1.msra.mxu0 0.0
    %914 = vmatprep.subr.mxu0 0.0
    %915 = vmatpush1.msra.mxu0 0.0
    %916 = vmatprep.subr.mxu0 0.0
    %917 = vmatpush1.msra.mxu0 0.0
    %918 = vmatprep.subr.mxu0 0.0
    %919 = vmatpush1.msra.mxu0 0.0
    %920 = vmatprep.subr.mxu0 0.0
    %921 = vmatpush1.msra.mxu0 0.0
    %922 = vmatprep.subr.mxu0 0.0
    %923 = vmatpush1.msra.mxu0 0.0
    %924 = vmatprep.subr.mxu0 0.0
    %v925 = vand.u32 %v490, 4294901760
    %926 = vmatpush1.msra.mxu0 %v925
    %927 = vmatprep.subr.mxu0 0.0
    %v928 = vand.u32 %v489, 4294901760
    %929 = vmatpush1.msra.mxu0 %v928
    %930 = vmatprep.subr.mxu0 0.0
    %v931 = vand.u32 %v488, 4294901760
    %932 = vmatpush1.msra.mxu0 %v931
    %933 = vmatprep.subr.mxu0 0.0
    %934 = vmatpush2.msra.mxu0 0.0
    %935 = vmatprep.subr.mxu0 0.0
    %936 = vmatpush2.msra.mxu0 0.0
    %937 = vmatprep.subr.mxu0 0.0
    %938 = vmatpush2.msra.mxu0 0.0
    %939 = vmatprep.subr.mxu0 0.0
    %940 = vmatpush2.msra.mxu0 0.0
    %941 = vmatprep.subr.mxu0 0.0
    %942 = vmatpush2.msra.mxu0 0.0
    %943 = vmatprep.subr.mxu0 0.0
    %944 = vmatpush2.msra.mxu0 0.0
    %945 = vmatprep.subr.mxu0 0.0
    %946 = vmatpush2.msra.mxu0 0.0
    %947 = vmatprep.subr.mxu0 0.0
    %948 = vmatpush2.msra.mxu0 0.0
    %949 = vmatprep.subr.mxu0 0.0
    %950 = vmatpush2.msra.mxu0 0.0
    %951 = vmatprep.subr.mxu0 0.0
    %952 = vmatpush2.msra.mxu0 0.0
    %953 = vmatprep.subr.mxu0 0.0
    %954 = vmatpush2.msra.mxu0 0.0
    %955 = vmatprep.subr.mxu0 0.0
    %956 = vmatpush2.msra.mxu0 0.0
    %957 = vmatprep.subr.mxu0 0.0
    %958 = vmatpush2.msra.mxu0 0.0
    %959 = vmatprep.subr.mxu0 0.0
    %960 = vmatpush2.msra.mxu0 0.0
    %961 = vmatprep.subr.mxu0 0.0
    %962 = vmatpush2.msra.mxu0 0.0
    %963 = vmatprep.subr.mxu0 0.0
    %964 = vmatpush2.msra.mxu0 0.0
    %965 = vmatprep.mubr.f32.mxu0 0.0
    %v966 = vand.u32 %v498, 4294901760
    %967 = vmatmul.mubr.f32.gmra.mxu0 %v966
    %v968 = vpop.f32.mrf.mxu0
    %v969 = vadd.f32 %v895, %v968
    %v970 = vpop.f32.mrf.mxu0
    %971 = vdwg.mxu0
    %v972 = vtanh.pop %v969
    %v973 = vld [vmem:[#allocation2 + $0x28] sm:$0xff]
    %v974 = vld [vmem:[#allocation2 + $0x30] sm:$0xf]
    %v975 = vld [vmem:[#allocation2 + $0x34] sm:$0x1]
    %v976 = vlaneseq
    %v977 = vshrl.u32 %v976, 7
    %v978 = vsub.s32 0, %v977
    %v979 = vrot.slane %v975, %v978
    %vm980 = vcmask 97280
    %v982 = vsel %vm980, %v972, 0
    %vm984 = vcmask 1043456
    %v986 = vsel %vm984, %v974, 0
    %988 = vmatprep.subr.mxu0 0.0
    %989 = vmatpush1.msra.mxu0 0.0
    %990 = vmatprep.subr.mxu0 0.0
    %991 = vmatpush1.msra.mxu0 0.0
    %992 = vmatprep.subr.mxu0 0.0
    %993 = vmatpush1.msra.mxu0 0.0
    %994 = vmatprep.subr.mxu0 0.0
    %995 = vmatpush1.msra.mxu0 0.0
    %996 = vmatprep.subr.mxu0 0.0
    %997 = vmatpush1.msra.mxu0 0.0
    %998 = vmatprep.subr.mxu0 0.0
    %999 = vmatpush1.msra.mxu0 0.0
    %1000 = vmatprep.subr.mxu0 0.0
    %1001 = vmatpush1.msra.mxu0 0.0
    %1002 = vmatprep.subr.mxu0 0.0
    %1003 = vmatpush1.msra.mxu0 0.0
    %1004 = vmatprep.subr.mxu0 0.0
    %1005 = vmatpush1.msra.mxu0 0.0
    %1006 = vmatprep.subr.mxu0 0.0
    %1007 = vmatpush1.msra.mxu0 0.0
    %1008 = vmatprep.subr.mxu0 0.0
    %1009 = vmatpush1.msra.mxu0 0.0
    %1010 = vmatprep.subr.mxu0 0.0
    %1011 = vmatpush1.msra.mxu0 0.0
    %1012 = vmatprep.subr.mxu0 0.0
    %1013 = vmatpush1.msra.mxu0 0.0
    %1014 = vmatprep.subr.mxu0 0.0
    %1015 = vmatpush1.msra.mxu0 0.0
    %1016 = vmatprep.subr.mxu0 0.0
    %v1017 = vand.u32 %v986, 4294901760
    %1018 = vmatpush1.msra.mxu0 %v1017
    %1019 = vmatprep.subr.mxu0 0.0
    %v1020 = vand.u32 %v973, 4294901760
    %1021 = vmatpush1.msra.mxu0 %v1020
    %1022 = vmatprep.subr.mxu0 0.0
    %1023 = vmatpush2.msra.mxu0 0.0
    %1024 = vmatprep.subr.mxu0 0.0
    %1025 = vmatpush2.msra.mxu0 0.0
    %1026 = vmatprep.subr.mxu0 0.0
    %1027 = vmatpush2.msra.mxu0 0.0
    %1028 = vmatprep.subr.mxu0 0.0
    %1029 = vmatpush2.msra.mxu0 0.0
    %1030 = vmatprep.subr.mxu0 0.0
    %1031 = vmatpush2.msra.mxu0 0.0
    %1032 = vmatprep.subr.mxu0 0.0
    %1033 = vmatpush2.msra.mxu0 0.0
    %1034 = vmatprep.subr.mxu0 0.0
    %1035 = vmatpush2.msra.mxu0 0.0
    %1036 = vmatprep.subr.mxu0 0.0
    %1037 = vmatpush2.msra.mxu0 0.0
    %1038 = vmatprep.subr.mxu0 0.0
    %1039 = vmatpush2.msra.mxu0 0.0
    %1040 = vmatprep.subr.mxu0 0.0
    %1041 = vmatpush2.msra.mxu0 0.0
    %1042 = vmatprep.subr.mxu0 0.0
    %1043 = vmatpush2.msra.mxu0 0.0
    %1044 = vmatprep.subr.mxu0 0.0
    %1045 = vmatpush2.msra.mxu0 0.0
    %1046 = vmatprep.subr.mxu0 0.0
    %1047 = vmatpush2.msra.mxu0 0.0
    %1048 = vmatprep.subr.mxu0 0.0
    %1049 = vmatpush2.msra.mxu0 0.0
    %1050 = vmatprep.subr.mxu0 0.0
    %1051 = vmatpush2.msra.mxu0 0.0
    %1052 = vmatprep.subr.mxu0 0.0
    %1053 = vmatpush2.msra.mxu0 0.0
    %1054 = vmatprep.mubr.f32.mxu0 0.0
    %v1055 = vand.u32 %v982, 4294901760
    %v1056 = vsub.f32 %v982, %v1055
    %v1057 = vand.u32 %v1056, 4294901760
    %v1058 = vsub.f32 %v1056, %v1057
    %v1059 = vand.u32 %v1058, 4294901760
    %1060 = vmatmul.mubr.f32.gmra.mxu0 %v1059
    %v1061 = vpop.f32.mrf.mxu0
    %v1062 = vadd.f32 %v979, %v1061
    %v1063 = vpop.f32.mrf.mxu0
    %1064 = vdwg.mxu0
    %1065 = vmatprep.subr.mxu0 0.0
    %1066 = vmatpush1.msra.mxu0 0.0
    %1067 = vmatprep.subr.mxu0 0.0
    %1068 = vmatpush1.msra.mxu0 0.0
    %1069 = vmatprep.subr.mxu0 0.0
    %1070 = vmatpush1.msra.mxu0 0.0
    %1071 = vmatprep.subr.mxu0 0.0
    %1072 = vmatpush1.msra.mxu0 0.0
    %1073 = vmatprep.subr.mxu0 0.0
    %1074 = vmatpush1.msra.mxu0 0.0
    %1075 = vmatprep.subr.mxu0 0.0
    %1076 = vmatpush1.msra.mxu0 0.0
    %1077 = vmatprep.subr.mxu0 0.0
    %1078 = vmatpush1.msra.mxu0 0.0
    %1079 = vmatprep.subr.mxu0 0.0
    %1080 = vmatpush1.msra.mxu0 0.0
    %1081 = vmatprep.subr.mxu0 0.0
    %1082 = vmatpush1.msra.mxu0 0.0
    %1083 = vmatprep.subr.mxu0 0.0
    %1084 = vmatpush1.msra.mxu0 0.0
    %1085 = vmatprep.subr.mxu0 0.0
    %1086 = vmatpush1.msra.mxu0 0.0
    %1087 = vmatprep.subr.mxu0 0.0
    %1088 = vmatpush1.msra.mxu0 0.0
    %1089 = vmatprep.subr.mxu0 0.0
    %1090 = vmatpush1.msra.mxu0 0.0
    %1091 = vmatprep.subr.mxu0 0.0
    %1092 = vmatpush1.msra.mxu0 0.0
    %1093 = vmatprep.subr.mxu0 0.0
    %v1094 = vand.u32 %v986, 4294901760
    %v1095 = vsub.f32 %v986, %v1094
    %v1096 = vand.u32 %v1095, 4294901760
    %v1097 = vsub.f32 %v1095, %v1096
    %v1098 = vand.u32 %v1097, 4294901760
    %1099 = vmatpush1.msra.mxu0 %v1098
    %1100 = vmatprep.subr.mxu0 0.0
    %v1101 = vand.u32 %v973, 4294901760
    %v1102 = vsub.f32 %v973, %v1101
    %v1103 = vand.u32 %v1102, 4294901760
    %v1104 = vsub.f32 %v1102, %v1103
    %v1105 = vand.u32 %v1104, 4294901760
    %1106 = vmatpush1.msra.mxu0 %v1105
    %1107 = vmatprep.subr.mxu0 0.0
    %1108 = vmatpush2.msra.mxu0 0.0
    %1109 = vmatprep.subr.mxu0 0.0
    %1110 = vmatpush2.msra.mxu0 0.0
    %1111 = vmatprep.subr.mxu0 0.0
    %1112 = vmatpush2.msra.mxu0 0.0
    %1113 = vmatprep.subr.mxu0 0.0
    %1114 = vmatpush2.msra.mxu0 0.0
    %1115 = vmatprep.subr.mxu0 0.0
    %1116 = vmatpush2.msra.mxu0 0.0
    %1117 = vmatprep.subr.mxu0 0.0
    %1118 = vmatpush2.msra.mxu0 0.0
    %1119 = vmatprep.subr.mxu0 0.0
    %1120 = vmatpush2.msra.mxu0 0.0
    %1121 = vmatprep.subr.mxu0 0.0
    %1122 = vmatpush2.msra.mxu0 0.0
    %1123 = vmatprep.subr.mxu0 0.0
    %1124 = vmatpush2.msra.mxu0 0.0
    %1125 = vmatprep.subr.mxu0 0.0
    %1126 = vmatpush2.msra.mxu0 0.0
    %1127 = vmatprep.subr.mxu0 0.0
    %1128 = vmatpush2.msra.mxu0 0.0
    %1129 = vmatprep.subr.mxu0 0.0
    %1130 = vmatpush2.msra.mxu0 0.0
    %1131 = vmatprep.subr.mxu0 0.0
    %1132 = vmatpush2.msra.mxu0 0.0
    %1133 = vmatprep.subr.mxu0 0.0
    %1134 = vmatpush2.msra.mxu0 0.0
    %1135 = vmatprep.subr.mxu0 0.0
    %1136 = vmatpush2.msra.mxu0 0.0
    %1137 = vmatprep.subr.mxu0 0.0
    %1138 = vmatpush2.msra.mxu0 0.0
    %1139 = vmatprep.mubr.f32.mxu0 0.0
    %v1140 = vand.u32 %v982, 4294901760
    %1141 = vmatmul.mubr.f32.gmra.mxu0 %v1140
    %v1142 = vpop.f32.mrf.mxu0
    %v1143 = vadd.f32 %v1062, %v1142
    %v1144 = vpop.f32.mrf.mxu0
    %1145 = vdwg.mxu0
    %1146 = vmatprep.subr.mxu0 0.0
    %1147 = vmatpush1.msra.mxu0 0.0
    %1148 = vmatprep.subr.mxu0 0.0
    %1149 = vmatpush1.msra.mxu0 0.0
    %1150 = vmatprep.subr.mxu0 0.0
    %1151 = vmatpush1.msra.mxu0 0.0
    %1152 = vmatprep.subr.mxu0 0.0
    %1153 = vmatpush1.msra.mxu0 0.0
    %1154 = vmatprep.subr.mxu0 0.0
    %1155 = vmatpush1.msra.mxu0 0.0
    %1156 = vmatprep.subr.mxu0 0.0
    %1157 = vmatpush1.msra.mxu0 0.0
    %1158 = vmatprep.subr.mxu0 0.0
    %1159 = vmatpush1.msra.mxu0 0.0
    %1160 = vmatprep.subr.mxu0 0.0
    %1161 = vmatpush1.msra.mxu0 0.0
    %1162 = vmatprep.subr.mxu0 0.0
    %1163 = vmatpush1.msra.mxu0 0.0
    %1164 = vmatprep.subr.mxu0 0.0
    %1165 = vmatpush1.msra.mxu0 0.0
    %1166 = vmatprep.subr.mxu0 0.0
    %1167 = vmatpush1.msra.mxu0 0.0
    %1168 = vmatprep.subr.mxu0 0.0
    %1169 = vmatpush1.msra.mxu0 0.0
    %1170 = vmatprep.subr.mxu0 0.0
    %1171 = vmatpush1.msra.mxu0 0.0
    %1172 = vmatprep.subr.mxu0 0.0
    %1173 = vmatpush1.msra.mxu0 0.0
    %1174 = vmatprep.subr.mxu0 0.0
    %v1175 = vand.u32 %v986, 4294901760
    %v1176 = vsub.f32 %v986, %v1175
    %1177 = vmatpush1.msra.mxu0 %v1176
    %1178 = vmatprep.subr.mxu0 0.0
    %v1179 = vand.u32 %v973, 4294901760
    %v1180 = vsub.f32 %v973, %v1179
    %1181 = vmatpush1.msra.mxu0 %v1180
    %1182 = vmatprep.subr.mxu0 0.0
    %1183 = vmatpush2.msra.mxu0 0.0
    %1184 = vmatprep.subr.mxu0 0.0
    %1185 = vmatpush2.msra.mxu0 0.0
    %1186 = vmatprep.subr.mxu0 0.0
    %1187 = vmatpush2.msra.mxu0 0.0
    %1188 = vmatprep.subr.mxu0 0.0
    %1189 = vmatpush2.msra.mxu0 0.0
    %1190 = vmatprep.subr.mxu0 0.0
    %1191 = vmatpush2.msra.mxu0 0.0
    %1192 = vmatprep.subr.mxu0 0.0
    %1193 = vmatpush2.msra.mxu0 0.0
    %1194 = vmatprep.subr.mxu0 0.0
    %1195 = vmatpush2.msra.mxu0 0.0
    %1196 = vmatprep.subr.mxu0 0.0
    %1197 = vmatpush2.msra.mxu0 0.0
    %1198 = vmatprep.subr.mxu0 0.0
    %1199 = vmatpush2.msra.mxu0 0.0
    %1200 = vmatprep.subr.mxu0 0.0
    %1201 = vmatpush2.msra.mxu0 0.0
    %1202 = vmatprep.subr.mxu0 0.0
    %1203 = vmatpush2.msra.mxu0 0.0
    %1204 = vmatprep.subr.mxu0 0.0
    %1205 = vmatpush2.msra.mxu0 0.0
    %1206 = vmatprep.subr.mxu0 0.0
    %1207 = vmatpush2.msra.mxu0 0.0
    %1208 = vmatprep.subr.mxu0 0.0
    %1209 = vmatpush2.msra.mxu0 0.0
    %1210 = vmatprep.subr.mxu0 0.0
    %1211 = vmatpush2.msra.mxu0 0.0
    %1212 = vmatprep.subr.mxu0 0.0
    %1213 = vmatpush2.msra.mxu0 0.0
    %1214 = vmatprep.mubr.f32.mxu0 0.0
    %v1215 = vand.u32 %v982, 4294901760
    %v1216 = vsub.f32 %v982, %v1215
    %1217 = vmatmul.mubr.f32.gmra.mxu0 %v1216
    %v1218 = vpop.f32.mrf.mxu0
    %v1219 = vadd.f32 %v1143, %v1218
    %v1220 = vpop.f32.mrf.mxu0
    %1221 = vdwg.mxu0
    %1222 = vmatprep.subr.mxu0 0.0
    %1223 = vmatpush1.msra.mxu0 0.0
    %1224 = vmatprep.subr.mxu0 0.0
    %1225 = vmatpush1.msra.mxu0 0.0
    %1226 = vmatprep.subr.mxu0 0.0
    %1227 = vmatpush1.msra.mxu0 0.0
    %1228 = vmatprep.subr.mxu0 0.0
    %1229 = vmatpush1.msra.mxu0 0.0
    %1230 = vmatprep.subr.mxu0 0.0
    %1231 = vmatpush1.msra.mxu0 0.0
    %1232 = vmatprep.subr.mxu0 0.0
    %1233 = vmatpush1.msra.mxu0 0.0
    %1234 = vmatprep.subr.mxu0 0.0
    %1235 = vmatpush1.msra.mxu0 0.0
    %1236 = vmatprep.subr.mxu0 0.0
    %1237 = vmatpush1.msra.mxu0 0.0
    %1238 = vmatprep.subr.mxu0 0.0
    %1239 = vmatpush1.msra.mxu0 0.0
    %1240 = vmatprep.subr.mxu0 0.0
    %1241 = vmatpush1.msra.mxu0 0.0
    %1242 = vmatprep.subr.mxu0 0.0
    %1243 = vmatpush1.msra.mxu0 0.0
    %1244 = vmatprep.subr.mxu0 0.0
    %1245 = vmatpush1.msra.mxu0 0.0
    %1246 = vmatprep.subr.mxu0 0.0
    %1247 = vmatpush1.msra.mxu0 0.0
    %1248 = vmatprep.subr.mxu0 0.0
    %1249 = vmatpush1.msra.mxu0 0.0
    %1250 = vmatprep.subr.mxu0 0.0
    %v1251 = vand.u32 %v986, 4294901760
    %1252 = vmatpush1.msra.mxu0 %v1251
    %1253 = vmatprep.subr.mxu0 0.0
    %v1254 = vand.u32 %v973, 4294901760
    %1255 = vmatpush1.msra.mxu0 %v1254
    %1256 = vmatprep.subr.mxu0 0.0
    %1257 = vmatpush2.msra.mxu0 0.0
    %1258 = vmatprep.subr.mxu0 0.0
    %1259 = vmatpush2.msra.mxu0 0.0
    %1260 = vmatprep.subr.mxu0 0.0
    %1261 = vmatpush2.msra.mxu0 0.0
    %1262 = vmatprep.subr.mxu0 0.0
    %1263 = vmatpush2.msra.mxu0 0.0
    %1264 = vmatprep.subr.mxu0 0.0
    %1265 = vmatpush2.msra.mxu0 0.0
    %1266 = vmatprep.subr.mxu0 0.0
    %1267 = vmatpush2.msra.mxu0 0.0
    %1268 = vmatprep.subr.mxu0 0.0
    %1269 = vmatpush2.msra.mxu0 0.0
    %1270 = vmatprep.subr.mxu0 0.0
    %1271 = vmatpush2.msra.mxu0 0.0
    %1272 = vmatprep.subr.mxu0 0.0
    %1273 = vmatpush2.msra.mxu0 0.0
    %1274 = vmatprep.subr.mxu0 0.0
    %1275 = vmatpush2.msra.mxu0 0.0
    %1276 = vmatprep.subr.mxu0 0.0
    %1277 = vmatpush2.msra.mxu0 0.0
    %1278 = vmatprep.subr.mxu0 0.0
    %1279 = vmatpush2.msra.mxu0 0.0
    %1280 = vmatprep.subr.mxu0 0.0
    %1281 = vmatpush2.msra.mxu0 0.0
    %1282 = vmatprep.subr.mxu0 0.0
    %1283 = vmatpush2.msra.mxu0 0.0
    %1284 = vmatprep.subr.mxu0 0.0
    %1285 = vmatpush2.msra.mxu0 0.0
    %1286 = vmatprep.subr.mxu0 0.0
    %1287 = vmatpush2.msra.mxu0 0.0
    %1288 = vmatprep.mubr.f32.mxu0 0.0
    %v1289 = vand.u32 %v982, 4294901760
    %v1290 = vsub.f32 %v982, %v1289
    %v1291 = vand.u32 %v1290, 4294901760
    %1292 = vmatmul.mubr.f32.gmra.mxu0 %v1291
    %v1293 = vpop.f32.mrf.mxu0
    %v1294 = vadd.f32 %v1219, %v1293
    %v1295 = vpop.f32.mrf.mxu0
    %1296 = vdwg.mxu0
    %1297 = vmatprep.subr.mxu0 0.0
    %1298 = vmatpush1.msra.mxu0 0.0
    %1299 = vmatprep.subr.mxu0 0.0
    %1300 = vmatpush1.msra.mxu0 0.0
    %1301 = vmatprep.subr.mxu0 0.0
    %1302 = vmatpush1.msra.mxu0 0.0
    %1303 = vmatprep.subr.mxu0 0.0
    %1304 = vmatpush1.msra.mxu0 0.0
    %1305 = vmatprep.subr.mxu0 0.0
    %1306 = vmatpush1.msra.mxu0 0.0
    %1307 = vmatprep.subr.mxu0 0.0
    %1308 = vmatpush1.msra.mxu0 0.0
    %1309 = vmatprep.subr.mxu0 0.0
    %1310 = vmatpush1.msra.mxu0 0.0
    %1311 = vmatprep.subr.mxu0 0.0
    %1312 = vmatpush1.msra.mxu0 0.0
    %1313 = vmatprep.subr.mxu0 0.0
    %1314 = vmatpush1.msra.mxu0 0.0
    %1315 = vmatprep.subr.mxu0 0.0
    %1316 = vmatpush1.msra.mxu0 0.0
    %1317 = vmatprep.subr.mxu0 0.0
    %1318 = vmatpush1.msra.mxu0 0.0
    %1319 = vmatprep.subr.mxu0 0.0
    %1320 = vmatpush1.msra.mxu0 0.0
    %1321 = vmatprep.subr.mxu0 0.0
    %1322 = vmatpush1.msra.mxu0 0.0
    %1323 = vmatprep.subr.mxu0 0.0
    %1324 = vmatpush1.msra.mxu0 0.0
    %1325 = vmatprep.subr.mxu0 0.0
    %v1326 = vand.u32 %v986, 4294901760
    %v1327 = vsub.f32 %v986, %v1326
    %v1328 = vand.u32 %v1327, 4294901760
    %1329 = vmatpush1.msra.mxu0 %v1328
    %1330 = vmatprep.subr.mxu0 0.0
    %v1331 = vand.u32 %v973, 4294901760
    %v1332 = vsub.f32 %v973, %v1331
    %v1333 = vand.u32 %v1332, 4294901760
    %1334 = vmatpush1.msra.mxu0 %v1333
    %1335 = vmatprep.subr.mxu0 0.0
    %1336 = vmatpush2.msra.mxu0 0.0
    %1337 = vmatprep.subr.mxu0 0.0
    %1338 = vmatpush2.msra.mxu0 0.0
    %1339 = vmatprep.subr.mxu0 0.0
    %1340 = vmatpush2.msra.mxu0 0.0
    %1341 = vmatprep.subr.mxu0 0.0
    %1342 = vmatpush2.msra.mxu0 0.0
    %1343 = vmatprep.subr.mxu0 0.0
    %1344 = vmatpush2.msra.mxu0 0.0
    %1345 = vmatprep.subr.mxu0 0.0
    %1346 = vmatpush2.msra.mxu0 0.0
    %1347 = vmatprep.subr.mxu0 0.0
    %1348 = vmatpush2.msra.mxu0 0.0
    %1349 = vmatprep.subr.mxu0 0.0
    %1350 = vmatpush2.msra.mxu0 0.0
    %1351 = vmatprep.subr.mxu0 0.0
    %1352 = vmatpush2.msra.mxu0 0.0
    %1353 = vmatprep.subr.mxu0 0.0
    %1354 = vmatpush2.msra.mxu0 0.0
    %1355 = vmatprep.subr.mxu0 0.0
    %1356 = vmatpush2.msra.mxu0 0.0
    %1357 = vmatprep.subr.mxu0 0.0
    %1358 = vmatpush2.msra.mxu0 0.0
    %1359 = vmatprep.subr.mxu0 0.0
    %1360 = vmatpush2.msra.mxu0 0.0
    %1361 = vmatprep.subr.mxu0 0.0
    %1362 = vmatpush2.msra.mxu0 0.0
    %1363 = vmatprep.subr.mxu0 0.0
    %1364 = vmatpush2.msra.mxu0 0.0
    %1365 = vmatprep.subr.mxu0 0.0
    %1366 = vmatpush2.msra.mxu0 0.0
    %1367 = vmatprep.mubr.f32.mxu0 0.0
    %v1368 = vand.u32 %v982, 4294901760
    %1369 = vmatmul.mubr.f32.gmra.mxu0 %v1368
    %v1370 = vpop.f32.mrf.mxu0
    %v1371 = vadd.f32 %v1294, %v1370
    %v1372 = vpop.f32.mrf.mxu0
    %1373 = vdwg.mxu0
    %1374 = vmatprep.subr.mxu0 0.0
    %1375 = vmatpush1.msra.mxu0 0.0
    %1376 = vmatprep.subr.mxu0 0.0
    %1377 = vmatpush1.msra.mxu0 0.0
    %1378 = vmatprep.subr.mxu0 0.0
    %1379 = vmatpush1.msra.mxu0 0.0
    %1380 = vmatprep.subr.mxu0 0.0
    %1381 = vmatpush1.msra.mxu0 0.0
    %1382 = vmatprep.subr.mxu0 0.0
    %1383 = vmatpush1.msra.mxu0 0.0
    %1384 = vmatprep.subr.mxu0 0.0
    %1385 = vmatpush1.msra.mxu0 0.0
    %1386 = vmatprep.subr.mxu0 0.0
    %1387 = vmatpush1.msra.mxu0 0.0
    %1388 = vmatprep.subr.mxu0 0.0
    %1389 = vmatpush1.msra.mxu0 0.0
    %1390 = vmatprep.subr.mxu0 0.0
    %1391 = vmatpush1.msra.mxu0 0.0
    %1392 = vmatprep.subr.mxu0 0.0
    %1393 = vmatpush1.msra.mxu0 0.0
    %1394 = vmatprep.subr.mxu0 0.0
    %1395 = vmatpush1.msra.mxu0 0.0
    %1396 = vmatprep.subr.mxu0 0.0
    %1397 = vmatpush1.msra.mxu0 0.0
    %1398 = vmatprep.subr.mxu0 0.0
    %1399 = vmatpush1.msra.mxu0 0.0
    %1400 = vmatprep.subr.mxu0 0.0
    %1401 = vmatpush1.msra.mxu0 0.0
    %1402 = vmatprep.subr.mxu0 0.0
    %v1403 = vand.u32 %v986, 4294901760
    %1404 = vmatpush1.msra.mxu0 %v1403
    %1405 = vmatprep.subr.mxu0 0.0
    %v1406 = vand.u32 %v973, 4294901760
    %1407 = vmatpush1.msra.mxu0 %v1406
    %1408 = vmatprep.subr.mxu0 0.0
    %1409 = vmatpush2.msra.mxu0 0.0
    %1410 = vmatprep.subr.mxu0 0.0
    %1411 = vmatpush2.msra.mxu0 0.0
    %1412 = vmatprep.subr.mxu0 0.0
    %1413 = vmatpush2.msra.mxu0 0.0
    %1414 = vmatprep.subr.mxu0 0.0
    %1415 = vmatpush2.msra.mxu0 0.0
    %1416 = vmatprep.subr.mxu0 0.0
    %1417 = vmatpush2.msra.mxu0 0.0
    %1418 = vmatprep.subr.mxu0 0.0
    %1419 = vmatpush2.msra.mxu0 0.0
    %1420 = vmatprep.subr.mxu0 0.0
    %1421 = vmatpush2.msra.mxu0 0.0
    %1422 = vmatprep.subr.mxu0 0.0
    %1423 = vmatpush2.msra.mxu0 0.0
    %1424 = vmatprep.subr.mxu0 0.0
    %1425 = vmatpush2.msra.mxu0 0.0
    %1426 = vmatprep.subr.mxu0 0.0
    %1427 = vmatpush2.msra.mxu0 0.0
    %1428 = vmatprep.subr.mxu0 0.0
    %1429 = vmatpush2.msra.mxu0 0.0
    %1430 = vmatprep.subr.mxu0 0.0
    %1431 = vmatpush2.msra.mxu0 0.0
    %1432 = vmatprep.subr.mxu0 0.0
    %1433 = vmatpush2.msra.mxu0 0.0
    %1434 = vmatprep.subr.mxu0 0.0
    %1435 = vmatpush2.msra.mxu0 0.0
    %1436 = vmatprep.subr.mxu0 0.0
    %1437 = vmatpush2.msra.mxu0 0.0
    %1438 = vmatprep.subr.mxu0 0.0
    %1439 = vmatpush2.msra.mxu0 0.0
    %1440 = vmatprep.mubr.f32.mxu0 0.0
    %v1441 = vand.u32 %v982, 4294901760
    %1442 = vmatmul.mubr.f32.gmra.mxu0 %v1441
    %v1443 = vpop.f32.mrf.mxu0
    %v1444 = vadd.f32 %v1371, %v1443
    %v1445 = vpop.f32.mrf.mxu0
    %1446 = vdwg.mxu0
    %v1447 = vtanh.pop %v1444
    %v1448 = vld [vmem:[#allocation2 + $0x38] sm:$0x3f]
    %v1449 = vld [vmem:[#allocation2 + $0x3e] sm:$0x1]
    %v1450 = vlaneseq
    %v1451 = vshrl.u32 %v1450, 7
    %v1452 = vsub.s32 0, %v1451
    %v1453 = vrot.slane %v1449, %v1452
    %vm1454 = vcmask 48128
    %v1456 = vsel %vm1454, %v1447, 0
    %vm1458 = vcmask 1045504
    %v1460 = vsel %vm1458, %v1448, 0
    %1462 = vmatprep.subr.mxu0 0.0
    %1463 = vmatpush1.msra.mxu0 0.0
    %1464 = vmatprep.subr.mxu0 0.0
    %1465 = vmatpush1.msra.mxu0 0.0
    %1466 = vmatprep.subr.mxu0 0.0
    %1467 = vmatpush1.msra.mxu0 0.0
    %1468 = vmatprep.subr.mxu0 0.0
    %1469 = vmatpush1.msra.mxu0 0.0
    %1470 = vmatprep.subr.mxu0 0.0
    %1471 = vmatpush1.msra.mxu0 0.0
    %1472 = vmatprep.subr.mxu0 0.0
    %1473 = vmatpush1.msra.mxu0 0.0
    %1474 = vmatprep.subr.mxu0 0.0
    %1475 = vmatpush1.msra.mxu0 0.0
    %1476 = vmatprep.subr.mxu0 0.0
    %1477 = vmatpush1.msra.mxu0 0.0
    %1478 = vmatprep.subr.mxu0 0.0
    %1479 = vmatpush1.msra.mxu0 0.0
    %1480 = vmatprep.subr.mxu0 0.0
    %1481 = vmatpush1.msra.mxu0 0.0
    %1482 = vmatprep.subr.mxu0 0.0
    %1483 = vmatpush1.msra.mxu0 0.0
    %1484 = vmatprep.subr.mxu0 0.0
    %1485 = vmatpush1.msra.mxu0 0.0
    %1486 = vmatprep.subr.mxu0 0.0
    %1487 = vmatpush1.msra.mxu0 0.0
    %1488 = vmatprep.subr.mxu0 0.0
    %1489 = vmatpush1.msra.mxu0 0.0
    %1490 = vmatprep.subr.mxu0 0.0
    %1491 = vmatpush1.msra.mxu0 0.0
    %1492 = vmatprep.subr.mxu0 0.0
    %v1493 = vand.u32 %v1460, 4294901760
    %1494 = vmatpush1.msra.mxu0 %v1493
    %1495 = vmatprep.subr.mxu0 0.0
    %1496 = vmatpush2.msra.mxu0 0.0
    %1497 = vmatprep.subr.mxu0 0.0
    %1498 = vmatpush2.msra.mxu0 0.0
    %1499 = vmatprep.subr.mxu0 0.0
    %1500 = vmatpush2.msra.mxu0 0.0
    %1501 = vmatprep.subr.mxu0 0.0
    %1502 = vmatpush2.msra.mxu0 0.0
    %1503 = vmatprep.subr.mxu0 0.0
    %1504 = vmatpush2.msra.mxu0 0.0
    %1505 = vmatprep.subr.mxu0 0.0
    %1506 = vmatpush2.msra.mxu0 0.0
    %1507 = vmatprep.subr.mxu0 0.0
    %1508 = vmatpush2.msra.mxu0 0.0
    %1509 = vmatprep.subr.mxu0 0.0
    %1510 = vmatpush2.msra.mxu0 0.0
    %1511 = vmatprep.subr.mxu0 0.0
    %1512 = vmatpush2.msra.mxu0 0.0
    %1513 = vmatprep.subr.mxu0 0.0
    %1514 = vmatpush2.msra.mxu0 0.0
    %1515 = vmatprep.subr.mxu0 0.0
    %1516 = vmatpush2.msra.mxu0 0.0
    %1517 = vmatprep.subr.mxu0 0.0
    %1518 = vmatpush2.msra.mxu0 0.0
    %1519 = vmatprep.subr.mxu0 0.0
    %1520 = vmatpush2.msra.mxu0 0.0
    %1521 = vmatprep.subr.mxu0 0.0
    %1522 = vmatpush2.msra.mxu0 0.0
    %1523 = vmatprep.subr.mxu0 0.0
    %1524 = vmatpush2.msra.mxu0 0.0
    %1525 = vmatprep.subr.mxu0 0.0
    %1526 = vmatpush2.msra.mxu0 0.0
    %1527 = vmatprep.mubr.f32.mxu0 0.0
    %v1528 = vand.u32 %v1456, 4294901760
    %v1529 = vsub.f32 %v1456, %v1528
    %v1530 = vand.u32 %v1529, 4294901760
    %v1531 = vsub.f32 %v1529, %v1530
    %v1532 = vand.u32 %v1531, 4294901760
    %1533 = vmatmul.mubr.f32.gmra.mxu0 %v1532
    %v1534 = vpop.f32.mrf.mxu0
    %v1535 = vadd.f32 %v1453, %v1534
    %v1536 = vpop.f32.mrf.mxu0
    %1537 = vdwg.mxu0
    %1538 = vmatprep.subr.mxu0 0.0
    %1539 = vmatpush1.msra.mxu0 0.0
    %1540 = vmatprep.subr.mxu0 0.0
    %1541 = vmatpush1.msra.mxu0 0.0
    %1542 = vmatprep.subr.mxu0 0.0
    %1543 = vmatpush1.msra.mxu0 0.0
    %1544 = vmatprep.subr.mxu0 0.0
    %1545 = vmatpush1.msra.mxu0 0.0
    %1546 = vmatprep.subr.mxu0 0.0
    %1547 = vmatpush1.msra.mxu0 0.0
    %1548 = vmatprep.subr.mxu0 0.0
    %1549 = vmatpush1.msra.mxu0 0.0
    %1550 = vmatprep.subr.mxu0 0.0
    %1551 = vmatpush1.msra.mxu0 0.0
    %1552 = vmatprep.subr.mxu0 0.0
    %1553 = vmatpush1.msra.mxu0 0.0
    %1554 = vmatprep.subr.mxu0 0.0
    %1555 = vmatpush1.msra.mxu0 0.0
    %1556 = vmatprep.subr.mxu0 0.0
    %1557 = vmatpush1.msra.mxu0 0.0
    %1558 = vmatprep.subr.mxu0 0.0
    %1559 = vmatpush1.msra.mxu0 0.0
    %1560 = vmatprep.subr.mxu0 0.0
    %1561 = vmatpush1.msra.mxu0 0.0
    %1562 = vmatprep.subr.mxu0 0.0
    %1563 = vmatpush1.msra.mxu0 0.0
    %1564 = vmatprep.subr.mxu0 0.0
    %1565 = vmatpush1.msra.mxu0 0.0
    %1566 = vmatprep.subr.mxu0 0.0
    %1567 = vmatpush1.msra.mxu0 0.0
    %1568 = vmatprep.subr.mxu0 0.0
    %v1569 = vand.u32 %v1460, 4294901760
    %v1570 = vsub.f32 %v1460, %v1569
    %v1571 = vand.u32 %v1570, 4294901760
    %v1572 = vsub.f32 %v1570, %v1571
    %v1573 = vand.u32 %v1572, 4294901760
    %1574 = vmatpush1.msra.mxu0 %v1573
    %1575 = vmatprep.subr.mxu0 0.0
    %1576 = vmatpush2.msra.mxu0 0.0
    %1577 = vmatprep.subr.mxu0 0.0
    %1578 = vmatpush2.msra.mxu0 0.0
    %1579 = vmatprep.subr.mxu0 0.0
    %1580 = vmatpush2.msra.mxu0 0.0
    %1581 = vmatprep.subr.mxu0 0.0
    %1582 = vmatpush2.msra.mxu0 0.0
    %1583 = vmatprep.subr.mxu0 0.0
    %1584 = vmatpush2.msra.mxu0 0.0
    %1585 = vmatprep.subr.mxu0 0.0
    %1586 = vmatpush2.msra.mxu0 0.0
    %1587 = vmatprep.subr.mxu0 0.0
    %1588 = vmatpush2.msra.mxu0 0.0
    %1589 = vmatprep.subr.mxu0 0.0
    %1590 = vmatpush2.msra.mxu0 0.0
    %1591 = vmatprep.subr.mxu0 0.0
    %1592 = vmatpush2.msra.mxu0 0.0
    %1593 = vmatprep.subr.mxu0 0.0
    %1594 = vmatpush2.msra.mxu0 0.0
    %1595 = vmatprep.subr.mxu0 0.0
    %1596 = vmatpush2.msra.mxu0 0.0
    %1597 = vmatprep.subr.mxu0 0.0
    %1598 = vmatpush2.msra.mxu0 0.0
    %1599 = vmatprep.subr.mxu0 0.0
    %1600 = vmatpush2.msra.mxu0 0.0
    %1601 = vmatprep.subr.mxu0 0.0
    %1602 = vmatpush2.msra.mxu0 0.0
    %1603 = vmatprep.subr.mxu0 0.0
    %1604 = vmatpush2.msra.mxu0 0.0
    %1605 = vmatprep.subr.mxu0 0.0
    %1606 = vmatpush2.msra.mxu0 0.0
    %1607 = vmatprep.mubr.f32.mxu0 0.0
    %v1608 = vand.u32 %v1456, 4294901760
    %1609 = vmatmul.mubr.f32.gmra.mxu0 %v1608
    %v1610 = vpop.f32.mrf.mxu0
    %v1611 = vadd.f32 %v1535, %v1610
    %v1612 = vpop.f32.mrf.mxu0
    %1613 = vdwg.mxu0
    %1614 = vmatprep.subr.mxu0 0.0
    %1615 = vmatpush1.msra.mxu0 0.0
    %1616 = vmatprep.subr.mxu0 0.0
    %1617 = vmatpush1.msra.mxu0 0.0
    %1618 = vmatprep.subr.mxu0 0.0
    %1619 = vmatpush1.msra.mxu0 0.0
    %1620 = vmatprep.subr.mxu0 0.0
    %1621 = vmatpush1.msra.mxu0 0.0
    %1622 = vmatprep.subr.mxu0 0.0
    %1623 = vmatpush1.msra.mxu0 0.0
    %1624 = vmatprep.subr.mxu0 0.0
    %1625 = vmatpush1.msra.mxu0 0.0
    %1626 = vmatprep.subr.mxu0 0.0
    %1627 = vmatpush1.msra.mxu0 0.0
    %1628 = vmatprep.subr.mxu0 0.0
    %1629 = vmatpush1.msra.mxu0 0.0
    %1630 = vmatprep.subr.mxu0 0.0
    %1631 = vmatpush1.msra.mxu0 0.0
    %1632 = vmatprep.subr.mxu0 0.0
    %1633 = vmatpush1.msra.mxu0 0.0
    %1634 = vmatprep.subr.mxu0 0.0
    %1635 = vmatpush1.msra.mxu0 0.0
    %1636 = vmatprep.subr.mxu0 0.0
    %1637 = vmatpush1.msra.mxu0 0.0
    %1638 = vmatprep.subr.mxu0 0.0
    %1639 = vmatpush1.msra.mxu0 0.0
    %1640 = vmatprep.subr.mxu0 0.0
    %1641 = vmatpush1.msra.mxu0 0.0
    %1642 = vmatprep.subr.mxu0 0.0
    %1643 = vmatpush1.msra.mxu0 0.0
    %1644 = vmatprep.subr.mxu0 0.0
    %v1645 = vand.u32 %v1460, 4294901760
    %v1646 = vsub.f32 %v1460, %v1645
    %1647 = vmatpush1.msra.mxu0 %v1646
    %1648 = vmatprep.subr.mxu0 0.0
    %1649 = vmatpush2.msra.mxu0 0.0
    %1650 = vmatprep.subr.mxu0 0.0
    %1651 = vmatpush2.msra.mxu0 0.0
    %1652 = vmatprep.subr.mxu0 0.0
    %1653 = vmatpush2.msra.mxu0 0.0
    %1654 = vmatprep.subr.mxu0 0.0
    %1655 = vmatpush2.msra.mxu0 0.0
    %1656 = vmatprep.subr.mxu0 0.0
    %1657 = vmatpush2.msra.mxu0 0.0
    %1658 = vmatprep.subr.mxu0 0.0
    %1659 = vmatpush2.msra.mxu0 0.0
    %1660 = vmatprep.subr.mxu0 0.0
    %1661 = vmatpush2.msra.mxu0 0.0
    %1662 = vmatprep.subr.mxu0 0.0
    %1663 = vmatpush2.msra.mxu0 0.0
    %1664 = vmatprep.subr.mxu0 0.0
    %1665 = vmatpush2.msra.mxu0 0.0
    %1666 = vmatprep.subr.mxu0 0.0
    %1667 = vmatpush2.msra.mxu0 0.0
    %1668 = vmatprep.subr.mxu0 0.0
    %1669 = vmatpush2.msra.mxu0 0.0
    %1670 = vmatprep.subr.mxu0 0.0
    %1671 = vmatpush2.msra.mxu0 0.0
    %1672 = vmatprep.subr.mxu0 0.0
    %1673 = vmatpush2.msra.mxu0 0.0
    %1674 = vmatprep.subr.mxu0 0.0
    %1675 = vmatpush2.msra.mxu0 0.0
    %1676 = vmatprep.subr.mxu0 0.0
    %1677 = vmatpush2.msra.mxu0 0.0
    %1678 = vmatprep.subr.mxu0 0.0
    %1679 = vmatpush2.msra.mxu0 0.0
    %1680 = vmatprep.mubr.f32.mxu0 0.0
    %v1681 = vand.u32 %v1456, 4294901760
    %v1682 = vsub.f32 %v1456, %v1681
    %1683 = vmatmul.mubr.f32.gmra.mxu0 %v1682
    %v1684 = vpop.f32.mrf.mxu0
    %v1685 = vadd.f32 %v1611, %v1684
    %v1686 = vpop.f32.mrf.mxu0
    %1687 = vdwg.mxu0
    %1688 = vmatprep.subr.mxu0 0.0
    %1689 = vmatpush1.msra.mxu0 0.0
    %1690 = vmatprep.subr.mxu0 0.0
    %1691 = vmatpush1.msra.mxu0 0.0
    %1692 = vmatprep.subr.mxu0 0.0
    %1693 = vmatpush1.msra.mxu0 0.0
    %1694 = vmatprep.subr.mxu0 0.0
    %1695 = vmatpush1.msra.mxu0 0.0
    %1696 = vmatprep.subr.mxu0 0.0
    %1697 = vmatpush1.msra.mxu0 0.0
    %1698 = vmatprep.subr.mxu0 0.0
    %1699 = vmatpush1.msra.mxu0 0.0
    %1700 = vmatprep.subr.mxu0 0.0
    %1701 = vmatpush1.msra.mxu0 0.0
    %1702 = vmatprep.subr.mxu0 0.0
    %1703 = vmatpush1.msra.mxu0 0.0
    %1704 = vmatprep.subr.mxu0 0.0
    %1705 = vmatpush1.msra.mxu0 0.0
    %1706 = vmatprep.subr.mxu0 0.0
    %1707 = vmatpush1.msra.mxu0 0.0
    %1708 = vmatprep.subr.mxu0 0.0
    %1709 = vmatpush1.msra.mxu0 0.0
    %1710 = vmatprep.subr.mxu0 0.0
    %1711 = vmatpush1.msra.mxu0 0.0
    %1712 = vmatprep.subr.mxu0 0.0
    %1713 = vmatpush1.msra.mxu0 0.0
    %1714 = vmatprep.subr.mxu0 0.0
    %1715 = vmatpush1.msra.mxu0 0.0
    %1716 = vmatprep.subr.mxu0 0.0
    %1717 = vmatpush1.msra.mxu0 0.0
    %1718 = vmatprep.subr.mxu0 0.0
    %v1719 = vand.u32 %v1460, 4294901760
    %1720 = vmatpush1.msra.mxu0 %v1719
    %1721 = vmatprep.subr.mxu0 0.0
    %1722 = vmatpush2.msra.mxu0 0.0
    %1723 = vmatprep.subr.mxu0 0.0
    %1724 = vmatpush2.msra.mxu0 0.0
    %1725 = vmatprep.subr.mxu0 0.0
    %1726 = vmatpush2.msra.mxu0 0.0
    %1727 = vmatprep.subr.mxu0 0.0
    %1728 = vmatpush2.msra.mxu0 0.0
    %1729 = vmatprep.subr.mxu0 0.0
    %1730 = vmatpush2.msra.mxu0 0.0
    %1731 = vmatprep.subr.mxu0 0.0
    %1732 = vmatpush2.msra.mxu0 0.0
    %1733 = vmatprep.subr.mxu0 0.0
    %1734 = vmatpush2.msra.mxu0 0.0
    %1735 = vmatprep.subr.mxu0 0.0
    %1736 = vmatpush2.msra.mxu0 0.0
    %1737 = vmatprep.subr.mxu0 0.0
    %1738 = vmatpush2.msra.mxu0 0.0
    %1739 = vmatprep.subr.mxu0 0.0
    %1740 = vmatpush2.msra.mxu0 0.0
    %1741 = vmatprep.subr.mxu0 0.0
    %1742 = vmatpush2.msra.mxu0 0.0
    %1743 = vmatprep.subr.mxu0 0.0
    %1744 = vmatpush2.msra.mxu0 0.0
    %1745 = vmatprep.subr.mxu0 0.0
    %1746 = vmatpush2.msra.mxu0 0.0
    %1747 = vmatprep.subr.mxu0 0.0
    %1748 = vmatpush2.msra.mxu0 0.0
    %1749 = vmatprep.subr.mxu0 0.0
    %1750 = vmatpush2.msra.mxu0 0.0
    %1751 = vmatprep.subr.mxu0 0.0
    %1752 = vmatpush2.msra.mxu0 0.0
    %1753 = vmatprep.mubr.f32.mxu0 0.0
    %v1754 = vand.u32 %v1456, 4294901760
    %v1755 = vsub.f32 %v1456, %v1754
    %v1756 = vand.u32 %v1755, 4294901760
    %1757 = vmatmul.mubr.f32.gmra.mxu0 %v1756
    %v1758 = vpop.f32.mrf.mxu0
    %v1759 = vadd.f32 %v1685, %v1758
    %v1760 = vpop.f32.mrf.mxu0
    %1761 = vdwg.mxu0
    %1762 = vmatprep.subr.mxu0 0.0
    %1763 = vmatpush1.msra.mxu0 0.0
    %1764 = vmatprep.subr.mxu0 0.0
    %1765 = vmatpush1.msra.mxu0 0.0
    %1766 = vmatprep.subr.mxu0 0.0
    %1767 = vmatpush1.msra.mxu0 0.0
    %1768 = vmatprep.subr.mxu0 0.0
    %1769 = vmatpush1.msra.mxu0 0.0
    %1770 = vmatprep.subr.mxu0 0.0
    %1771 = vmatpush1.msra.mxu0 0.0
    %1772 = vmatprep.subr.mxu0 0.0
    %1773 = vmatpush1.msra.mxu0 0.0
    %1774 = vmatprep.subr.mxu0 0.0
    %1775 = vmatpush1.msra.mxu0 0.0
    %1776 = vmatprep.subr.mxu0 0.0
    %1777 = vmatpush1.msra.mxu0 0.0
    %1778 = vmatprep.subr.mxu0 0.0
    %1779 = vmatpush1.msra.mxu0 0.0
    %1780 = vmatprep.subr.mxu0 0.0
    %1781 = vmatpush1.msra.mxu0 0.0
    %1782 = vmatprep.subr.mxu0 0.0
    %1783 = vmatpush1.msra.mxu0 0.0
    %1784 = vmatprep.subr.mxu0 0.0
    %1785 = vmatpush1.msra.mxu0 0.0
    %1786 = vmatprep.subr.mxu0 0.0
    %1787 = vmatpush1.msra.mxu0 0.0
    %1788 = vmatprep.subr.mxu0 0.0
    %1789 = vmatpush1.msra.mxu0 0.0
    %1790 = vmatprep.subr.mxu0 0.0
    %1791 = vmatpush1.msra.mxu0 0.0
    %1792 = vmatprep.subr.mxu0 0.0
    %v1793 = vand.u32 %v1460, 4294901760
    %v1794 = vsub.f32 %v1460, %v1793
    %v1795 = vand.u32 %v1794, 4294901760
    %1796 = vmatpush1.msra.mxu0 %v1795
    %1797 = vmatprep.subr.mxu0 0.0
    %1798 = vmatpush2.msra.mxu0 0.0
    %1799 = vmatprep.subr.mxu0 0.0
    %1800 = vmatpush2.msra.mxu0 0.0
    %1801 = vmatprep.subr.mxu0 0.0
    %1802 = vmatpush2.msra.mxu0 0.0
    %1803 = vmatprep.subr.mxu0 0.0
    %1804 = vmatpush2.msra.mxu0 0.0
    %1805 = vmatprep.subr.mxu0 0.0
    %1806 = vmatpush2.msra.mxu0 0.0
    %1807 = vmatprep.subr.mxu0 0.0
    %1808 = vmatpush2.msra.mxu0 0.0
    %1809 = vmatprep.subr.mxu0 0.0
    %1810 = vmatpush2.msra.mxu0 0.0
    %1811 = vmatprep.subr.mxu0 0.0
    %1812 = vmatpush2.msra.mxu0 0.0
    %1813 = vmatprep.subr.mxu0 0.0
    %1814 = vmatpush2.msra.mxu0 0.0
    %1815 = vmatprep.subr.mxu0 0.0
    %1816 = vmatpush2.msra.mxu0 0.0
    %1817 = vmatprep.subr.mxu0 0.0
    %1818 = vmatpush2.msra.mxu0 0.0
    %1819 = vmatprep.subr.mxu0 0.0
    %1820 = vmatpush2.msra.mxu0 0.0
    %1821 = vmatprep.subr.mxu0 0.0
    %1822 = vmatpush2.msra.mxu0 0.0
    %1823 = vmatprep.subr.mxu0 0.0
    %1824 = vmatpush2.msra.mxu0 0.0
    %1825 = vmatprep.subr.mxu0 0.0
    %1826 = vmatpush2.msra.mxu0 0.0
    %1827 = vmatprep.subr.mxu0 0.0
    %1828 = vmatpush2.msra.mxu0 0.0
    %1829 = vmatprep.mubr.f32.mxu0 0.0
    %v1830 = vand.u32 %v1456, 4294901760
    %1831 = vmatmul.mubr.f32.gmra.mxu0 %v1830
    %v1832 = vpop.f32.mrf.mxu0
    %v1833 = vadd.f32 %v1759, %v1832
    %v1834 = vpop.f32.mrf.mxu0
    %1835 = vdwg.mxu0
    %1836 = vmatprep.subr.mxu0 0.0
    %1837 = vmatpush1.msra.mxu0 0.0
    %1838 = vmatprep.subr.mxu0 0.0
    %1839 = vmatpush1.msra.mxu0 0.0
    %1840 = vmatprep.subr.mxu0 0.0
    %1841 = vmatpush1.msra.mxu0 0.0
    %1842 = vmatprep.subr.mxu0 0.0
    %1843 = vmatpush1.msra.mxu0 0.0
    %1844 = vmatprep.subr.mxu0 0.0
    %1845 = vmatpush1.msra.mxu0 0.0
    %1846 = vmatprep.subr.mxu0 0.0
    %1847 = vmatpush1.msra.mxu0 0.0
    %1848 = vmatprep.subr.mxu0 0.0
    %1849 = vmatpush1.msra.mxu0 0.0
    %1850 = vmatprep.subr.mxu0 0.0
    %1851 = vmatpush1.msra.mxu0 0.0
    %1852 = vmatprep.subr.mxu0 0.0
    %1853 = vmatpush1.msra.mxu0 0.0
    %1854 = vmatprep.subr.mxu0 0.0
    %1855 = vmatpush1.msra.mxu0 0.0
    %1856 = vmatprep.subr.mxu0 0.0
    %1857 = vmatpush1.msra.mxu0 0.0
    %1858 = vmatprep.subr.mxu0 0.0
    %1859 = vmatpush1.msra.mxu0 0.0
    %1860 = vmatprep.subr.mxu0 0.0
    %1861 = vmatpush1.msra.mxu0 0.0
    %1862 = vmatprep.subr.mxu0 0.0
    %1863 = vmatpush1.msra.mxu0 0.0
    %1864 = vmatprep.subr.mxu0 0.0
    %1865 = vmatpush1.msra.mxu0 0.0
    %1866 = vmatprep.subr.mxu0 0.0
    %v1867 = vand.u32 %v1460, 4294901760
    %1868 = vmatpush1.msra.mxu0 %v1867
    %1869 = vmatprep.subr.mxu0 0.0
    %1870 = vmatpush2.msra.mxu0 0.0
    %1871 = vmatprep.subr.mxu0 0.0
    %1872 = vmatpush2.msra.mxu0 0.0
    %1873 = vmatprep.subr.mxu0 0.0
    %1874 = vmatpush2.msra.mxu0 0.0
    %1875 = vmatprep.subr.mxu0 0.0
    %1876 = vmatpush2.msra.mxu0 0.0
    %1877 = vmatprep.subr.mxu0 0.0
    %1878 = vmatpush2.msra.mxu0 0.0
    %1879 = vmatprep.subr.mxu0 0.0
    %1880 = vmatpush2.msra.mxu0 0.0
    %1881 = vmatprep.subr.mxu0 0.0
    %1882 = vmatpush2.msra.mxu0 0.0
    %1883 = vmatprep.subr.mxu0 0.0
    %1884 = vmatpush2.msra.mxu0 0.0
    %1885 = vmatprep.subr.mxu0 0.0
    %1886 = vmatpush2.msra.mxu0 0.0
    %1887 = vmatprep.subr.mxu0 0.0
    %1888 = vmatpush2.msra.mxu0 0.0
    %1889 = vmatprep.subr.mxu0 0.0
    %1890 = vmatpush2.msra.mxu0 0.0
    %1891 = vmatprep.subr.mxu0 0.0
    %1892 = vmatpush2.msra.mxu0 0.0
    %1893 = vmatprep.subr.mxu0 0.0
    %1894 = vmatpush2.msra.mxu0 0.0
    %1895 = vmatprep.subr.mxu0 0.0
    %1896 = vmatpush2.msra.mxu0 0.0
    %1897 = vmatprep.subr.mxu0 0.0
    %1898 = vmatpush2.msra.mxu0 0.0
    %1899 = vmatprep.subr.mxu0 0.0
    %1900 = vmatpush2.msra.mxu0 0.0
    %1901 = vmatprep.mubr.f32.mxu0 0.0
    %v1902 = vand.u32 %v1456, 4294901760
    %1903 = vmatmul.mubr.f32.gmra.mxu0 %v1902
    %v1904 = vpop.f32.mrf.mxu0
    %v1905 = vadd.f32 %v1833, %v1904
    %v1906 = vpop.f32.mrf.mxu0
    %1907 = vdwg.mxu0
    %v1908 = vtanh.pop %v1905
    %v1909 = vld [vmem:[#allocation2 + $0x40] sm:$0x7]
    %v1910 = vld [vmem:[#allocation2 + $0x43] sm:$0x1]
    %v1911 = vlaneseq
    %v1912 = vshrl.u32 %v1911, 7
    %v1913 = vsub.s32 0, %v1912
    %v1914 = vrot.slane %v1910, %v1913
    %v1916 = vsel %vm33, %v1908, 0
    %v1919 = vsel %vm37, %v1909, 0
    %1921 = vmatprep.subr.mxu0 0.0
    %1922 = vmatpush1.msra.mxu0 0.0
    %1923 = vmatprep.subr.mxu0 0.0
    %1924 = vmatpush1.msra.mxu0 0.0
    %1925 = vmatprep.subr.mxu0 0.0
    %1926 = vmatpush1.msra.mxu0 0.0
    %1927 = vmatprep.subr.mxu0 0.0
    %1928 = vmatpush1.msra.mxu0 0.0
    %1929 = vmatprep.subr.mxu0 0.0
    %1930 = vmatpush1.msra.mxu0 0.0
    %1931 = vmatprep.subr.mxu0 0.0
    %1932 = vmatpush1.msra.mxu0 0.0
    %1933 = vmatprep.subr.mxu0 0.0
    %1934 = vmatpush1.msra.mxu0 0.0
    %1935 = vmatprep.subr.mxu0 0.0
    %1936 = vmatpush1.msra.mxu0 0.0
    %1937 = vmatprep.subr.mxu0 0.0
    %1938 = vmatpush1.msra.mxu0 0.0
    %1939 = vmatprep.subr.mxu0 0.0
    %1940 = vmatpush1.msra.mxu0 0.0
    %1941 = vmatprep.subr.mxu0 0.0
    %1942 = vmatpush1.msra.mxu0 0.0
    %1943 = vmatprep.subr.mxu0 0.0
    %1944 = vmatpush1.msra.mxu0 0.0
    %1945 = vmatprep.subr.mxu0 0.0
    %1946 = vmatpush1.msra.mxu0 0.0
    %1947 = vmatprep.subr.mxu0 0.0
    %1948 = vmatpush1.msra.mxu0 0.0
    %1949 = vmatprep.subr.mxu0 0.0
    %1950 = vmatpush1.msra.mxu0 0.0
    %1951 = vmatprep.subr.mxu0 0.0
    %v1952 = vand.u32 %v1919, 4294901760
    %1953 = vmatpush1.msra.mxu0 %v1952
    %1954 = vmatprep.subr.mxu0 0.0
    %1955 = vmatpush2.msra.mxu0 0.0
    %1956 = vmatprep.subr.mxu0 0.0
    %1957 = vmatpush2.msra.mxu0 0.0
    %1958 = vmatprep.subr.mxu0 0.0
    %1959 = vmatpush2.msra.mxu0 0.0
    %1960 = vmatprep.subr.mxu0 0.0
    %1961 = vmatpush2.msra.mxu0 0.0
    %1962 = vmatprep.subr.mxu0 0.0
    %1963 = vmatpush2.msra.mxu0 0.0
    %1964 = vmatprep.subr.mxu0 0.0
    %1965 = vmatpush2.msra.mxu0 0.0
    %1966 = vmatprep.subr.mxu0 0.0
    %1967 = vmatpush2.msra.mxu0 0.0
    %1968 = vmatprep.subr.mxu0 0.0
    %1969 = vmatpush2.msra.mxu0 0.0
    %1970 = vmatprep.subr.mxu0 0.0
    %1971 = vmatpush2.msra.mxu0 0.0
    %1972 = vmatprep.subr.mxu0 0.0
    %1973 = vmatpush2.msra.mxu0 0.0
    %1974 = vmatprep.subr.mxu0 0.0
    %1975 = vmatpush2.msra.mxu0 0.0
    %1976 = vmatprep.subr.mxu0 0.0
    %1977 = vmatpush2.msra.mxu0 0.0
    %1978 = vmatprep.subr.mxu0 0.0
    %1979 = vmatpush2.msra.mxu0 0.0
    %1980 = vmatprep.subr.mxu0 0.0
    %1981 = vmatpush2.msra.mxu0 0.0
    %1982 = vmatprep.subr.mxu0 0.0
    %1983 = vmatpush2.msra.mxu0 0.0
    %1984 = vmatprep.subr.mxu0 0.0
    %1985 = vmatpush2.msra.mxu0 0.0
    %1986 = vmatprep.mubr.f32.mxu0 0.0
    %v1987 = vand.u32 %v1916, 4294901760
    %v1988 = vsub.f32 %v1916, %v1987
    %v1989 = vand.u32 %v1988, 4294901760
    %v1990 = vsub.f32 %v1988, %v1989
    %v1991 = vand.u32 %v1990, 4294901760
    %1992 = vmatmul.mubr.f32.gmra.mxu0 %v1991
    %v1993 = vpop.f32.mrf.mxu0
    %v1994 = vadd.f32 %v1914, %v1993
    %v1995 = vpop.f32.mrf.mxu0
    %1996 = vdwg.mxu0
    %1997 = vmatprep.subr.mxu0 0.0
    %1998 = vmatpush1.msra.mxu0 0.0
    %1999 = vmatprep.subr.mxu0 0.0
    %2000 = vmatpush1.msra.mxu0 0.0
    %2001 = vmatprep.subr.mxu0 0.0
    %2002 = vmatpush1.msra.mxu0 0.0
    %2003 = vmatprep.subr.mxu0 0.0
    %2004 = vmatpush1.msra.mxu0 0.0
    %2005 = vmatprep.subr.mxu0 0.0
    %2006 = vmatpush1.msra.mxu0 0.0
    %2007 = vmatprep.subr.mxu0 0.0
    %2008 = vmatpush1.msra.mxu0 0.0
    %2009 = vmatprep.subr.mxu0 0.0
    %2010 = vmatpush1.msra.mxu0 0.0
    %2011 = vmatprep.subr.mxu0 0.0
    %2012 = vmatpush1.msra.mxu0 0.0
    %2013 = vmatprep.subr.mxu0 0.0
    %2014 = vmatpush1.msra.mxu0 0.0
    %2015 = vmatprep.subr.mxu0 0.0
    %2016 = vmatpush1.msra.mxu0 0.0
    %2017 = vmatprep.subr.mxu0 0.0
    %2018 = vmatpush1.msra.mxu0 0.0
    %2019 = vmatprep.subr.mxu0 0.0
    %2020 = vmatpush1.msra.mxu0 0.0
    %2021 = vmatprep.subr.mxu0 0.0
    %2022 = vmatpush1.msra.mxu0 0.0
    %2023 = vmatprep.subr.mxu0 0.0
    %2024 = vmatpush1.msra.mxu0 0.0
    %2025 = vmatprep.subr.mxu0 0.0
    %2026 = vmatpush1.msra.mxu0 0.0
    %2027 = vmatprep.subr.mxu0 0.0
    %v2028 = vand.u32 %v1919, 4294901760
    %v2029 = vsub.f32 %v1919, %v2028
    %v2030 = vand.u32 %v2029, 4294901760
    %v2031 = vsub.f32 %v2029, %v2030
    %v2032 = vand.u32 %v2031, 4294901760
    %2033 = vmatpush1.msra.mxu0 %v2032
    %2034 = vmatprep.subr.mxu0 0.0
    %2035 = vmatpush2.msra.mxu0 0.0
    %2036 = vmatprep.subr.mxu0 0.0
    %2037 = vmatpush2.msra.mxu0 0.0
    %2038 = vmatprep.subr.mxu0 0.0
    %2039 = vmatpush2.msra.mxu0 0.0
    %2040 = vmatprep.subr.mxu0 0.0
    %2041 = vmatpush2.msra.mxu0 0.0
    %2042 = vmatprep.subr.mxu0 0.0
    %2043 = vmatpush2.msra.mxu0 0.0
    %2044 = vmatprep.subr.mxu0 0.0
    %2045 = vmatpush2.msra.mxu0 0.0
    %2046 = vmatprep.subr.mxu0 0.0
    %2047 = vmatpush2.msra.mxu0 0.0
    %2048 = vmatprep.subr.mxu0 0.0
    %2049 = vmatpush2.msra.mxu0 0.0
    %2050 = vmatprep.subr.mxu0 0.0
    %2051 = vmatpush2.msra.mxu0 0.0
    %2052 = vmatprep.subr.mxu0 0.0
    %2053 = vmatpush2.msra.mxu0 0.0
    %2054 = vmatprep.subr.mxu0 0.0
    %2055 = vmatpush2.msra.mxu0 0.0
    %2056 = vmatprep.subr.mxu0 0.0
    %2057 = vmatpush2.msra.mxu0 0.0
    %2058 = vmatprep.subr.mxu0 0.0
    %2059 = vmatpush2.msra.mxu0 0.0
    %2060 = vmatprep.subr.mxu0 0.0
    %2061 = vmatpush2.msra.mxu0 0.0
    %2062 = vmatprep.subr.mxu0 0.0
    %2063 = vmatpush2.msra.mxu0 0.0
    %2064 = vmatprep.subr.mxu0 0.0
    %2065 = vmatpush2.msra.mxu0 0.0
    %2066 = vmatprep.mubr.f32.mxu0 0.0
    %v2067 = vand.u32 %v1916, 4294901760
    %2068 = vmatmul.mubr.f32.gmra.mxu0 %v2067
    %v2069 = vpop.f32.mrf.mxu0
    %v2070 = vadd.f32 %v1994, %v2069
    %v2071 = vpop.f32.mrf.mxu0
    %2072 = vdwg.mxu0
    %2073 = vmatprep.subr.mxu0 0.0
    %2074 = vmatpush1.msra.mxu0 0.0
    %2075 = vmatprep.subr.mxu0 0.0
    %2076 = vmatpush1.msra.mxu0 0.0
    %2077 = vmatprep.subr.mxu0 0.0
    %2078 = vmatpush1.msra.mxu0 0.0
    %2079 = vmatprep.subr.mxu0 0.0
    %2080 = vmatpush1.msra.mxu0 0.0
    %2081 = vmatprep.subr.mxu0 0.0
    %2082 = vmatpush1.msra.mxu0 0.0
    %2083 = vmatprep.subr.mxu0 0.0
    %2084 = vmatpush1.msra.mxu0 0.0
    %2085 = vmatprep.subr.mxu0 0.0
    %2086 = vmatpush1.msra.mxu0 0.0
    %2087 = vmatprep.subr.mxu0 0.0
    %2088 = vmatpush1.msra.mxu0 0.0
    %2089 = vmatprep.subr.mxu0 0.0
    %2090 = vmatpush1.msra.mxu0 0.0
    %2091 = vmatprep.subr.mxu0 0.0
    %2092 = vmatpush1.msra.mxu0 0.0
    %2093 = vmatprep.subr.mxu0 0.0
    %2094 = vmatpush1.msra.mxu0 0.0
    %2095 = vmatprep.subr.mxu0 0.0
    %2096 = vmatpush1.msra.mxu0 0.0
    %2097 = vmatprep.subr.mxu0 0.0
    %2098 = vmatpush1.msra.mxu0 0.0
    %2099 = vmatprep.subr.mxu0 0.0
    %2100 = vmatpush1.msra.mxu0 0.0
    %2101 = vmatprep.subr.mxu0 0.0
    %2102 = vmatpush1.msra.mxu0 0.0
    %2103 = vmatprep.subr.mxu0 0.0
    %v2104 = vand.u32 %v1919, 4294901760
    %v2105 = vsub.f32 %v1919, %v2104
    %2106 = vmatpush1.msra.mxu0 %v2105
    %2107 = vmatprep.subr.mxu0 0.0
    %2108 = vmatpush2.msra.mxu0 0.0
    %2109 = vmatprep.subr.mxu0 0.0
    %2110 = vmatpush2.msra.mxu0 0.0
    %2111 = vmatprep.subr.mxu0 0.0
    %2112 = vmatpush2.msra.mxu0 0.0
    %2113 = vmatprep.subr.mxu0 0.0
    %2114 = vmatpush2.msra.mxu0 0.0
    %2115 = vmatprep.subr.mxu0 0.0
    %2116 = vmatpush2.msra.mxu0 0.0
    %2117 = vmatprep.subr.mxu0 0.0
    %2118 = vmatpush2.msra.mxu0 0.0
    %2119 = vmatprep.subr.mxu0 0.0
    %2120 = vmatpush2.msra.mxu0 0.0
    %2121 = vmatprep.subr.mxu0 0.0
    %2122 = vmatpush2.msra.mxu0 0.0
    %2123 = vmatprep.subr.mxu0 0.0
    %2124 = vmatpush2.msra.mxu0 0.0
    %2125 = vmatprep.subr.mxu0 0.0
    %2126 = vmatpush2.msra.mxu0 0.0
    %2127 = vmatprep.subr.mxu0 0.0
    %2128 = vmatpush2.msra.mxu0 0.0
    %2129 = vmatprep.subr.mxu0 0.0
    %2130 = vmatpush2.msra.mxu0 0.0
    %2131 = vmatprep.subr.mxu0 0.0
    %2132 = vmatpush2.msra.mxu0 0.0
    %2133 = vmatprep.subr.mxu0 0.0
    %2134 = vmatpush2.msra.mxu0 0.0
    %2135 = vmatprep.subr.mxu0 0.0
    %2136 = vmatpush2.msra.mxu0 0.0
    %2137 = vmatprep.subr.mxu0 0.0
    %2138 = vmatpush2.msra.mxu0 0.0
    %2139 = vmatprep.mubr.f32.mxu0 0.0
    %v2140 = vand.u32 %v1916, 4294901760
    %v2141 = vsub.f32 %v1916, %v2140
    %2142 = vmatmul.mubr.f32.gmra.mxu0 %v2141
    %v2143 = vpop.f32.mrf.mxu0
    %v2144 = vadd.f32 %v2070, %v2143
    %v2145 = vpop.f32.mrf.mxu0
    %2146 = vdwg.mxu0
    %2147 = vmatprep.subr.mxu0 0.0
    %2148 = vmatpush1.msra.mxu0 0.0
    %2149 = vmatprep.subr.mxu0 0.0
    %2150 = vmatpush1.msra.mxu0 0.0
    %2151 = vmatprep.subr.mxu0 0.0
    %2152 = vmatpush1.msra.mxu0 0.0
    %2153 = vmatprep.subr.mxu0 0.0
    %2154 = vmatpush1.msra.mxu0 0.0
    %2155 = vmatprep.subr.mxu0 0.0
    %2156 = vmatpush1.msra.mxu0 0.0
    %2157 = vmatprep.subr.mxu0 0.0
    %2158 = vmatpush1.msra.mxu0 0.0
    %2159 = vmatprep.subr.mxu0 0.0
    %2160 = vmatpush1.msra.mxu0 0.0
    %2161 = vmatprep.subr.mxu0 0.0
    %2162 = vmatpush1.msra.mxu0 0.0
    %2163 = vmatprep.subr.mxu0 0.0
    %2164 = vmatpush1.msra.mxu0 0.0
    %2165 = vmatprep.subr.mxu0 0.0
    %2166 = vmatpush1.msra.mxu0 0.0
    %2167 = vmatprep.subr.mxu0 0.0
    %2168 = vmatpush1.msra.mxu0 0.0
    %2169 = vmatprep.subr.mxu0 0.0
    %2170 = vmatpush1.msra.mxu0 0.0
    %2171 = vmatprep.subr.mxu0 0.0
    %2172 = vmatpush1.msra.mxu0 0.0
    %2173 = vmatprep.subr.mxu0 0.0
    %2174 = vmatpush1.msra.mxu0 0.0
    %2175 = vmatprep.subr.mxu0 0.0
    %2176 = vmatpush1.msra.mxu0 0.0
    %2177 = vmatprep.subr.mxu0 0.0
    %v2178 = vand.u32 %v1919, 4294901760
    %2179 = vmatpush1.msra.mxu0 %v2178
    %2180 = vmatprep.subr.mxu0 0.0
    %2181 = vmatpush2.msra.mxu0 0.0
    %2182 = vmatprep.subr.mxu0 0.0
    %2183 = vmatpush2.msra.mxu0 0.0
    %2184 = vmatprep.subr.mxu0 0.0
    %2185 = vmatpush2.msra.mxu0 0.0
    %2186 = vmatprep.subr.mxu0 0.0
    %2187 = vmatpush2.msra.mxu0 0.0
    %2188 = vmatprep.subr.mxu0 0.0
    %2189 = vmatpush2.msra.mxu0 0.0
    %2190 = vmatprep.subr.mxu0 0.0
    %2191 = vmatpush2.msra.mxu0 0.0
    %2192 = vmatprep.subr.mxu0 0.0
    %2193 = vmatpush2.msra.mxu0 0.0
    %2194 = vmatprep.subr.mxu0 0.0
    %2195 = vmatpush2.msra.mxu0 0.0
    %2196 = vmatprep.subr.mxu0 0.0
    %2197 = vmatpush2.msra.mxu0 0.0
    %2198 = vmatprep.subr.mxu0 0.0
    %2199 = vmatpush2.msra.mxu0 0.0
    %2200 = vmatprep.subr.mxu0 0.0
    %2201 = vmatpush2.msra.mxu0 0.0
    %2202 = vmatprep.subr.mxu0 0.0
    %2203 = vmatpush2.msra.mxu0 0.0
    %2204 = vmatprep.subr.mxu0 0.0
    %2205 = vmatpush2.msra.mxu0 0.0
    %2206 = vmatprep.subr.mxu0 0.0
    %2207 = vmatpush2.msra.mxu0 0.0
    %2208 = vmatprep.subr.mxu0 0.0
    %2209 = vmatpush2.msra.mxu0 0.0
    %2210 = vmatprep.subr.mxu0 0.0
    %2211 = vmatpush2.msra.mxu0 0.0
    %2212 = vmatprep.mubr.f32.mxu0 0.0
    %v2213 = vand.u32 %v1916, 4294901760
    %v2214 = vsub.f32 %v1916, %v2213
    %v2215 = vand.u32 %v2214, 4294901760
    %2216 = vmatmul.mubr.f32.gmra.mxu0 %v2215
    %v2217 = vpop.f32.mrf.mxu0
    %v2218 = vadd.f32 %v2144, %v2217
    %v2219 = vpop.f32.mrf.mxu0
    %2220 = vdwg.mxu0
    %2221 = vmatprep.subr.mxu0 0.0
    %2222 = vmatpush1.msra.mxu0 0.0
    %2223 = vmatprep.subr.mxu0 0.0
    %2224 = vmatpush1.msra.mxu0 0.0
    %2225 = vmatprep.subr.mxu0 0.0
    %2226 = vmatpush1.msra.mxu0 0.0
    %2227 = vmatprep.subr.mxu0 0.0
    %2228 = vmatpush1.msra.mxu0 0.0
    %2229 = vmatprep.subr.mxu0 0.0
    %2230 = vmatpush1.msra.mxu0 0.0
    %2231 = vmatprep.subr.mxu0 0.0
    %2232 = vmatpush1.msra.mxu0 0.0
    %2233 = vmatprep.subr.mxu0 0.0
    %2234 = vmatpush1.msra.mxu0 0.0
    %2235 = vmatprep.subr.mxu0 0.0
    %2236 = vmatpush1.msra.mxu0 0.0
    %2237 = vmatprep.subr.mxu0 0.0
    %2238 = vmatpush1.msra.mxu0 0.0
    %2239 = vmatprep.subr.mxu0 0.0
    %2240 = vmatpush1.msra.mxu0 0.0
    %2241 = vmatprep.subr.mxu0 0.0
    %2242 = vmatpush1.msra.mxu0 0.0
    %2243 = vmatprep.subr.mxu0 0.0
    %2244 = vmatpush1.msra.mxu0 0.0
    %2245 = vmatprep.subr.mxu0 0.0
    %2246 = vmatpush1.msra.mxu0 0.0
    %2247 = vmatprep.subr.mxu0 0.0
    %2248 = vmatpush1.msra.mxu0 0.0
    %2249 = vmatprep.subr.mxu0 0.0
    %2250 = vmatpush1.msra.mxu0 0.0
    %2251 = vmatprep.subr.mxu0 0.0
    %v2252 = vand.u32 %v1919, 4294901760
    %v2253 = vsub.f32 %v1919, %v2252
    %v2254 = vand.u32 %v2253, 4294901760
    %2255 = vmatpush1.msra.mxu0 %v2254
    %2256 = vmatprep.subr.mxu0 0.0
    %2257 = vmatpush2.msra.mxu0 0.0
    %2258 = vmatprep.subr.mxu0 0.0
    %2259 = vmatpush2.msra.mxu0 0.0
    %2260 = vmatprep.subr.mxu0 0.0
    %2261 = vmatpush2.msra.mxu0 0.0
    %2262 = vmatprep.subr.mxu0 0.0
    %2263 = vmatpush2.msra.mxu0 0.0
    %2264 = vmatprep.subr.mxu0 0.0
    %2265 = vmatpush2.msra.mxu0 0.0
    %2266 = vmatprep.subr.mxu0 0.0
    %2267 = vmatpush2.msra.mxu0 0.0
    %2268 = vmatprep.subr.mxu0 0.0
    %2269 = vmatpush2.msra.mxu0 0.0
    %2270 = vmatprep.subr.mxu0 0.0
    %2271 = vmatpush2.msra.mxu0 0.0
    %2272 = vmatprep.subr.mxu0 0.0
    %2273 = vmatpush2.msra.mxu0 0.0
    %2274 = vmatprep.subr.mxu0 0.0
    %2275 = vmatpush2.msra.mxu0 0.0
    %2276 = vmatprep.subr.mxu0 0.0
    %2277 = vmatpush2.msra.mxu0 0.0
    %2278 = vmatprep.subr.mxu0 0.0
    %2279 = vmatpush2.msra.mxu0 0.0
    %2280 = vmatprep.subr.mxu0 0.0
    %2281 = vmatpush2.msra.mxu0 0.0
    %2282 = vmatprep.subr.mxu0 0.0
    %2283 = vmatpush2.msra.mxu0 0.0
    %2284 = vmatprep.subr.mxu0 0.0
    %2285 = vmatpush2.msra.mxu0 0.0
    %2286 = vmatprep.subr.mxu0 0.0
    %2287 = vmatpush2.msra.mxu0 0.0
    %2288 = vmatprep.mubr.f32.mxu0 0.0
    %v2289 = vand.u32 %v1916, 4294901760
    %2290 = vmatmul.mubr.f32.gmra.mxu0 %v2289
    %v2291 = vpop.f32.mrf.mxu0
    %v2292 = vadd.f32 %v2218, %v2291
    %v2293 = vpop.f32.mrf.mxu0
    %2294 = vdwg.mxu0
    %2295 = vmatprep.subr.mxu0 0.0
    %2296 = vmatpush1.msra.mxu0 0.0
    %2297 = vmatprep.subr.mxu0 0.0
    %2298 = vmatpush1.msra.mxu0 0.0
    %2299 = vmatprep.subr.mxu0 0.0
    %2300 = vmatpush1.msra.mxu0 0.0
    %2301 = vmatprep.subr.mxu0 0.0
    %2302 = vmatpush1.msra.mxu0 0.0
    %2303 = vmatprep.subr.mxu0 0.0
    %2304 = vmatpush1.msra.mxu0 0.0
    %2305 = vmatprep.subr.mxu0 0.0
    %2306 = vmatpush1.msra.mxu0 0.0
    %2307 = vmatprep.subr.mxu0 0.0
    %2308 = vmatpush1.msra.mxu0 0.0
    %2309 = vmatprep.subr.mxu0 0.0
    %2310 = vmatpush1.msra.mxu0 0.0
    %2311 = vmatprep.subr.mxu0 0.0
    %2312 = vmatpush1.msra.mxu0 0.0
    %2313 = vmatprep.subr.mxu0 0.0
    %2314 = vmatpush1.msra.mxu0 0.0
    %2315 = vmatprep.subr.mxu0 0.0
    %2316 = vmatpush1.msra.mxu0 0.0
    %2317 = vmatprep.subr.mxu0 0.0
    %2318 = vmatpush1.msra.mxu0 0.0
    %2319 = vmatprep.subr.mxu0 0.0
    %2320 = vmatpush1.msra.mxu0 0.0
    %2321 = vmatprep.subr.mxu0 0.0
    %2322 = vmatpush1.msra.mxu0 0.0
    %2323 = vmatprep.subr.mxu0 0.0
    %2324 = vmatpush1.msra.mxu0 0.0
    %2325 = vmatprep.subr.mxu0 0.0
    %v2326 = vand.u32 %v1919, 4294901760
    %2327 = vmatpush1.msra.mxu0 %v2326
    %2328 = vmatprep.subr.mxu0 0.0
    %2329 = vmatpush2.msra.mxu0 0.0
    %2330 = vmatprep.subr.mxu0 0.0
    %2331 = vmatpush2.msra.mxu0 0.0
    %2332 = vmatprep.subr.mxu0 0.0
    %2333 = vmatpush2.msra.mxu0 0.0
    %2334 = vmatprep.subr.mxu0 0.0
    %2335 = vmatpush2.msra.mxu0 0.0
    %2336 = vmatprep.subr.mxu0 0.0
    %2337 = vmatpush2.msra.mxu0 0.0
    %2338 = vmatprep.subr.mxu0 0.0
    %2339 = vmatpush2.msra.mxu0 0.0
    %2340 = vmatprep.subr.mxu0 0.0
    %2341 = vmatpush2.msra.mxu0 0.0
    %2342 = vmatprep.subr.mxu0 0.0
    %2343 = vmatpush2.msra.mxu0 0.0
    %2344 = vmatprep.subr.mxu0 0.0
    %2345 = vmatpush2.msra.mxu0 0.0
    %2346 = vmatprep.subr.mxu0 0.0
    %2347 = vmatpush2.msra.mxu0 0.0
    %2348 = vmatprep.subr.mxu0 0.0
    %2349 = vmatpush2.msra.mxu0 0.0
    %2350 = vmatprep.subr.mxu0 0.0
    %2351 = vmatpush2.msra.mxu0 0.0
    %2352 = vmatprep.subr.mxu0 0.0
    %2353 = vmatpush2.msra.mxu0 0.0
    %2354 = vmatprep.subr.mxu0 0.0
    %2355 = vmatpush2.msra.mxu0 0.0
    %2356 = vmatprep.subr.mxu0 0.0
    %2357 = vmatpush2.msra.mxu0 0.0
    %2358 = vmatprep.subr.mxu0 0.0
    %2359 = vmatpush2.msra.mxu0 0.0
    %2360 = vmatprep.mubr.f32.mxu0 0.0
    %v2361 = vand.u32 %v1916, 4294901760
    %2362 = vmatmul.mubr.f32.gmra.mxu0 %v2361
    %v2363 = vpop.f32.mrf.mxu0
    %v2364 = vadd.f32 %v2292, %v2363
    %v2365 = vpop.f32.mrf.mxu0
    %2366 = vdwg.mxu0
    %v2367 = vld [vmem:[#allocation2 + $0x48] sm:$0x7]
    %v2368 = vld [vmem:[#allocation2 + $0x4b] sm:$0x1]
    %v2369 = vlaneseq
    %v2370 = vshrl.u32 %v2369, 7
    %v2371 = vsub.s32 0, %v2370
    %v2372 = vrot.slane %v2368, %v2371
    %v2374 = vsel %vm37, %v2367, 0
    %2376 = vmatprep.subr.mxu0 0.0
    %2377 = vmatpush1.msra.mxu0 0.0
    %2378 = vmatprep.subr.mxu0 0.0
    %2379 = vmatpush1.msra.mxu0 0.0
    %2380 = vmatprep.subr.mxu0 0.0
    %2381 = vmatpush1.msra.mxu0 0.0
    %2382 = vmatprep.subr.mxu0 0.0
    %2383 = vmatpush1.msra.mxu0 0.0
    %2384 = vmatprep.subr.mxu0 0.0
    %2385 = vmatpush1.msra.mxu0 0.0
    %2386 = vmatprep.subr.mxu0 0.0
    %2387 = vmatpush1.msra.mxu0 0.0
    %2388 = vmatprep.subr.mxu0 0.0
    %2389 = vmatpush1.msra.mxu0 0.0
    %2390 = vmatprep.subr.mxu0 0.0
    %2391 = vmatpush1.msra.mxu0 0.0
    %2392 = vmatprep.subr.mxu0 0.0
    %2393 = vmatpush1.msra.mxu0 0.0
    %2394 = vmatprep.subr.mxu0 0.0
    %2395 = vmatpush1.msra.mxu0 0.0
    %2396 = vmatprep.subr.mxu0 0.0
    %2397 = vmatpush1.msra.mxu0 0.0
    %2398 = vmatprep.subr.mxu0 0.0
    %2399 = vmatpush1.msra.mxu0 0.0
    %2400 = vmatprep.subr.mxu0 0.0
    %2401 = vmatpush1.msra.mxu0 0.0
    %2402 = vmatprep.subr.mxu0 0.0
    %2403 = vmatpush1.msra.mxu0 0.0
    %2404 = vmatprep.subr.mxu0 0.0
    %2405 = vmatpush1.msra.mxu0 0.0
    %2406 = vmatprep.subr.mxu0 0.0
    %v2407 = vand.u32 %v2374, 4294901760
    %2408 = vmatpush1.msra.mxu0 %v2407
    %2409 = vmatprep.subr.mxu0 0.0
    %2410 = vmatpush2.msra.mxu0 0.0
    %2411 = vmatprep.subr.mxu0 0.0
    %2412 = vmatpush2.msra.mxu0 0.0
    %2413 = vmatprep.subr.mxu0 0.0
    %2414 = vmatpush2.msra.mxu0 0.0
    %2415 = vmatprep.subr.mxu0 0.0
    %2416 = vmatpush2.msra.mxu0 0.0
    %2417 = vmatprep.subr.mxu0 0.0
    %2418 = vmatpush2.msra.mxu0 0.0
    %2419 = vmatprep.subr.mxu0 0.0
    %2420 = vmatpush2.msra.mxu0 0.0
    %2421 = vmatprep.subr.mxu0 0.0
    %2422 = vmatpush2.msra.mxu0 0.0
    %2423 = vmatprep.subr.mxu0 0.0
    %2424 = vmatpush2.msra.mxu0 0.0
    %2425 = vmatprep.subr.mxu0 0.0
    %2426 = vmatpush2.msra.mxu0 0.0
    %2427 = vmatprep.subr.mxu0 0.0
    %2428 = vmatpush2.msra.mxu0 0.0
    %2429 = vmatprep.subr.mxu0 0.0
    %2430 = vmatpush2.msra.mxu0 0.0
    %2431 = vmatprep.subr.mxu0 0.0
    %2432 = vmatpush2.msra.mxu0 0.0
    %2433 = vmatprep.subr.mxu0 0.0
    %2434 = vmatpush2.msra.mxu0 0.0
    %2435 = vmatprep.subr.mxu0 0.0
    %2436 = vmatpush2.msra.mxu0 0.0
    %2437 = vmatprep.subr.mxu0 0.0
    %2438 = vmatpush2.msra.mxu0 0.0
    %2439 = vmatprep.subr.mxu0 0.0
    %2440 = vmatpush2.msra.mxu0 0.0
    %2441 = vmatprep.mubr.f32.mxu0 0.0
    %v2442 = vand.u32 %v1916, 4294901760
    %v2443 = vsub.f32 %v1916, %v2442
    %v2444 = vand.u32 %v2443, 4294901760
    %v2445 = vsub.f32 %v2443, %v2444
    %v2446 = vand.u32 %v2445, 4294901760
    %2447 = vmatmul.mubr.f32.gmra.mxu0 %v2446
    %v2448 = vpop.f32.mrf.mxu0
    %v2449 = vadd.f32 %v2372, %v2448
    %v2450 = vpop.f32.mrf.mxu0
    %2451 = vdwg.mxu0
    %2452 = vmatprep.subr.mxu0 0.0
    %2453 = vmatpush1.msra.mxu0 0.0
    %2454 = vmatprep.subr.mxu0 0.0
    %2455 = vmatpush1.msra.mxu0 0.0
    %2456 = vmatprep.subr.mxu0 0.0
    %2457 = vmatpush1.msra.mxu0 0.0
    %2458 = vmatprep.subr.mxu0 0.0
    %2459 = vmatpush1.msra.mxu0 0.0
    %2460 = vmatprep.subr.mxu0 0.0
    %2461 = vmatpush1.msra.mxu0 0.0
    %2462 = vmatprep.subr.mxu0 0.0
    %2463 = vmatpush1.msra.mxu0 0.0
    %2464 = vmatprep.subr.mxu0 0.0
    %2465 = vmatpush1.msra.mxu0 0.0
    %2466 = vmatprep.subr.mxu0 0.0
    %2467 = vmatpush1.msra.mxu0 0.0
    %2468 = vmatprep.subr.mxu0 0.0
    %2469 = vmatpush1.msra.mxu0 0.0
    %2470 = vmatprep.subr.mxu0 0.0
    %2471 = vmatpush1.msra.mxu0 0.0
    %2472 = vmatprep.subr.mxu0 0.0
    %2473 = vmatpush1.msra.mxu0 0.0
    %2474 = vmatprep.subr.mxu0 0.0
    %2475 = vmatpush1.msra.mxu0 0.0
    %2476 = vmatprep.subr.mxu0 0.0
    %2477 = vmatpush1.msra.mxu0 0.0
    %2478 = vmatprep.subr.mxu0 0.0
    %2479 = vmatpush1.msra.mxu0 0.0
    %2480 = vmatprep.subr.mxu0 0.0
    %2481 = vmatpush1.msra.mxu0 0.0
    %2482 = vmatprep.subr.mxu0 0.0
    %v2483 = vand.u32 %v2374, 4294901760
    %v2484 = vsub.f32 %v2374, %v2483
    %v2485 = vand.u32 %v2484, 4294901760
    %v2486 = vsub.f32 %v2484, %v2485
    %v2487 = vand.u32 %v2486, 4294901760
    %2488 = vmatpush1.msra.mxu0 %v2487
    %2489 = vmatprep.subr.mxu0 0.0
    %2490 = vmatpush2.msra.mxu0 0.0
    %2491 = vmatprep.subr.mxu0 0.0
    %2492 = vmatpush2.msra.mxu0 0.0
    %2493 = vmatprep.subr.mxu0 0.0
    %2494 = vmatpush2.msra.mxu0 0.0
    %2495 = vmatprep.subr.mxu0 0.0
    %2496 = vmatpush2.msra.mxu0 0.0
    %2497 = vmatprep.subr.mxu0 0.0
    %2498 = vmatpush2.msra.mxu0 0.0
    %2499 = vmatprep.subr.mxu0 0.0
    %2500 = vmatpush2.msra.mxu0 0.0
    %2501 = vmatprep.subr.mxu0 0.0
    %2502 = vmatpush2.msra.mxu0 0.0
    %2503 = vmatprep.subr.mxu0 0.0
    %2504 = vmatpush2.msra.mxu0 0.0
    %2505 = vmatprep.subr.mxu0 0.0
    %2506 = vmatpush2.msra.mxu0 0.0
    %2507 = vmatprep.subr.mxu0 0.0
    %2508 = vmatpush2.msra.mxu0 0.0
    %2509 = vmatprep.subr.mxu0 0.0
    %2510 = vmatpush2.msra.mxu0 0.0
    %2511 = vmatprep.subr.mxu0 0.0
    %2512 = vmatpush2.msra.mxu0 0.0
    %2513 = vmatprep.subr.mxu0 0.0
    %2514 = vmatpush2.msra.mxu0 0.0
    %2515 = vmatprep.subr.mxu0 0.0
    %2516 = vmatpush2.msra.mxu0 0.0
    %2517 = vmatprep.subr.mxu0 0.0
    %2518 = vmatpush2.msra.mxu0 0.0
    %2519 = vmatprep.subr.mxu0 0.0
    %2520 = vmatpush2.msra.mxu0 0.0
    %2521 = vmatprep.mubr.f32.mxu0 0.0
    %v2522 = vand.u32 %v1916, 4294901760
    %2523 = vmatmul.mubr.f32.gmra.mxu0 %v2522
    %v2524 = vpop.f32.mrf.mxu0
    %v2525 = vadd.f32 %v2449, %v2524
    %v2526 = vpop.f32.mrf.mxu0
    %2527 = vdwg.mxu0
    %2528 = vmatprep.subr.mxu0 0.0
    %2529 = vmatpush1.msra.mxu0 0.0
    %2530 = vmatprep.subr.mxu0 0.0
    %2531 = vmatpush1.msra.mxu0 0.0
    %2532 = vmatprep.subr.mxu0 0.0
    %2533 = vmatpush1.msra.mxu0 0.0
    %2534 = vmatprep.subr.mxu0 0.0
    %2535 = vmatpush1.msra.mxu0 0.0
    %2536 = vmatprep.subr.mxu0 0.0
    %2537 = vmatpush1.msra.mxu0 0.0
    %2538 = vmatprep.subr.mxu0 0.0
    %2539 = vmatpush1.msra.mxu0 0.0
    %2540 = vmatprep.subr.mxu0 0.0
    %2541 = vmatpush1.msra.mxu0 0.0
    %2542 = vmatprep.subr.mxu0 0.0
    %2543 = vmatpush1.msra.mxu0 0.0
    %2544 = vmatprep.subr.mxu0 0.0
    %2545 = vmatpush1.msra.mxu0 0.0
    %2546 = vmatprep.subr.mxu0 0.0
    %2547 = vmatpush1.msra.mxu0 0.0
    %2548 = vmatprep.subr.mxu0 0.0
    %2549 = vmatpush1.msra.mxu0 0.0
    %2550 = vmatprep.subr.mxu0 0.0
    %2551 = vmatpush1.msra.mxu0 0.0
    %2552 = vmatprep.subr.mxu0 0.0
    %2553 = vmatpush1.msra.mxu0 0.0
    %2554 = vmatprep.subr.mxu0 0.0
    %2555 = vmatpush1.msra.mxu0 0.0
    %2556 = vmatprep.subr.mxu0 0.0
    %2557 = vmatpush1.msra.mxu0 0.0
    %2558 = vmatprep.subr.mxu0 0.0
    %v2559 = vand.u32 %v2374, 4294901760
    %v2560 = vsub.f32 %v2374, %v2559
    %2561 = vmatpush1.msra.mxu0 %v2560
    %2562 = vmatprep.subr.mxu0 0.0
    %2563 = vmatpush2.msra.mxu0 0.0
    %2564 = vmatprep.subr.mxu0 0.0
    %2565 = vmatpush2.msra.mxu0 0.0
    %2566 = vmatprep.subr.mxu0 0.0
    %2567 = vmatpush2.msra.mxu0 0.0
    %2568 = vmatprep.subr.mxu0 0.0
    %2569 = vmatpush2.msra.mxu0 0.0
    %2570 = vmatprep.subr.mxu0 0.0
    %2571 = vmatpush2.msra.mxu0 0.0
    %2572 = vmatprep.subr.mxu0 0.0
    %2573 = vmatpush2.msra.mxu0 0.0
    %2574 = vmatprep.subr.mxu0 0.0
    %2575 = vmatpush2.msra.mxu0 0.0
    %2576 = vmatprep.subr.mxu0 0.0
    %2577 = vmatpush2.msra.mxu0 0.0
    %2578 = vmatprep.subr.mxu0 0.0
    %2579 = vmatpush2.msra.mxu0 0.0
    %2580 = vmatprep.subr.mxu0 0.0
    %2581 = vmatpush2.msra.mxu0 0.0
    %2582 = vmatprep.subr.mxu0 0.0
    %2583 = vmatpush2.msra.mxu0 0.0
    %2584 = vmatprep.subr.mxu0 0.0
    %2585 = vmatpush2.msra.mxu0 0.0
    %2586 = vmatprep.subr.mxu0 0.0
    %2587 = vmatpush2.msra.mxu0 0.0
    %2588 = vmatprep.subr.mxu0 0.0
    %2589 = vmatpush2.msra.mxu0 0.0
    %2590 = vmatprep.subr.mxu0 0.0
    %2591 = vmatpush2.msra.mxu0 0.0
    %2592 = vmatprep.subr.mxu0 0.0
    %2593 = vmatpush2.msra.mxu0 0.0
    %2594 = vmatprep.mubr.f32.mxu0 0.0
    %v2595 = vand.u32 %v1916, 4294901760
    %v2596 = vsub.f32 %v1916, %v2595
    %2597 = vmatmul.mubr.f32.gmra.mxu0 %v2596
    %v2598 = vpop.f32.mrf.mxu0
    %v2599 = vadd.f32 %v2525, %v2598
    %v2600 = vpop.f32.mrf.mxu0
    %2601 = vdwg.mxu0
    %2602 = vmatprep.subr.mxu0 0.0
    %2603 = vmatpush1.msra.mxu0 0.0
    %2604 = vmatprep.subr.mxu0 0.0
    %2605 = vmatpush1.msra.mxu0 0.0
    %2606 = vmatprep.subr.mxu0 0.0
    %2607 = vmatpush1.msra.mxu0 0.0
    %2608 = vmatprep.subr.mxu0 0.0
    %2609 = vmatpush1.msra.mxu0 0.0
    %2610 = vmatprep.subr.mxu0 0.0
    %2611 = vmatpush1.msra.mxu0 0.0
    %2612 = vmatprep.subr.mxu0 0.0
    %2613 = vmatpush1.msra.mxu0 0.0
    %2614 = vmatprep.subr.mxu0 0.0
    %2615 = vmatpush1.msra.mxu0 0.0
    %2616 = vmatprep.subr.mxu0 0.0
    %2617 = vmatpush1.msra.mxu0 0.0
    %2618 = vmatprep.subr.mxu0 0.0
    %2619 = vmatpush1.msra.mxu0 0.0
    %2620 = vmatprep.subr.mxu0 0.0
    %2621 = vmatpush1.msra.mxu0 0.0
    %2622 = vmatprep.subr.mxu0 0.0
    %2623 = vmatpush1.msra.mxu0 0.0
    %2624 = vmatprep.subr.mxu0 0.0
    %2625 = vmatpush1.msra.mxu0 0.0
    %2626 = vmatprep.subr.mxu0 0.0
    %2627 = vmatpush1.msra.mxu0 0.0
    %2628 = vmatprep.subr.mxu0 0.0
    %2629 = vmatpush1.msra.mxu0 0.0
    %2630 = vmatprep.subr.mxu0 0.0
    %2631 = vmatpush1.msra.mxu0 0.0
    %2632 = vmatprep.subr.mxu0 0.0
    %v2633 = vand.u32 %v2374, 4294901760
    %2634 = vmatpush1.msra.mxu0 %v2633
    %2635 = vmatprep.subr.mxu0 0.0
    %2636 = vmatpush2.msra.mxu0 0.0
    %2637 = vmatprep.subr.mxu0 0.0
    %2638 = vmatpush2.msra.mxu0 0.0
    %2639 = vmatprep.subr.mxu0 0.0
    %2640 = vmatpush2.msra.mxu0 0.0
    %2641 = vmatprep.subr.mxu0 0.0
    %2642 = vmatpush2.msra.mxu0 0.0
    %2643 = vmatprep.subr.mxu0 0.0
    %2644 = vmatpush2.msra.mxu0 0.0
    %2645 = vmatprep.subr.mxu0 0.0
    %2646 = vmatpush2.msra.mxu0 0.0
    %2647 = vmatprep.subr.mxu0 0.0
    %2648 = vmatpush2.msra.mxu0 0.0
    %2649 = vmatprep.subr.mxu0 0.0
    %2650 = vmatpush2.msra.mxu0 0.0
    %2651 = vmatprep.subr.mxu0 0.0
    %2652 = vmatpush2.msra.mxu0 0.0
    %2653 = vmatprep.subr.mxu0 0.0
    %2654 = vmatpush2.msra.mxu0 0.0
    %2655 = vmatprep.subr.mxu0 0.0
    %2656 = vmatpush2.msra.mxu0 0.0
    %2657 = vmatprep.subr.mxu0 0.0
    %2658 = vmatpush2.msra.mxu0 0.0
    %2659 = vmatprep.subr.mxu0 0.0
    %2660 = vmatpush2.msra.mxu0 0.0
    %2661 = vmatprep.subr.mxu0 0.0
    %2662 = vmatpush2.msra.mxu0 0.0
    %2663 = vmatprep.subr.mxu0 0.0
    %2664 = vmatpush2.msra.mxu0 0.0
    %2665 = vmatprep.subr.mxu0 0.0
    %2666 = vmatpush2.msra.mxu0 0.0
    %2667 = vmatprep.mubr.f32.mxu0 0.0
    %v2668 = vand.u32 %v1916, 4294901760
    %v2669 = vsub.f32 %v1916, %v2668
    %v2670 = vand.u32 %v2669, 4294901760
    %2671 = vmatmul.mubr.f32.gmra.mxu0 %v2670
    %v2672 = vpop.f32.mrf.mxu0
    %v2673 = vadd.f32 %v2599, %v2672
    %v2674 = vpop.f32.mrf.mxu0
    %2675 = vdwg.mxu0
    %2676 = vmatprep.subr.mxu0 0.0
    %2677 = vmatpush1.msra.mxu0 0.0
    %2678 = vmatprep.subr.mxu0 0.0
    %2679 = vmatpush1.msra.mxu0 0.0
    %2680 = vmatprep.subr.mxu0 0.0
    %2681 = vmatpush1.msra.mxu0 0.0
    %2682 = vmatprep.subr.mxu0 0.0
    %2683 = vmatpush1.msra.mxu0 0.0
    %2684 = vmatprep.subr.mxu0 0.0
    %2685 = vmatpush1.msra.mxu0 0.0
    %2686 = vmatprep.subr.mxu0 0.0
    %2687 = vmatpush1.msra.mxu0 0.0
    %2688 = vmatprep.subr.mxu0 0.0
    %2689 = vmatpush1.msra.mxu0 0.0
    %2690 = vmatprep.subr.mxu0 0.0
    %2691 = vmatpush1.msra.mxu0 0.0
    %2692 = vmatprep.subr.mxu0 0.0
    %2693 = vmatpush1.msra.mxu0 0.0
    %2694 = vmatprep.subr.mxu0 0.0
    %2695 = vmatpush1.msra.mxu0 0.0
    %2696 = vmatprep.subr.mxu0 0.0
    %2697 = vmatpush1.msra.mxu0 0.0
    %2698 = vmatprep.subr.mxu0 0.0
    %2699 = vmatpush1.msra.mxu0 0.0
    %2700 = vmatprep.subr.mxu0 0.0
    %2701 = vmatpush1.msra.mxu0 0.0
    %2702 = vmatprep.subr.mxu0 0.0
    %2703 = vmatpush1.msra.mxu0 0.0
    %2704 = vmatprep.subr.mxu0 0.0
    %2705 = vmatpush1.msra.mxu0 0.0
    %2706 = vmatprep.subr.mxu0 0.0
    %v2707 = vand.u32 %v2374, 4294901760
    %v2708 = vsub.f32 %v2374, %v2707
    %v2709 = vand.u32 %v2708, 4294901760
    %2710 = vmatpush1.msra.mxu0 %v2709
    %2711 = vmatprep.subr.mxu0 0.0
    %2712 = vmatpush2.msra.mxu0 0.0
    %2713 = vmatprep.subr.mxu0 0.0
    %2714 = vmatpush2.msra.mxu0 0.0
    %2715 = vmatprep.subr.mxu0 0.0
    %2716 = vmatpush2.msra.mxu0 0.0
    %2717 = vmatprep.subr.mxu0 0.0
    %2718 = vmatpush2.msra.mxu0 0.0
    %2719 = vmatprep.subr.mxu0 0.0
    %2720 = vmatpush2.msra.mxu0 0.0
    %2721 = vmatprep.subr.mxu0 0.0
    %2722 = vmatpush2.msra.mxu0 0.0
    %2723 = vmatprep.subr.mxu0 0.0
    %2724 = vmatpush2.msra.mxu0 0.0
    %2725 = vmatprep.subr.mxu0 0.0
    %2726 = vmatpush2.msra.mxu0 0.0
    %2727 = vmatprep.subr.mxu0 0.0
    %2728 = vmatpush2.msra.mxu0 0.0
    %2729 = vmatprep.subr.mxu0 0.0
    %2730 = vmatpush2.msra.mxu0 0.0
    %2731 = vmatprep.subr.mxu0 0.0
    %2732 = vmatpush2.msra.mxu0 0.0
    %2733 = vmatprep.subr.mxu0 0.0
    %2734 = vmatpush2.msra.mxu0 0.0
    %2735 = vmatprep.subr.mxu0 0.0
    %2736 = vmatpush2.msra.mxu0 0.0
    %2737 = vmatprep.subr.mxu0 0.0
    %2738 = vmatpush2.msra.mxu0 0.0
    %2739 = vmatprep.subr.mxu0 0.0
    %2740 = vmatpush2.msra.mxu0 0.0
    %2741 = vmatprep.subr.mxu0 0.0
    %2742 = vmatpush2.msra.mxu0 0.0
    %2743 = vmatprep.mubr.f32.mxu0 0.0
    %v2744 = vand.u32 %v1916, 4294901760
    %2745 = vmatmul.mubr.f32.gmra.mxu0 %v2744
    %v2746 = vpop.f32.mrf.mxu0
    %v2747 = vadd.f32 %v2673, %v2746
    %v2748 = vpop.f32.mrf.mxu0
    %2749 = vdwg.mxu0
    %2750 = vmatprep.subr.mxu0 0.0
    %2751 = vmatpush1.msra.mxu0 0.0
    %2752 = vmatprep.subr.mxu0 0.0
    %2753 = vmatpush1.msra.mxu0 0.0
    %2754 = vmatprep.subr.mxu0 0.0
    %2755 = vmatpush1.msra.mxu0 0.0
    %2756 = vmatprep.subr.mxu0 0.0
    %2757 = vmatpush1.msra.mxu0 0.0
    %2758 = vmatprep.subr.mxu0 0.0
    %2759 = vmatpush1.msra.mxu0 0.0
    %2760 = vmatprep.subr.mxu0 0.0
    %2761 = vmatpush1.msra.mxu0 0.0
    %2762 = vmatprep.subr.mxu0 0.0
    %2763 = vmatpush1.msra.mxu0 0.0
    %2764 = vmatprep.subr.mxu0 0.0
    %2765 = vmatpush1.msra.mxu0 0.0
    %2766 = vmatprep.subr.mxu0 0.0
    %2767 = vmatpush1.msra.mxu0 0.0
    %2768 = vmatprep.subr.mxu0 0.0
    %2769 = vmatpush1.msra.mxu0 0.0
    %2770 = vmatprep.subr.mxu0 0.0
    %2771 = vmatpush1.msra.mxu0 0.0
    %2772 = vmatprep.subr.mxu0 0.0
    %2773 = vmatpush1.msra.mxu0 0.0
    %2774 = vmatprep.subr.mxu0 0.0
    %2775 = vmatpush1.msra.mxu0 0.0
    %2776 = vmatprep.subr.mxu0 0.0
    %2777 = vmatpush1.msra.mxu0 0.0
    %2778 = vmatprep.subr.mxu0 0.0
    %2779 = vmatpush1.msra.mxu0 0.0
    %2780 = vmatprep.subr.mxu0 0.0
    %v2781 = vand.u32 %v2374, 4294901760
    %2782 = vmatpush1.msra.mxu0 %v2781
    %2783 = vmatprep.subr.mxu0 0.0
    %2784 = vmatpush2.msra.mxu0 0.0
    %2785 = vmatprep.subr.mxu0 0.0
    %2786 = vmatpush2.msra.mxu0 0.0
    %2787 = vmatprep.subr.mxu0 0.0
    %2788 = vmatpush2.msra.mxu0 0.0
    %2789 = vmatprep.subr.mxu0 0.0
    %2790 = vmatpush2.msra.mxu0 0.0
    %2791 = vmatprep.subr.mxu0 0.0
    %2792 = vmatpush2.msra.mxu0 0.0
    %2793 = vmatprep.subr.mxu0 0.0
    %2794 = vmatpush2.msra.mxu0 0.0
    %2795 = vmatprep.subr.mxu0 0.0
    %2796 = vmatpush2.msra.mxu0 0.0
    %2797 = vmatprep.subr.mxu0 0.0
    %2798 = vmatpush2.msra.mxu0 0.0
    %2799 = vmatprep.subr.mxu0 0.0
    %2800 = vmatpush2.msra.mxu0 0.0
    %2801 = vmatprep.subr.mxu0 0.0
    %2802 = vmatpush2.msra.mxu0 0.0
    %2803 = vmatprep.subr.mxu0 0.0
    %2804 = vmatpush2.msra.mxu0 0.0
    %2805 = vmatprep.subr.mxu0 0.0
    %2806 = vmatpush2.msra.mxu0 0.0
    %2807 = vmatprep.subr.mxu0 0.0
    %2808 = vmatpush2.msra.mxu0 0.0
    %2809 = vmatprep.subr.mxu0 0.0
    %2810 = vmatpush2.msra.mxu0 0.0
    %2811 = vmatprep.subr.mxu0 0.0
    %2812 = vmatpush2.msra.mxu0 0.0
    %2813 = vmatprep.subr.mxu0 0.0
    %2814 = vmatpush2.msra.mxu0 0.0
    %2815 = vmatprep.mubr.f32.mxu0 0.0
    %v2816 = vand.u32 %v1916, 4294901760
    %2817 = vmatmul.mubr.f32.gmra.mxu0 %v2816
    %v2818 = vpop.f32.mrf.mxu0
    %v2819 = vadd.f32 %v2747, %v2818
    %v2820 = vpop.f32.mrf.mxu0
    %2821 = vdwg.mxu0
    %v2822 = vmul.f32 %v2819, 1.442695
    %v2823 = vpow.pop %v2822
    %2824 = vrot.lane.b32.xlu0 %v26, 125
    %v2825 = vpop.permute.xlu0 %2824
    %v2827 = vmul.f32 %v2823, %v2825
    %v2828 = vadd.f32 %v2364, %v2827
    %v2829 = vld [vmem:[#allocation2 + $0x50] sm:$0x7]
    %v2830 = vld [vmem:[#allocation2 + $0x53] sm:$0x1]
    %v2831 = vlaneseq
    %v2832 = vshrl.u32 %v2831, 7
    %v2833 = vsub.s32 0, %v2832
    %v2834 = vrot.slane %v2830, %v2833
    %v2836 = vsel %vm33, %v2828, 0
    %v2839 = vsel %vm37, %v2829, 0
    %2841 = vmatprep.subr.mxu0 0.0
    %2842 = vmatpush1.msra.mxu0 0.0
    %2843 = vmatprep.subr.mxu0 0.0
    %2844 = vmatpush1.msra.mxu0 0.0
    %2845 = vmatprep.subr.mxu0 0.0
    %2846 = vmatpush1.msra.mxu0 0.0
    %2847 = vmatprep.subr.mxu0 0.0
    %2848 = vmatpush1.msra.mxu0 0.0
    %2849 = vmatprep.subr.mxu0 0.0
    %2850 = vmatpush1.msra.mxu0 0.0
    %2851 = vmatprep.subr.mxu0 0.0
    %2852 = vmatpush1.msra.mxu0 0.0
    %2853 = vmatprep.subr.mxu0 0.0
    %2854 = vmatpush1.msra.mxu0 0.0
    %2855 = vmatprep.subr.mxu0 0.0
    %2856 = vmatpush1.msra.mxu0 0.0
    %2857 = vmatprep.subr.mxu0 0.0
    %2858 = vmatpush1.msra.mxu0 0.0
    %2859 = vmatprep.subr.mxu0 0.0
    %2860 = vmatpush1.msra.mxu0 0.0
    %2861 = vmatprep.subr.mxu0 0.0
    %2862 = vmatpush1.msra.mxu0 0.0
    %2863 = vmatprep.subr.mxu0 0.0
    %2864 = vmatpush1.msra.mxu0 0.0
    %2865 = vmatprep.subr.mxu0 0.0
    %2866 = vmatpush1.msra.mxu0 0.0
    %2867 = vmatprep.subr.mxu0 0.0
    %2868 = vmatpush1.msra.mxu0 0.0
    %2869 = vmatprep.subr.mxu0 0.0
    %2870 = vmatpush1.msra.mxu0 0.0
    %2871 = vmatprep.subr.mxu0 0.0
    %v2872 = vand.u32 %v2839, 4294901760
    %2873 = vmatpush1.msra.mxu0 %v2872
    %2874 = vmatprep.subr.mxu0 0.0
    %2875 = vmatpush2.msra.mxu0 0.0
    %2876 = vmatprep.subr.mxu0 0.0
    %2877 = vmatpush2.msra.mxu0 0.0
    %2878 = vmatprep.subr.mxu0 0.0
    %2879 = vmatpush2.msra.mxu0 0.0
    %2880 = vmatprep.subr.mxu0 0.0
    %2881 = vmatpush2.msra.mxu0 0.0
    %2882 = vmatprep.subr.mxu0 0.0
    %2883 = vmatpush2.msra.mxu0 0.0
    %2884 = vmatprep.subr.mxu0 0.0
    %2885 = vmatpush2.msra.mxu0 0.0
    %2886 = vmatprep.subr.mxu0 0.0
    %2887 = vmatpush2.msra.mxu0 0.0
    %2888 = vmatprep.subr.mxu0 0.0
    %2889 = vmatpush2.msra.mxu0 0.0
    %2890 = vmatprep.subr.mxu0 0.0
    %2891 = vmatpush2.msra.mxu0 0.0
    %2892 = vmatprep.subr.mxu0 0.0
    %2893 = vmatpush2.msra.mxu0 0.0
    %2894 = vmatprep.subr.mxu0 0.0
    %2895 = vmatpush2.msra.mxu0 0.0
    %2896 = vmatprep.subr.mxu0 0.0
    %2897 = vmatpush2.msra.mxu0 0.0
    %2898 = vmatprep.subr.mxu0 0.0
    %2899 = vmatpush2.msra.mxu0 0.0
    %2900 = vmatprep.subr.mxu0 0.0
    %2901 = vmatpush2.msra.mxu0 0.0
    %2902 = vmatprep.subr.mxu0 0.0
    %2903 = vmatpush2.msra.mxu0 0.0
    %2904 = vmatprep.subr.mxu0 0.0
    %2905 = vmatpush2.msra.mxu0 0.0
    %2906 = vmatprep.mubr.f32.mxu0 0.0
    %v2907 = vand.u32 %v2836, 4294901760
    %v2908 = vsub.f32 %v2836, %v2907
    %v2909 = vand.u32 %v2908, 4294901760
    %v2910 = vsub.f32 %v2908, %v2909
    %v2911 = vand.u32 %v2910, 4294901760
    %2912 = vmatmul.mubr.f32.gmra.mxu0 %v2911
    %v2913 = vpop.f32.mrf.mxu0
    %v2914 = vadd.f32 %v2834, %v2913
    %v2915 = vpop.f32.mrf.mxu0
    %2916 = vdwg.mxu0
    %2917 = vmatprep.subr.mxu0 0.0
    %2918 = vmatpush1.msra.mxu0 0.0
    %2919 = vmatprep.subr.mxu0 0.0
    %2920 = vmatpush1.msra.mxu0 0.0
    %2921 = vmatprep.subr.mxu0 0.0
    %2922 = vmatpush1.msra.mxu0 0.0
    %2923 = vmatprep.subr.mxu0 0.0
    %2924 = vmatpush1.msra.mxu0 0.0
    %2925 = vmatprep.subr.mxu0 0.0
    %2926 = vmatpush1.msra.mxu0 0.0
    %2927 = vmatprep.subr.mxu0 0.0
    %2928 = vmatpush1.msra.mxu0 0.0
    %2929 = vmatprep.subr.mxu0 0.0
    %2930 = vmatpush1.msra.mxu0 0.0
    %2931 = vmatprep.subr.mxu0 0.0
    %2932 = vmatpush1.msra.mxu0 0.0
    %2933 = vmatprep.subr.mxu0 0.0
    %2934 = vmatpush1.msra.mxu0 0.0
    %2935 = vmatprep.subr.mxu0 0.0
    %2936 = vmatpush1.msra.mxu0 0.0
    %2937 = vmatprep.subr.mxu0 0.0
    %2938 = vmatpush1.msra.mxu0 0.0
    %2939 = vmatprep.subr.mxu0 0.0
    %2940 = vmatpush1.msra.mxu0 0.0
    %2941 = vmatprep.subr.mxu0 0.0
    %2942 = vmatpush1.msra.mxu0 0.0
    %2943 = vmatprep.subr.mxu0 0.0
    %2944 = vmatpush1.msra.mxu0 0.0
    %2945 = vmatprep.subr.mxu0 0.0
    %2946 = vmatpush1.msra.mxu0 0.0
    %2947 = vmatprep.subr.mxu0 0.0
    %v2948 = vand.u32 %v2839, 4294901760
    %v2949 = vsub.f32 %v2839, %v2948
    %v2950 = vand.u32 %v2949, 4294901760
    %v2951 = vsub.f32 %v2949, %v2950
    %v2952 = vand.u32 %v2951, 4294901760
    %2953 = vmatpush1.msra.mxu0 %v2952
    %2954 = vmatprep.subr.mxu0 0.0
    %2955 = vmatpush2.msra.mxu0 0.0
    %2956 = vmatprep.subr.mxu0 0.0
    %2957 = vmatpush2.msra.mxu0 0.0
    %2958 = vmatprep.subr.mxu0 0.0
    %2959 = vmatpush2.msra.mxu0 0.0
    %2960 = vmatprep.subr.mxu0 0.0
    %2961 = vmatpush2.msra.mxu0 0.0
    %2962 = vmatprep.subr.mxu0 0.0
    %2963 = vmatpush2.msra.mxu0 0.0
    %2964 = vmatprep.subr.mxu0 0.0
    %2965 = vmatpush2.msra.mxu0 0.0
    %2966 = vmatprep.subr.mxu0 0.0
    %2967 = vmatpush2.msra.mxu0 0.0
    %2968 = vmatprep.subr.mxu0 0.0
    %2969 = vmatpush2.msra.mxu0 0.0
    %2970 = vmatprep.subr.mxu0 0.0
    %2971 = vmatpush2.msra.mxu0 0.0
    %2972 = vmatprep.subr.mxu0 0.0
    %2973 = vmatpush2.msra.mxu0 0.0
    %2974 = vmatprep.subr.mxu0 0.0
    %2975 = vmatpush2.msra.mxu0 0.0
    %2976 = vmatprep.subr.mxu0 0.0
    %2977 = vmatpush2.msra.mxu0 0.0
    %2978 = vmatprep.subr.mxu0 0.0
    %2979 = vmatpush2.msra.mxu0 0.0
    %2980 = vmatprep.subr.mxu0 0.0
    %2981 = vmatpush2.msra.mxu0 0.0
    %2982 = vmatprep.subr.mxu0 0.0
    %2983 = vmatpush2.msra.mxu0 0.0
    %2984 = vmatprep.subr.mxu0 0.0
    %2985 = vmatpush2.msra.mxu0 0.0
    %2986 = vmatprep.mubr.f32.mxu0 0.0
    %v2987 = vand.u32 %v2836, 4294901760
    %2988 = vmatmul.mubr.f32.gmra.mxu0 %v2987
    %v2989 = vpop.f32.mrf.mxu0
    %v2990 = vadd.f32 %v2914, %v2989
    %v2991 = vpop.f32.mrf.mxu0
    %2992 = vdwg.mxu0
    %2993 = vmatprep.subr.mxu0 0.0
    %2994 = vmatpush1.msra.mxu0 0.0
    %2995 = vmatprep.subr.mxu0 0.0
    %2996 = vmatpush1.msra.mxu0 0.0
    %2997 = vmatprep.subr.mxu0 0.0
    %2998 = vmatpush1.msra.mxu0 0.0
    %2999 = vmatprep.subr.mxu0 0.0
    %3000 = vmatpush1.msra.mxu0 0.0
    %3001 = vmatprep.subr.mxu0 0.0
    %3002 = vmatpush1.msra.mxu0 0.0
    %3003 = vmatprep.subr.mxu0 0.0
    %3004 = vmatpush1.msra.mxu0 0.0
    %3005 = vmatprep.subr.mxu0 0.0
    %3006 = vmatpush1.msra.mxu0 0.0
    %3007 = vmatprep.subr.mxu0 0.0
    %3008 = vmatpush1.msra.mxu0 0.0
    %3009 = vmatprep.subr.mxu0 0.0
    %3010 = vmatpush1.msra.mxu0 0.0
    %3011 = vmatprep.subr.mxu0 0.0
    %3012 = vmatpush1.msra.mxu0 0.0
    %3013 = vmatprep.subr.mxu0 0.0
    %3014 = vmatpush1.msra.mxu0 0.0
    %3015 = vmatprep.subr.mxu0 0.0
    %3016 = vmatpush1.msra.mxu0 0.0
    %3017 = vmatprep.subr.mxu0 0.0
    %3018 = vmatpush1.msra.mxu0 0.0
    %3019 = vmatprep.subr.mxu0 0.0
    %3020 = vmatpush1.msra.mxu0 0.0
    %3021 = vmatprep.subr.mxu0 0.0
    %3022 = vmatpush1.msra.mxu0 0.0
    %3023 = vmatprep.subr.mxu0 0.0
    %v3024 = vand.u32 %v2839, 4294901760
    %v3025 = vsub.f32 %v2839, %v3024
    %3026 = vmatpush1.msra.mxu0 %v3025
    %3027 = vmatprep.subr.mxu0 0.0
    %3028 = vmatpush2.msra.mxu0 0.0
    %3029 = vmatprep.subr.mxu0 0.0
    %3030 = vmatpush2.msra.mxu0 0.0
    %3031 = vmatprep.subr.mxu0 0.0
    %3032 = vmatpush2.msra.mxu0 0.0
    %3033 = vmatprep.subr.mxu0 0.0
    %3034 = vmatpush2.msra.mxu0 0.0
    %3035 = vmatprep.subr.mxu0 0.0
    %3036 = vmatpush2.msra.mxu0 0.0
    %3037 = vmatprep.subr.mxu0 0.0
    %3038 = vmatpush2.msra.mxu0 0.0
    %3039 = vmatprep.subr.mxu0 0.0
    %3040 = vmatpush2.msra.mxu0 0.0
    %3041 = vmatprep.subr.mxu0 0.0
    %3042 = vmatpush2.msra.mxu0 0.0
    %3043 = vmatprep.subr.mxu0 0.0
    %3044 = vmatpush2.msra.mxu0 0.0
    %3045 = vmatprep.subr.mxu0 0.0
    %3046 = vmatpush2.msra.mxu0 0.0
    %3047 = vmatprep.subr.mxu0 0.0
    %3048 = vmatpush2.msra.mxu0 0.0
    %3049 = vmatprep.subr.mxu0 0.0
    %3050 = vmatpush2.msra.mxu0 0.0
    %3051 = vmatprep.subr.mxu0 0.0
    %3052 = vmatpush2.msra.mxu0 0.0
    %3053 = vmatprep.subr.mxu0 0.0
    %3054 = vmatpush2.msra.mxu0 0.0
    %3055 = vmatprep.subr.mxu0 0.0
    %3056 = vmatpush2.msra.mxu0 0.0
    %3057 = vmatprep.subr.mxu0 0.0
    %3058 = vmatpush2.msra.mxu0 0.0
    %3059 = vmatprep.mubr.f32.mxu0 0.0
    %v3060 = vand.u32 %v2836, 4294901760
    %v3061 = vsub.f32 %v2836, %v3060
    %3062 = vmatmul.mubr.f32.gmra.mxu0 %v3061
    %v3063 = vpop.f32.mrf.mxu0
    %v3064 = vadd.f32 %v2990, %v3063
    %v3065 = vpop.f32.mrf.mxu0
    %3066 = vdwg.mxu0
    %3067 = vmatprep.subr.mxu0 0.0
    %3068 = vmatpush1.msra.mxu0 0.0
    %3069 = vmatprep.subr.mxu0 0.0
    %3070 = vmatpush1.msra.mxu0 0.0
    %3071 = vmatprep.subr.mxu0 0.0
    %3072 = vmatpush1.msra.mxu0 0.0
    %3073 = vmatprep.subr.mxu0 0.0
    %3074 = vmatpush1.msra.mxu0 0.0
    %3075 = vmatprep.subr.mxu0 0.0
    %3076 = vmatpush1.msra.mxu0 0.0
    %3077 = vmatprep.subr.mxu0 0.0
    %3078 = vmatpush1.msra.mxu0 0.0
    %3079 = vmatprep.subr.mxu0 0.0
    %3080 = vmatpush1.msra.mxu0 0.0
    %3081 = vmatprep.subr.mxu0 0.0
    %3082 = vmatpush1.msra.mxu0 0.0
    %3083 = vmatprep.subr.mxu0 0.0
    %3084 = vmatpush1.msra.mxu0 0.0
    %3085 = vmatprep.subr.mxu0 0.0
    %3086 = vmatpush1.msra.mxu0 0.0
    %3087 = vmatprep.subr.mxu0 0.0
    %3088 = vmatpush1.msra.mxu0 0.0
    %3089 = vmatprep.subr.mxu0 0.0
    %3090 = vmatpush1.msra.mxu0 0.0
    %3091 = vmatprep.subr.mxu0 0.0
    %3092 = vmatpush1.msra.mxu0 0.0
    %3093 = vmatprep.subr.mxu0 0.0
    %3094 = vmatpush1.msra.mxu0 0.0
    %3095 = vmatprep.subr.mxu0 0.0
    %3096 = vmatpush1.msra.mxu0 0.0
    %3097 = vmatprep.subr.mxu0 0.0
    %v3098 = vand.u32 %v2839, 4294901760
    %3099 = vmatpush1.msra.mxu0 %v3098
    %3100 = vmatprep.subr.mxu0 0.0
    %3101 = vmatpush2.msra.mxu0 0.0
    %3102 = vmatprep.subr.mxu0 0.0
    %3103 = vmatpush2.msra.mxu0 0.0
    %3104 = vmatprep.subr.mxu0 0.0
    %3105 = vmatpush2.msra.mxu0 0.0
    %3106 = vmatprep.subr.mxu0 0.0
    %3107 = vmatpush2.msra.mxu0 0.0
    %3108 = vmatprep.subr.mxu0 0.0
    %3109 = vmatpush2.msra.mxu0 0.0
    %3110 = vmatprep.subr.mxu0 0.0
    %3111 = vmatpush2.msra.mxu0 0.0
    %3112 = vmatprep.subr.mxu0 0.0
    %3113 = vmatpush2.msra.mxu0 0.0
    %3114 = vmatprep.subr.mxu0 0.0
    %3115 = vmatpush2.msra.mxu0 0.0
    %3116 = vmatprep.subr.mxu0 0.0
    %3117 = vmatpush2.msra.mxu0 0.0
    %3118 = vmatprep.subr.mxu0 0.0
    %3119 = vmatpush2.msra.mxu0 0.0
    %3120 = vmatprep.subr.mxu0 0.0
    %3121 = vmatpush2.msra.mxu0 0.0
    %3122 = vmatprep.subr.mxu0 0.0
    %3123 = vmatpush2.msra.mxu0 0.0
    %3124 = vmatprep.subr.mxu0 0.0
    %3125 = vmatpush2.msra.mxu0 0.0
    %3126 = vmatprep.subr.mxu0 0.0
    %3127 = vmatpush2.msra.mxu0 0.0
    %3128 = vmatprep.subr.mxu0 0.0
    %3129 = vmatpush2.msra.mxu0 0.0
    %3130 = vmatprep.subr.mxu0 0.0
    %3131 = vmatpush2.msra.mxu0 0.0
    %3132 = vmatprep.mubr.f32.mxu0 0.0
    %v3133 = vand.u32 %v2836, 4294901760
    %v3134 = vsub.f32 %v2836, %v3133
    %v3135 = vand.u32 %v3134, 4294901760
    %3136 = vmatmul.mubr.f32.gmra.mxu0 %v3135
    %v3137 = vpop.f32.mrf.mxu0
    %v3138 = vadd.f32 %v3064, %v3137
    %v3139 = vpop.f32.mrf.mxu0
    %3140 = vdwg.mxu0
    %3141 = vmatprep.subr.mxu0 0.0
    %3142 = vmatpush1.msra.mxu0 0.0
    %3143 = vmatprep.subr.mxu0 0.0
    %3144 = vmatpush1.msra.mxu0 0.0
    %3145 = vmatprep.subr.mxu0 0.0
    %3146 = vmatpush1.msra.mxu0 0.0
    %3147 = vmatprep.subr.mxu0 0.0
    %3148 = vmatpush1.msra.mxu0 0.0
    %3149 = vmatprep.subr.mxu0 0.0
    %3150 = vmatpush1.msra.mxu0 0.0
    %3151 = vmatprep.subr.mxu0 0.0
    %3152 = vmatpush1.msra.mxu0 0.0
    %3153 = vmatprep.subr.mxu0 0.0
    %3154 = vmatpush1.msra.mxu0 0.0
    %3155 = vmatprep.subr.mxu0 0.0
    %3156 = vmatpush1.msra.mxu0 0.0
    %3157 = vmatprep.subr.mxu0 0.0
    %3158 = vmatpush1.msra.mxu0 0.0
    %3159 = vmatprep.subr.mxu0 0.0
    %3160 = vmatpush1.msra.mxu0 0.0
    %3161 = vmatprep.subr.mxu0 0.0
    %3162 = vmatpush1.msra.mxu0 0.0
    %3163 = vmatprep.subr.mxu0 0.0
    %3164 = vmatpush1.msra.mxu0 0.0
    %3165 = vmatprep.subr.mxu0 0.0
    %3166 = vmatpush1.msra.mxu0 0.0
    %3167 = vmatprep.subr.mxu0 0.0
    %3168 = vmatpush1.msra.mxu0 0.0
    %3169 = vmatprep.subr.mxu0 0.0
    %3170 = vmatpush1.msra.mxu0 0.0
    %3171 = vmatprep.subr.mxu0 0.0
    %v3172 = vand.u32 %v2839, 4294901760
    %v3173 = vsub.f32 %v2839, %v3172
    %v3174 = vand.u32 %v3173, 4294901760
    %3175 = vmatpush1.msra.mxu0 %v3174
    %3176 = vmatprep.subr.mxu0 0.0
    %3177 = vmatpush2.msra.mxu0 0.0
    %3178 = vmatprep.subr.mxu0 0.0
    %3179 = vmatpush2.msra.mxu0 0.0
    %3180 = vmatprep.subr.mxu0 0.0
    %3181 = vmatpush2.msra.mxu0 0.0
    %3182 = vmatprep.subr.mxu0 0.0
    %3183 = vmatpush2.msra.mxu0 0.0
    %3184 = vmatprep.subr.mxu0 0.0
    %3185 = vmatpush2.msra.mxu0 0.0
    %3186 = vmatprep.subr.mxu0 0.0
    %3187 = vmatpush2.msra.mxu0 0.0
    %3188 = vmatprep.subr.mxu0 0.0
    %3189 = vmatpush2.msra.mxu0 0.0
    %3190 = vmatprep.subr.mxu0 0.0
    %3191 = vmatpush2.msra.mxu0 0.0
    %3192 = vmatprep.subr.mxu0 0.0
    %3193 = vmatpush2.msra.mxu0 0.0
    %3194 = vmatprep.subr.mxu0 0.0
    %3195 = vmatpush2.msra.mxu0 0.0
    %3196 = vmatprep.subr.mxu0 0.0
    %3197 = vmatpush2.msra.mxu0 0.0
    %3198 = vmatprep.subr.mxu0 0.0
    %3199 = vmatpush2.msra.mxu0 0.0
    %3200 = vmatprep.subr.mxu0 0.0
    %3201 = vmatpush2.msra.mxu0 0.0
    %3202 = vmatprep.subr.mxu0 0.0
    %3203 = vmatpush2.msra.mxu0 0.0
    %3204 = vmatprep.subr.mxu0 0.0
    %3205 = vmatpush2.msra.mxu0 0.0
    %3206 = vmatprep.subr.mxu0 0.0
    %3207 = vmatpush2.msra.mxu0 0.0
    %3208 = vmatprep.mubr.f32.mxu0 0.0
    %v3209 = vand.u32 %v2836, 4294901760
    %3210 = vmatmul.mubr.f32.gmra.mxu0 %v3209
    %v3211 = vpop.f32.mrf.mxu0
    %v3212 = vadd.f32 %v3138, %v3211
    %v3213 = vpop.f32.mrf.mxu0
    %3214 = vdwg.mxu0
    %3215 = vmatprep.subr.mxu0 0.0
    %3216 = vmatpush1.msra.mxu0 0.0
    %3217 = vmatprep.subr.mxu0 0.0
    %3218 = vmatpush1.msra.mxu0 0.0
    %3219 = vmatprep.subr.mxu0 0.0
    %3220 = vmatpush1.msra.mxu0 0.0
    %3221 = vmatprep.subr.mxu0 0.0
    %3222 = vmatpush1.msra.mxu0 0.0
    %3223 = vmatprep.subr.mxu0 0.0
    %3224 = vmatpush1.msra.mxu0 0.0
    %3225 = vmatprep.subr.mxu0 0.0
    %3226 = vmatpush1.msra.mxu0 0.0
    %3227 = vmatprep.subr.mxu0 0.0
    %3228 = vmatpush1.msra.mxu0 0.0
    %3229 = vmatprep.subr.mxu0 0.0
    %3230 = vmatpush1.msra.mxu0 0.0
    %3231 = vmatprep.subr.mxu0 0.0
    %3232 = vmatpush1.msra.mxu0 0.0
    %3233 = vmatprep.subr.mxu0 0.0
    %3234 = vmatpush1.msra.mxu0 0.0
    %3235 = vmatprep.subr.mxu0 0.0
    %3236 = vmatpush1.msra.mxu0 0.0
    %3237 = vmatprep.subr.mxu0 0.0
    %3238 = vmatpush1.msra.mxu0 0.0
    %3239 = vmatprep.subr.mxu0 0.0
    %3240 = vmatpush1.msra.mxu0 0.0
    %3241 = vmatprep.subr.mxu0 0.0
    %3242 = vmatpush1.msra.mxu0 0.0
    %3243 = vmatprep.subr.mxu0 0.0
    %3244 = vmatpush1.msra.mxu0 0.0
    %3245 = vmatprep.subr.mxu0 0.0
    %v3246 = vand.u32 %v2839, 4294901760
    %3247 = vmatpush1.msra.mxu0 %v3246
    %3248 = vmatprep.subr.mxu0 0.0
    %3249 = vmatpush2.msra.mxu0 0.0
    %3250 = vmatprep.subr.mxu0 0.0
    %3251 = vmatpush2.msra.mxu0 0.0
    %3252 = vmatprep.subr.mxu0 0.0
    %3253 = vmatpush2.msra.mxu0 0.0
    %3254 = vmatprep.subr.mxu0 0.0
    %3255 = vmatpush2.msra.mxu0 0.0
    %3256 = vmatprep.subr.mxu0 0.0
    %3257 = vmatpush2.msra.mxu0 0.0
    %3258 = vmatprep.subr.mxu0 0.0
    %3259 = vmatpush2.msra.mxu0 0.0
    %3260 = vmatprep.subr.mxu0 0.0
    %3261 = vmatpush2.msra.mxu0 0.0
    %3262 = vmatprep.subr.mxu0 0.0
    %3263 = vmatpush2.msra.mxu0 0.0
    %3264 = vmatprep.subr.mxu0 0.0
    %3265 = vmatpush2.msra.mxu0 0.0
    %3266 = vmatprep.subr.mxu0 0.0
    %3267 = vmatpush2.msra.mxu0 0.0
    %3268 = vmatprep.subr.mxu0 0.0
    %3269 = vmatpush2.msra.mxu0 0.0
    %3270 = vmatprep.subr.mxu0 0.0
    %3271 = vmatpush2.msra.mxu0 0.0
    %3272 = vmatprep.subr.mxu0 0.0
    %3273 = vmatpush2.msra.mxu0 0.0
    %3274 = vmatprep.subr.mxu0 0.0
    %3275 = vmatpush2.msra.mxu0 0.0
    %3276 = vmatprep.subr.mxu0 0.0
    %3277 = vmatpush2.msra.mxu0 0.0
    %3278 = vmatprep.subr.mxu0 0.0
    %3279 = vmatpush2.msra.mxu0 0.0
    %3280 = vmatprep.mubr.f32.mxu0 0.0
    %v3281 = vand.u32 %v2836, 4294901760
    %3282 = vmatmul.mubr.f32.gmra.mxu0 %v3281
    %v3283 = vpop.f32.mrf.mxu0
    %v3284 = vadd.f32 %v3212, %v3283
    %v3285 = vpop.f32.mrf.mxu0
    %3286 = vdwg.mxu0
    %v3287 = vtanh.pop %v3284
    %v3288 = vld [vmem:[#allocation2 + $0x58] sm:$0x3f]
    %v3289 = vld [vmem:[#allocation2 + $0x5e] sm:$0x1]
    %v3290 = vlaneseq
    %v3291 = vshrl.u32 %v3290, 7
    %v3292 = vsub.s32 0, %v3291
    %v3293 = vrot.slane %v3289, %v3292
    %v3295 = vsel %vm1454, %v3287, 0
    %v3298 = vsel %vm1458, %v3288, 0
    %3300 = vmatprep.subr.mxu0 0.0
    %3301 = vmatpush1.msra.mxu0 0.0
    %3302 = vmatprep.subr.mxu0 0.0
    %3303 = vmatpush1.msra.mxu0 0.0
    %3304 = vmatprep.subr.mxu0 0.0
    %3305 = vmatpush1.msra.mxu0 0.0
    %3306 = vmatprep.subr.mxu0 0.0
    %3307 = vmatpush1.msra.mxu0 0.0
    %3308 = vmatprep.subr.mxu0 0.0
    %3309 = vmatpush1.msra.mxu0 0.0
    %3310 = vmatprep.subr.mxu0 0.0
    %3311 = vmatpush1.msra.mxu0 0.0
    %3312 = vmatprep.subr.mxu0 0.0
    %3313 = vmatpush1.msra.mxu0 0.0
    %3314 = vmatprep.subr.mxu0 0.0
    %3315 = vmatpush1.msra.mxu0 0.0
    %3316 = vmatprep.subr.mxu0 0.0
    %3317 = vmatpush1.msra.mxu0 0.0
    %3318 = vmatprep.subr.mxu0 0.0
    %3319 = vmatpush1.msra.mxu0 0.0
    %3320 = vmatprep.subr.mxu0 0.0
    %3321 = vmatpush1.msra.mxu0 0.0
    %3322 = vmatprep.subr.mxu0 0.0
    %3323 = vmatpush1.msra.mxu0 0.0
    %3324 = vmatprep.subr.mxu0 0.0
    %3325 = vmatpush1.msra.mxu0 0.0
    %3326 = vmatprep.subr.mxu0 0.0
    %3327 = vmatpush1.msra.mxu0 0.0
    %3328 = vmatprep.subr.mxu0 0.0
    %3329 = vmatpush1.msra.mxu0 0.0
    %3330 = vmatprep.subr.mxu0 0.0
    %v3331 = vand.u32 %v3298, 4294901760
    %3332 = vmatpush1.msra.mxu0 %v3331
    %3333 = vmatprep.subr.mxu0 0.0
    %3334 = vmatpush2.msra.mxu0 0.0
    %3335 = vmatprep.subr.mxu0 0.0
    %3336 = vmatpush2.msra.mxu0 0.0
    %3337 = vmatprep.subr.mxu0 0.0
    %3338 = vmatpush2.msra.mxu0 0.0
    %3339 = vmatprep.subr.mxu0 0.0
    %3340 = vmatpush2.msra.mxu0 0.0
    %3341 = vmatprep.subr.mxu0 0.0
    %3342 = vmatpush2.msra.mxu0 0.0
    %3343 = vmatprep.subr.mxu0 0.0
    %3344 = vmatpush2.msra.mxu0 0.0
    %3345 = vmatprep.subr.mxu0 0.0
    %3346 = vmatpush2.msra.mxu0 0.0
    %3347 = vmatprep.subr.mxu0 0.0
    %3348 = vmatpush2.msra.mxu0 0.0
    %3349 = vmatprep.subr.mxu0 0.0
    %3350 = vmatpush2.msra.mxu0 0.0
    %3351 = vmatprep.subr.mxu0 0.0
    %3352 = vmatpush2.msra.mxu0 0.0
    %3353 = vmatprep.subr.mxu0 0.0
    %3354 = vmatpush2.msra.mxu0 0.0
    %3355 = vmatprep.subr.mxu0 0.0
    %3356 = vmatpush2.msra.mxu0 0.0
    %3357 = vmatprep.subr.mxu0 0.0
    %3358 = vmatpush2.msra.mxu0 0.0
    %3359 = vmatprep.subr.mxu0 0.0
    %3360 = vmatpush2.msra.mxu0 0.0
    %3361 = vmatprep.subr.mxu0 0.0
    %3362 = vmatpush2.msra.mxu0 0.0
    %3363 = vmatprep.subr.mxu0 0.0
    %3364 = vmatpush2.msra.mxu0 0.0
    %3365 = vmatprep.mubr.f32.mxu0 0.0
    %v3366 = vand.u32 %v3295, 4294901760
    %v3367 = vsub.f32 %v3295, %v3366
    %v3368 = vand.u32 %v3367, 4294901760
    %v3369 = vsub.f32 %v3367, %v3368
    %v3370 = vand.u32 %v3369, 4294901760
    %3371 = vmatmul.mubr.f32.gmra.mxu0 %v3370
    %v3372 = vpop.f32.mrf.mxu0
    %v3373 = vadd.f32 %v3293, %v3372
    %v3374 = vpop.f32.mrf.mxu0
    %3375 = vdwg.mxu0
    %3376 = vmatprep.subr.mxu0 0.0
    %3377 = vmatpush1.msra.mxu0 0.0
    %3378 = vmatprep.subr.mxu0 0.0
    %3379 = vmatpush1.msra.mxu0 0.0
    %3380 = vmatprep.subr.mxu0 0.0
    %3381 = vmatpush1.msra.mxu0 0.0
    %3382 = vmatprep.subr.mxu0 0.0
    %3383 = vmatpush1.msra.mxu0 0.0
    %3384 = vmatprep.subr.mxu0 0.0
    %3385 = vmatpush1.msra.mxu0 0.0
    %3386 = vmatprep.subr.mxu0 0.0
    %3387 = vmatpush1.msra.mxu0 0.0
    %3388 = vmatprep.subr.mxu0 0.0
    %3389 = vmatpush1.msra.mxu0 0.0
    %3390 = vmatprep.subr.mxu0 0.0
    %3391 = vmatpush1.msra.mxu0 0.0
    %3392 = vmatprep.subr.mxu0 0.0
    %3393 = vmatpush1.msra.mxu0 0.0
    %3394 = vmatprep.subr.mxu0 0.0
    %3395 = vmatpush1.msra.mxu0 0.0
    %3396 = vmatprep.subr.mxu0 0.0
    %3397 = vmatpush1.msra.mxu0 0.0
    %3398 = vmatprep.subr.mxu0 0.0
    %3399 = vmatpush1.msra.mxu0 0.0
    %3400 = vmatprep.subr.mxu0 0.0
    %3401 = vmatpush1.msra.mxu0 0.0
    %3402 = vmatprep.subr.mxu0 0.0
    %3403 = vmatpush1.msra.mxu0 0.0
    %3404 = vmatprep.subr.mxu0 0.0
    %3405 = vmatpush1.msra.mxu0 0.0
    %3406 = vmatprep.subr.mxu0 0.0
    %v3407 = vand.u32 %v3298, 4294901760
    %v3408 = vsub.f32 %v3298, %v3407
    %v3409 = vand.u32 %v3408, 4294901760
    %v3410 = vsub.f32 %v3408, %v3409
    %v3411 = vand.u32 %v3410, 4294901760
    %3412 = vmatpush1.msra.mxu0 %v3411
    %3413 = vmatprep.subr.mxu0 0.0
    %3414 = vmatpush2.msra.mxu0 0.0
    %3415 = vmatprep.subr.mxu0 0.0
    %3416 = vmatpush2.msra.mxu0 0.0
    %3417 = vmatprep.subr.mxu0 0.0
    %3418 = vmatpush2.msra.mxu0 0.0
    %3419 = vmatprep.subr.mxu0 0.0
    %3420 = vmatpush2.msra.mxu0 0.0
    %3421 = vmatprep.subr.mxu0 0.0
    %3422 = vmatpush2.msra.mxu0 0.0
    %3423 = vmatprep.subr.mxu0 0.0
    %3424 = vmatpush2.msra.mxu0 0.0
    %3425 = vmatprep.subr.mxu0 0.0
    %3426 = vmatpush2.msra.mxu0 0.0
    %3427 = vmatprep.subr.mxu0 0.0
    %3428 = vmatpush2.msra.mxu0 0.0
    %3429 = vmatprep.subr.mxu0 0.0
    %3430 = vmatpush2.msra.mxu0 0.0
    %3431 = vmatprep.subr.mxu0 0.0
    %3432 = vmatpush2.msra.mxu0 0.0
    %3433 = vmatprep.subr.mxu0 0.0
    %3434 = vmatpush2.msra.mxu0 0.0
    %3435 = vmatprep.subr.mxu0 0.0
    %3436 = vmatpush2.msra.mxu0 0.0
    %3437 = vmatprep.subr.mxu0 0.0
    %3438 = vmatpush2.msra.mxu0 0.0
    %3439 = vmatprep.subr.mxu0 0.0
    %3440 = vmatpush2.msra.mxu0 0.0
    %3441 = vmatprep.subr.mxu0 0.0
    %3442 = vmatpush2.msra.mxu0 0.0
    %3443 = vmatprep.subr.mxu0 0.0
    %3444 = vmatpush2.msra.mxu0 0.0
    %3445 = vmatprep.mubr.f32.mxu0 0.0
    %v3446 = vand.u32 %v3295, 4294901760
    %3447 = vmatmul.mubr.f32.gmra.mxu0 %v3446
    %v3448 = vpop.f32.mrf.mxu0
    %v3449 = vadd.f32 %v3373, %v3448
    %v3450 = vpop.f32.mrf.mxu0
    %3451 = vdwg.mxu0
    %3452 = vmatprep.subr.mxu0 0.0
    %3453 = vmatpush1.msra.mxu0 0.0
    %3454 = vmatprep.subr.mxu0 0.0
    %3455 = vmatpush1.msra.mxu0 0.0
    %3456 = vmatprep.subr.mxu0 0.0
    %3457 = vmatpush1.msra.mxu0 0.0
    %3458 = vmatprep.subr.mxu0 0.0
    %3459 = vmatpush1.msra.mxu0 0.0
    %3460 = vmatprep.subr.mxu0 0.0
    %3461 = vmatpush1.msra.mxu0 0.0
    %3462 = vmatprep.subr.mxu0 0.0
    %3463 = vmatpush1.msra.mxu0 0.0
    %3464 = vmatprep.subr.mxu0 0.0
    %3465 = vmatpush1.msra.mxu0 0.0
    %3466 = vmatprep.subr.mxu0 0.0
    %3467 = vmatpush1.msra.mxu0 0.0
    %3468 = vmatprep.subr.mxu0 0.0
    %3469 = vmatpush1.msra.mxu0 0.0
    %3470 = vmatprep.subr.mxu0 0.0
    %3471 = vmatpush1.msra.mxu0 0.0
    %3472 = vmatprep.subr.mxu0 0.0
    %3473 = vmatpush1.msra.mxu0 0.0
    %3474 = vmatprep.subr.mxu0 0.0
    %3475 = vmatpush1.msra.mxu0 0.0
    %3476 = vmatprep.subr.mxu0 0.0
    %3477 = vmatpush1.msra.mxu0 0.0
    %3478 = vmatprep.subr.mxu0 0.0
    %3479 = vmatpush1.msra.mxu0 0.0
    %3480 = vmatprep.subr.mxu0 0.0
    %3481 = vmatpush1.msra.mxu0 0.0
    %3482 = vmatprep.subr.mxu0 0.0
    %v3483 = vand.u32 %v3298, 4294901760
    %v3484 = vsub.f32 %v3298, %v3483
    %3485 = vmatpush1.msra.mxu0 %v3484
    %3486 = vmatprep.subr.mxu0 0.0
    %3487 = vmatpush2.msra.mxu0 0.0
    %3488 = vmatprep.subr.mxu0 0.0
    %3489 = vmatpush2.msra.mxu0 0.0
    %3490 = vmatprep.subr.mxu0 0.0
    %3491 = vmatpush2.msra.mxu0 0.0
    %3492 = vmatprep.subr.mxu0 0.0
    %3493 = vmatpush2.msra.mxu0 0.0
    %3494 = vmatprep.subr.mxu0 0.0
    %3495 = vmatpush2.msra.mxu0 0.0
    %3496 = vmatprep.subr.mxu0 0.0
    %3497 = vmatpush2.msra.mxu0 0.0
    %3498 = vmatprep.subr.mxu0 0.0
    %3499 = vmatpush2.msra.mxu0 0.0
    %3500 = vmatprep.subr.mxu0 0.0
    %3501 = vmatpush2.msra.mxu0 0.0
    %3502 = vmatprep.subr.mxu0 0.0
    %3503 = vmatpush2.msra.mxu0 0.0
    %3504 = vmatprep.subr.mxu0 0.0
    %3505 = vmatpush2.msra.mxu0 0.0
    %3506 = vmatprep.subr.mxu0 0.0
    %3507 = vmatpush2.msra.mxu0 0.0
    %3508 = vmatprep.subr.mxu0 0.0
    %3509 = vmatpush2.msra.mxu0 0.0
    %3510 = vmatprep.subr.mxu0 0.0
    %3511 = vmatpush2.msra.mxu0 0.0
    %3512 = vmatprep.subr.mxu0 0.0
    %3513 = vmatpush2.msra.mxu0 0.0
    %3514 = vmatprep.subr.mxu0 0.0
    %3515 = vmatpush2.msra.mxu0 0.0
    %3516 = vmatprep.subr.mxu0 0.0
    %3517 = vmatpush2.msra.mxu0 0.0
    %3518 = vmatprep.mubr.f32.mxu0 0.0
    %v3519 = vand.u32 %v3295, 4294901760
    %v3520 = vsub.f32 %v3295, %v3519
    %3521 = vmatmul.mubr.f32.gmra.mxu0 %v3520
    %v3522 = vpop.f32.mrf.mxu0
    %v3523 = vadd.f32 %v3449, %v3522
    %v3524 = vpop.f32.mrf.mxu0
    %3525 = vdwg.mxu0
    %3526 = vmatprep.subr.mxu0 0.0
    %3527 = vmatpush1.msra.mxu0 0.0
    %3528 = vmatprep.subr.mxu0 0.0
    %3529 = vmatpush1.msra.mxu0 0.0
    %3530 = vmatprep.subr.mxu0 0.0
    %3531 = vmatpush1.msra.mxu0 0.0
    %3532 = vmatprep.subr.mxu0 0.0
    %3533 = vmatpush1.msra.mxu0 0.0
    %3534 = vmatprep.subr.mxu0 0.0
    %3535 = vmatpush1.msra.mxu0 0.0
    %3536 = vmatprep.subr.mxu0 0.0
    %3537 = vmatpush1.msra.mxu0 0.0
    %3538 = vmatprep.subr.mxu0 0.0
    %3539 = vmatpush1.msra.mxu0 0.0
    %3540 = vmatprep.subr.mxu0 0.0
    %3541 = vmatpush1.msra.mxu0 0.0
    %3542 = vmatprep.subr.mxu0 0.0
    %3543 = vmatpush1.msra.mxu0 0.0
    %3544 = vmatprep.subr.mxu0 0.0
    %3545 = vmatpush1.msra.mxu0 0.0
    %3546 = vmatprep.subr.mxu0 0.0
    %3547 = vmatpush1.msra.mxu0 0.0
    %3548 = vmatprep.subr.mxu0 0.0
    %3549 = vmatpush1.msra.mxu0 0.0
    %3550 = vmatprep.subr.mxu0 0.0
    %3551 = vmatpush1.msra.mxu0 0.0
    %3552 = vmatprep.subr.mxu0 0.0
    %3553 = vmatpush1.msra.mxu0 0.0
    %3554 = vmatprep.subr.mxu0 0.0
    %3555 = vmatpush1.msra.mxu0 0.0
    %3556 = vmatprep.subr.mxu0 0.0
    %v3557 = vand.u32 %v3298, 4294901760
    %3558 = vmatpush1.msra.mxu0 %v3557
    %3559 = vmatprep.subr.mxu0 0.0
    %3560 = vmatpush2.msra.mxu0 0.0
    %3561 = vmatprep.subr.mxu0 0.0
    %3562 = vmatpush2.msra.mxu0 0.0
    %3563 = vmatprep.subr.mxu0 0.0
    %3564 = vmatpush2.msra.mxu0 0.0
    %3565 = vmatprep.subr.mxu0 0.0
    %3566 = vmatpush2.msra.mxu0 0.0
    %3567 = vmatprep.subr.mxu0 0.0
    %3568 = vmatpush2.msra.mxu0 0.0
    %3569 = vmatprep.subr.mxu0 0.0
    %3570 = vmatpush2.msra.mxu0 0.0
    %3571 = vmatprep.subr.mxu0 0.0
    %3572 = vmatpush2.msra.mxu0 0.0
    %3573 = vmatprep.subr.mxu0 0.0
    %3574 = vmatpush2.msra.mxu0 0.0
    %3575 = vmatprep.subr.mxu0 0.0
    %3576 = vmatpush2.msra.mxu0 0.0
    %3577 = vmatprep.subr.mxu0 0.0
    %3578 = vmatpush2.msra.mxu0 0.0
    %3579 = vmatprep.subr.mxu0 0.0
    %3580 = vmatpush2.msra.mxu0 0.0
    %3581 = vmatprep.subr.mxu0 0.0
    %3582 = vmatpush2.msra.mxu0 0.0
    %3583 = vmatprep.subr.mxu0 0.0
    %3584 = vmatpush2.msra.mxu0 0.0
    %3585 = vmatprep.subr.mxu0 0.0
    %3586 = vmatpush2.msra.mxu0 0.0
    %3587 = vmatprep.subr.mxu0 0.0
    %3588 = vmatpush2.msra.mxu0 0.0
    %3589 = vmatprep.subr.mxu0 0.0
    %3590 = vmatpush2.msra.mxu0 0.0
    %3591 = vmatprep.mubr.f32.mxu0 0.0
    %v3592 = vand.u32 %v3295, 4294901760
    %v3593 = vsub.f32 %v3295, %v3592
    %v3594 = vand.u32 %v3593, 4294901760
    %3595 = vmatmul.mubr.f32.gmra.mxu0 %v3594
    %v3596 = vpop.f32.mrf.mxu0
    %v3597 = vadd.f32 %v3523, %v3596
    %v3598 = vpop.f32.mrf.mxu0
    %3599 = vdwg.mxu0
    %3600 = vmatprep.subr.mxu0 0.0
    %3601 = vmatpush1.msra.mxu0 0.0
    %3602 = vmatprep.subr.mxu0 0.0
    %3603 = vmatpush1.msra.mxu0 0.0
    %3604 = vmatprep.subr.mxu0 0.0
    %3605 = vmatpush1.msra.mxu0 0.0
    %3606 = vmatprep.subr.mxu0 0.0
    %3607 = vmatpush1.msra.mxu0 0.0
    %3608 = vmatprep.subr.mxu0 0.0
    %3609 = vmatpush1.msra.mxu0 0.0
    %3610 = vmatprep.subr.mxu0 0.0
    %3611 = vmatpush1.msra.mxu0 0.0
    %3612 = vmatprep.subr.mxu0 0.0
    %3613 = vmatpush1.msra.mxu0 0.0
    %3614 = vmatprep.subr.mxu0 0.0
    %3615 = vmatpush1.msra.mxu0 0.0
    %3616 = vmatprep.subr.mxu0 0.0
    %3617 = vmatpush1.msra.mxu0 0.0
    %3618 = vmatprep.subr.mxu0 0.0
    %3619 = vmatpush1.msra.mxu0 0.0
    %3620 = vmatprep.subr.mxu0 0.0
    %3621 = vmatpush1.msra.mxu0 0.0
    %3622 = vmatprep.subr.mxu0 0.0
    %3623 = vmatpush1.msra.mxu0 0.0
    %3624 = vmatprep.subr.mxu0 0.0
    %3625 = vmatpush1.msra.mxu0 0.0
    %3626 = vmatprep.subr.mxu0 0.0
    %3627 = vmatpush1.msra.mxu0 0.0
    %3628 = vmatprep.subr.mxu0 0.0
    %3629 = vmatpush1.msra.mxu0 0.0
    %3630 = vmatprep.subr.mxu0 0.0
    %v3631 = vand.u32 %v3298, 4294901760
    %v3632 = vsub.f32 %v3298, %v3631
    %v3633 = vand.u32 %v3632, 4294901760
    %3634 = vmatpush1.msra.mxu0 %v3633
    %3635 = vmatprep.subr.mxu0 0.0
    %3636 = vmatpush2.msra.mxu0 0.0
    %3637 = vmatprep.subr.mxu0 0.0
    %3638 = vmatpush2.msra.mxu0 0.0
    %3639 = vmatprep.subr.mxu0 0.0
    %3640 = vmatpush2.msra.mxu0 0.0
    %3641 = vmatprep.subr.mxu0 0.0
    %3642 = vmatpush2.msra.mxu0 0.0
    %3643 = vmatprep.subr.mxu0 0.0
    %3644 = vmatpush2.msra.mxu0 0.0
    %3645 = vmatprep.subr.mxu0 0.0
    %3646 = vmatpush2.msra.mxu0 0.0
    %3647 = vmatprep.subr.mxu0 0.0
    %3648 = vmatpush2.msra.mxu0 0.0
    %3649 = vmatprep.subr.mxu0 0.0
    %3650 = vmatpush2.msra.mxu0 0.0
    %3651 = vmatprep.subr.mxu0 0.0
    %3652 = vmatpush2.msra.mxu0 0.0
    %3653 = vmatprep.subr.mxu0 0.0
    %3654 = vmatpush2.msra.mxu0 0.0
    %3655 = vmatprep.subr.mxu0 0.0
    %3656 = vmatpush2.msra.mxu0 0.0
    %3657 = vmatprep.subr.mxu0 0.0
    %3658 = vmatpush2.msra.mxu0 0.0
    %3659 = vmatprep.subr.mxu0 0.0
    %3660 = vmatpush2.msra.mxu0 0.0
    %3661 = vmatprep.subr.mxu0 0.0
    %3662 = vmatpush2.msra.mxu0 0.0
    %3663 = vmatprep.subr.mxu0 0.0
    %3664 = vmatpush2.msra.mxu0 0.0
    %3665 = vmatprep.subr.mxu0 0.0
    %3666 = vmatpush2.msra.mxu0 0.0
    %3667 = vmatprep.mubr.f32.mxu0 0.0
    %v3668 = vand.u32 %v3295, 4294901760
    %3669 = vmatmul.mubr.f32.gmra.mxu0 %v3668
    %v3670 = vpop.f32.mrf.mxu0
    %v3671 = vadd.f32 %v3597, %v3670
    %v3672 = vpop.f32.mrf.mxu0
    %3673 = vdwg.mxu0
    %3674 = vmatprep.subr.mxu0 0.0
    %3675 = vmatpush1.msra.mxu0 0.0
    %3676 = vmatprep.subr.mxu0 0.0
    %3677 = vmatpush1.msra.mxu0 0.0
    %3678 = vmatprep.subr.mxu0 0.0
    %3679 = vmatpush1.msra.mxu0 0.0
    %3680 = vmatprep.subr.mxu0 0.0
    %3681 = vmatpush1.msra.mxu0 0.0
    %3682 = vmatprep.subr.mxu0 0.0
    %3683 = vmatpush1.msra.mxu0 0.0
    %3684 = vmatprep.subr.mxu0 0.0
    %3685 = vmatpush1.msra.mxu0 0.0
    %3686 = vmatprep.subr.mxu0 0.0
    %3687 = vmatpush1.msra.mxu0 0.0
    %3688 = vmatprep.subr.mxu0 0.0
    %3689 = vmatpush1.msra.mxu0 0.0
    %3690 = vmatprep.subr.mxu0 0.0
    %3691 = vmatpush1.msra.mxu0 0.0
    %3692 = vmatprep.subr.mxu0 0.0
    %3693 = vmatpush1.msra.mxu0 0.0
    %3694 = vmatprep.subr.mxu0 0.0
    %3695 = vmatpush1.msra.mxu0 0.0
    %3696 = vmatprep.subr.mxu0 0.0
    %3697 = vmatpush1.msra.mxu0 0.0
    %3698 = vmatprep.subr.mxu0 0.0
    %3699 = vmatpush1.msra.mxu0 0.0
    %3700 = vmatprep.subr.mxu0 0.0
    %3701 = vmatpush1.msra.mxu0 0.0
    %3702 = vmatprep.subr.mxu0 0.0
    %3703 = vmatpush1.msra.mxu0 0.0
    %3704 = vmatprep.subr.mxu0 0.0
    %v3705 = vand.u32 %v3298, 4294901760
    %3706 = vmatpush1.msra.mxu0 %v3705
    %3707 = vmatprep.subr.mxu0 0.0
    %3708 = vmatpush2.msra.mxu0 0.0
    %3709 = vmatprep.subr.mxu0 0.0
    %3710 = vmatpush2.msra.mxu0 0.0
    %3711 = vmatprep.subr.mxu0 0.0
    %3712 = vmatpush2.msra.mxu0 0.0
    %3713 = vmatprep.subr.mxu0 0.0
    %3714 = vmatpush2.msra.mxu0 0.0
    %3715 = vmatprep.subr.mxu0 0.0
    %3716 = vmatpush2.msra.mxu0 0.0
    %3717 = vmatprep.subr.mxu0 0.0
    %3718 = vmatpush2.msra.mxu0 0.0
    %3719 = vmatprep.subr.mxu0 0.0
    %3720 = vmatpush2.msra.mxu0 0.0
    %3721 = vmatprep.subr.mxu0 0.0
    %3722 = vmatpush2.msra.mxu0 0.0
    %3723 = vmatprep.subr.mxu0 0.0
    %3724 = vmatpush2.msra.mxu0 0.0
    %3725 = vmatprep.subr.mxu0 0.0
    %3726 = vmatpush2.msra.mxu0 0.0
    %3727 = vmatprep.subr.mxu0 0.0
    %3728 = vmatpush2.msra.mxu0 0.0
    %3729 = vmatprep.subr.mxu0 0.0
    %3730 = vmatpush2.msra.mxu0 0.0
    %3731 = vmatprep.subr.mxu0 0.0
    %3732 = vmatpush2.msra.mxu0 0.0
    %3733 = vmatprep.subr.mxu0 0.0
    %3734 = vmatpush2.msra.mxu0 0.0
    %3735 = vmatprep.subr.mxu0 0.0
    %3736 = vmatpush2.msra.mxu0 0.0
    %3737 = vmatprep.subr.mxu0 0.0
    %3738 = vmatpush2.msra.mxu0 0.0
    %3739 = vmatprep.mubr.f32.mxu0 0.0
    %v3740 = vand.u32 %v3295, 4294901760
    %3741 = vmatmul.mubr.f32.gmra.mxu0 %v3740
    %v3742 = vpop.f32.mrf.mxu0
    %v3743 = vadd.f32 %v3671, %v3742
    %v3744 = vpop.f32.mrf.mxu0
    %3745 = vdwg.mxu0
    %v3746 = vtanh.pop %v3743
    %v3747 = vld [vmem:[#allocation2 + $0x60] sm:$0xff]
    %v3748 = vld [vmem:[#allocation2 + $0x68] sm:$0xf]
    %v3749 = vld [vmem:[#allocation2 + $0x6c] sm:$0x1]
    %v3750 = vlaneseq
    %v3751 = vshrl.u32 %v3750, 7
    %v3752 = vsub.s32 0, %v3751
    %v3753 = vrot.slane %v3749, %v3752
    %v3755 = vsel %vm980, %v3746, 0
    %v3758 = vsel %vm984, %v3748, 0
    %3760 = vmatprep.subr.mxu0 0.0
    %3761 = vmatpush1.msra.mxu0 0.0
    %3762 = vmatprep.subr.mxu0 0.0
    %3763 = vmatpush1.msra.mxu0 0.0
    %3764 = vmatprep.subr.mxu0 0.0
    %3765 = vmatpush1.msra.mxu0 0.0
    %3766 = vmatprep.subr.mxu0 0.0
    %3767 = vmatpush1.msra.mxu0 0.0
    %3768 = vmatprep.subr.mxu0 0.0
    %3769 = vmatpush1.msra.mxu0 0.0
    %3770 = vmatprep.subr.mxu0 0.0
    %3771 = vmatpush1.msra.mxu0 0.0
    %3772 = vmatprep.subr.mxu0 0.0
    %3773 = vmatpush1.msra.mxu0 0.0
    %3774 = vmatprep.subr.mxu0 0.0
    %3775 = vmatpush1.msra.mxu0 0.0
    %3776 = vmatprep.subr.mxu0 0.0
    %3777 = vmatpush1.msra.mxu0 0.0
    %3778 = vmatprep.subr.mxu0 0.0
    %3779 = vmatpush1.msra.mxu0 0.0
    %3780 = vmatprep.subr.mxu0 0.0
    %3781 = vmatpush1.msra.mxu0 0.0
    %3782 = vmatprep.subr.mxu0 0.0
    %3783 = vmatpush1.msra.mxu0 0.0
    %3784 = vmatprep.subr.mxu0 0.0
    %3785 = vmatpush1.msra.mxu0 0.0
    %3786 = vmatprep.subr.mxu0 0.0
    %3787 = vmatpush1.msra.mxu0 0.0
    %3788 = vmatprep.subr.mxu0 0.0
    %v3789 = vand.u32 %v3758, 4294901760
    %3790 = vmatpush1.msra.mxu0 %v3789
    %3791 = vmatprep.subr.mxu0 0.0
    %v3792 = vand.u32 %v3747, 4294901760
    %3793 = vmatpush1.msra.mxu0 %v3792
    %3794 = vmatprep.subr.mxu0 0.0
    %3795 = vmatpush2.msra.mxu0 0.0
    %3796 = vmatprep.subr.mxu0 0.0
    %3797 = vmatpush2.msra.mxu0 0.0
    %3798 = vmatprep.subr.mxu0 0.0
    %3799 = vmatpush2.msra.mxu0 0.0
    %3800 = vmatprep.subr.mxu0 0.0
    %3801 = vmatpush2.msra.mxu0 0.0
    %3802 = vmatprep.subr.mxu0 0.0
    %3803 = vmatpush2.msra.mxu0 0.0
    %3804 = vmatprep.subr.mxu0 0.0
    %3805 = vmatpush2.msra.mxu0 0.0
    %3806 = vmatprep.subr.mxu0 0.0
    %3807 = vmatpush2.msra.mxu0 0.0
    %3808 = vmatprep.subr.mxu0 0.0
    %3809 = vmatpush2.msra.mxu0 0.0
    %3810 = vmatprep.subr.mxu0 0.0
    %3811 = vmatpush2.msra.mxu0 0.0
    %3812 = vmatprep.subr.mxu0 0.0
    %3813 = vmatpush2.msra.mxu0 0.0
    %3814 = vmatprep.subr.mxu0 0.0
    %3815 = vmatpush2.msra.mxu0 0.0
    %3816 = vmatprep.subr.mxu0 0.0
    %3817 = vmatpush2.msra.mxu0 0.0
    %3818 = vmatprep.subr.mxu0 0.0
    %3819 = vmatpush2.msra.mxu0 0.0
    %3820 = vmatprep.subr.mxu0 0.0
    %3821 = vmatpush2.msra.mxu0 0.0
    %3822 = vmatprep.subr.mxu0 0.0
    %3823 = vmatpush2.msra.mxu0 0.0
    %3824 = vmatprep.subr.mxu0 0.0
    %3825 = vmatpush2.msra.mxu0 0.0
    %3826 = vmatprep.mubr.f32.mxu0 0.0
    %v3827 = vand.u32 %v3755, 4294901760
    %v3828 = vsub.f32 %v3755, %v3827
    %v3829 = vand.u32 %v3828, 4294901760
    %v3830 = vsub.f32 %v3828, %v3829
    %v3831 = vand.u32 %v3830, 4294901760
    %3832 = vmatmul.mubr.f32.gmra.mxu0 %v3831
    %v3833 = vpop.f32.mrf.mxu0
    %v3834 = vadd.f32 %v3753, %v3833
    %v3835 = vpop.f32.mrf.mxu0
    %3836 = vdwg.mxu0
    %3837 = vmatprep.subr.mxu0 0.0
    %3838 = vmatpush1.msra.mxu0 0.0
    %3839 = vmatprep.subr.mxu0 0.0
    %3840 = vmatpush1.msra.mxu0 0.0
    %3841 = vmatprep.subr.mxu0 0.0
    %3842 = vmatpush1.msra.mxu0 0.0
    %3843 = vmatprep.subr.mxu0 0.0
    %3844 = vmatpush1.msra.mxu0 0.0
    %3845 = vmatprep.subr.mxu0 0.0
    %3846 = vmatpush1.msra.mxu0 0.0
    %3847 = vmatprep.subr.mxu0 0.0
    %3848 = vmatpush1.msra.mxu0 0.0
    %3849 = vmatprep.subr.mxu0 0.0
    %3850 = vmatpush1.msra.mxu0 0.0
    %3851 = vmatprep.subr.mxu0 0.0
    %3852 = vmatpush1.msra.mxu0 0.0
    %3853 = vmatprep.subr.mxu0 0.0
    %3854 = vmatpush1.msra.mxu0 0.0
    %3855 = vmatprep.subr.mxu0 0.0
    %3856 = vmatpush1.msra.mxu0 0.0
    %3857 = vmatprep.subr.mxu0 0.0
    %3858 = vmatpush1.msra.mxu0 0.0
    %3859 = vmatprep.subr.mxu0 0.0
    %3860 = vmatpush1.msra.mxu0 0.0
    %3861 = vmatprep.subr.mxu0 0.0
    %3862 = vmatpush1.msra.mxu0 0.0
    %3863 = vmatprep.subr.mxu0 0.0
    %3864 = vmatpush1.msra.mxu0 0.0
    %3865 = vmatprep.subr.mxu0 0.0
    %v3866 = vand.u32 %v3758, 4294901760
    %v3867 = vsub.f32 %v3758, %v3866
    %v3868 = vand.u32 %v3867, 4294901760
    %v3869 = vsub.f32 %v3867, %v3868
    %v3870 = vand.u32 %v3869, 4294901760
    %3871 = vmatpush1.msra.mxu0 %v3870
    %3872 = vmatprep.subr.mxu0 0.0
    %v3873 = vand.u32 %v3747, 4294901760
    %v3874 = vsub.f32 %v3747, %v3873
    %v3875 = vand.u32 %v3874, 4294901760
    %v3876 = vsub.f32 %v3874, %v3875
    %v3877 = vand.u32 %v3876, 4294901760
    %3878 = vmatpush1.msra.mxu0 %v3877
    %3879 = vmatprep.subr.mxu0 0.0
    %3880 = vmatpush2.msra.mxu0 0.0
    %3881 = vmatprep.subr.mxu0 0.0
    %3882 = vmatpush2.msra.mxu0 0.0
    %3883 = vmatprep.subr.mxu0 0.0
    %3884 = vmatpush2.msra.mxu0 0.0
    %3885 = vmatprep.subr.mxu0 0.0
    %3886 = vmatpush2.msra.mxu0 0.0
    %3887 = vmatprep.subr.mxu0 0.0
    %3888 = vmatpush2.msra.mxu0 0.0
    %3889 = vmatprep.subr.mxu0 0.0
    %3890 = vmatpush2.msra.mxu0 0.0
    %3891 = vmatprep.subr.mxu0 0.0
    %3892 = vmatpush2.msra.mxu0 0.0
    %3893 = vmatprep.subr.mxu0 0.0
    %3894 = vmatpush2.msra.mxu0 0.0
    %3895 = vmatprep.subr.mxu0 0.0
    %3896 = vmatpush2.msra.mxu0 0.0
    %3897 = vmatprep.subr.mxu0 0.0
    %3898 = vmatpush2.msra.mxu0 0.0
    %3899 = vmatprep.subr.mxu0 0.0
    %3900 = vmatpush2.msra.mxu0 0.0
    %3901 = vmatprep.subr.mxu0 0.0
    %3902 = vmatpush2.msra.mxu0 0.0
    %3903 = vmatprep.subr.mxu0 0.0
    %3904 = vmatpush2.msra.mxu0 0.0
    %3905 = vmatprep.subr.mxu0 0.0
    %3906 = vmatpush2.msra.mxu0 0.0
    %3907 = vmatprep.subr.mxu0 0.0
    %3908 = vmatpush2.msra.mxu0 0.0
    %3909 = vmatprep.subr.mxu0 0.0
    %3910 = vmatpush2.msra.mxu0 0.0
    %3911 = vmatprep.mubr.f32.mxu0 0.0
    %v3912 = vand.u32 %v3755, 4294901760
    %3913 = vmatmul.mubr.f32.gmra.mxu0 %v3912
    %v3914 = vpop.f32.mrf.mxu0
    %v3915 = vadd.f32 %v3834, %v3914
    %v3916 = vpop.f32.mrf.mxu0
    %3917 = vdwg.mxu0
    %3918 = vmatprep.subr.mxu0 0.0
    %3919 = vmatpush1.msra.mxu0 0.0
    %3920 = vmatprep.subr.mxu0 0.0
    %3921 = vmatpush1.msra.mxu0 0.0
    %3922 = vmatprep.subr.mxu0 0.0
    %3923 = vmatpush1.msra.mxu0 0.0
    %3924 = vmatprep.subr.mxu0 0.0
    %3925 = vmatpush1.msra.mxu0 0.0
    %3926 = vmatprep.subr.mxu0 0.0
    %3927 = vmatpush1.msra.mxu0 0.0
    %3928 = vmatprep.subr.mxu0 0.0
    %3929 = vmatpush1.msra.mxu0 0.0
    %3930 = vmatprep.subr.mxu0 0.0
    %3931 = vmatpush1.msra.mxu0 0.0
    %3932 = vmatprep.subr.mxu0 0.0
    %3933 = vmatpush1.msra.mxu0 0.0
    %3934 = vmatprep.subr.mxu0 0.0
    %3935 = vmatpush1.msra.mxu0 0.0
    %3936 = vmatprep.subr.mxu0 0.0
    %3937 = vmatpush1.msra.mxu0 0.0
    %3938 = vmatprep.subr.mxu0 0.0
    %3939 = vmatpush1.msra.mxu0 0.0
    %3940 = vmatprep.subr.mxu0 0.0
    %3941 = vmatpush1.msra.mxu0 0.0
    %3942 = vmatprep.subr.mxu0 0.0
    %3943 = vmatpush1.msra.mxu0 0.0
    %3944 = vmatprep.subr.mxu0 0.0
    %3945 = vmatpush1.msra.mxu0 0.0
    %3946 = vmatprep.subr.mxu0 0.0
    %v3947 = vand.u32 %v3758, 4294901760
    %v3948 = vsub.f32 %v3758, %v3947
    %3949 = vmatpush1.msra.mxu0 %v3948
    %3950 = vmatprep.subr.mxu0 0.0
    %v3951 = vand.u32 %v3747, 4294901760
    %v3952 = vsub.f32 %v3747, %v3951
    %3953 = vmatpush1.msra.mxu0 %v3952
    %3954 = vmatprep.subr.mxu0 0.0
    %3955 = vmatpush2.msra.mxu0 0.0
    %3956 = vmatprep.subr.mxu0 0.0
    %3957 = vmatpush2.msra.mxu0 0.0
    %3958 = vmatprep.subr.mxu0 0.0
    %3959 = vmatpush2.msra.mxu0 0.0
    %3960 = vmatprep.subr.mxu0 0.0
    %3961 = vmatpush2.msra.mxu0 0.0
    %3962 = vmatprep.subr.mxu0 0.0
    %3963 = vmatpush2.msra.mxu0 0.0
    %3964 = vmatprep.subr.mxu0 0.0
    %3965 = vmatpush2.msra.mxu0 0.0
    %3966 = vmatprep.subr.mxu0 0.0
    %3967 = vmatpush2.msra.mxu0 0.0
    %3968 = vmatprep.subr.mxu0 0.0
    %3969 = vmatpush2.msra.mxu0 0.0
    %3970 = vmatprep.subr.mxu0 0.0
    %3971 = vmatpush2.msra.mxu0 0.0
    %3972 = vmatprep.subr.mxu0 0.0
    %3973 = vmatpush2.msra.mxu0 0.0
    %3974 = vmatprep.subr.mxu0 0.0
    %3975 = vmatpush2.msra.mxu0 0.0
    %3976 = vmatprep.subr.mxu0 0.0
    %3977 = vmatpush2.msra.mxu0 0.0
    %3978 = vmatprep.subr.mxu0 0.0
    %3979 = vmatpush2.msra.mxu0 0.0
    %3980 = vmatprep.subr.mxu0 0.0
    %3981 = vmatpush2.msra.mxu0 0.0
    %3982 = vmatprep.subr.mxu0 0.0
    %3983 = vmatpush2.msra.mxu0 0.0
    %3984 = vmatprep.subr.mxu0 0.0
    %3985 = vmatpush2.msra.mxu0 0.0
    %3986 = vmatprep.mubr.f32.mxu0 0.0
    %v3987 = vand.u32 %v3755, 4294901760
    %v3988 = vsub.f32 %v3755, %v3987
    %3989 = vmatmul.mubr.f32.gmra.mxu0 %v3988
    %v3990 = vpop.f32.mrf.mxu0
    %v3991 = vadd.f32 %v3915, %v3990
    %v3992 = vpop.f32.mrf.mxu0
    %3993 = vdwg.mxu0
    %3994 = vmatprep.subr.mxu0 0.0
    %3995 = vmatpush1.msra.mxu0 0.0
    %3996 = vmatprep.subr.mxu0 0.0
    %3997 = vmatpush1.msra.mxu0 0.0
    %3998 = vmatprep.subr.mxu0 0.0
    %3999 = vmatpush1.msra.mxu0 0.0
    %4000 = vmatprep.subr.mxu0 0.0
    %4001 = vmatpush1.msra.mxu0 0.0
    %4002 = vmatprep.subr.mxu0 0.0
    %4003 = vmatpush1.msra.mxu0 0.0
    %4004 = vmatprep.subr.mxu0 0.0
    %4005 = vmatpush1.msra.mxu0 0.0
    %4006 = vmatprep.subr.mxu0 0.0
    %4007 = vmatpush1.msra.mxu0 0.0
    %4008 = vmatprep.subr.mxu0 0.0
    %4009 = vmatpush1.msra.mxu0 0.0
    %4010 = vmatprep.subr.mxu0 0.0
    %4011 = vmatpush1.msra.mxu0 0.0
    %4012 = vmatprep.subr.mxu0 0.0
    %4013 = vmatpush1.msra.mxu0 0.0
    %4014 = vmatprep.subr.mxu0 0.0
    %4015 = vmatpush1.msra.mxu0 0.0
    %4016 = vmatprep.subr.mxu0 0.0
    %4017 = vmatpush1.msra.mxu0 0.0
    %4018 = vmatprep.subr.mxu0 0.0
    %4019 = vmatpush1.msra.mxu0 0.0
    %4020 = vmatprep.subr.mxu0 0.0
    %4021 = vmatpush1.msra.mxu0 0.0
    %4022 = vmatprep.subr.mxu0 0.0
    %v4023 = vand.u32 %v3758, 4294901760
    %4024 = vmatpush1.msra.mxu0 %v4023
    %4025 = vmatprep.subr.mxu0 0.0
    %v4026 = vand.u32 %v3747, 4294901760
    %4027 = vmatpush1.msra.mxu0 %v4026
    %4028 = vmatprep.subr.mxu0 0.0
    %4029 = vmatpush2.msra.mxu0 0.0
    %4030 = vmatprep.subr.mxu0 0.0
    %4031 = vmatpush2.msra.mxu0 0.0
    %4032 = vmatprep.subr.mxu0 0.0
    %4033 = vmatpush2.msra.mxu0 0.0
    %4034 = vmatprep.subr.mxu0 0.0
    %4035 = vmatpush2.msra.mxu0 0.0
    %4036 = vmatprep.subr.mxu0 0.0
    %4037 = vmatpush2.msra.mxu0 0.0
    %4038 = vmatprep.subr.mxu0 0.0
    %4039 = vmatpush2.msra.mxu0 0.0
    %4040 = vmatprep.subr.mxu0 0.0
    %4041 = vmatpush2.msra.mxu0 0.0
    %4042 = vmatprep.subr.mxu0 0.0
    %4043 = vmatpush2.msra.mxu0 0.0
    %4044 = vmatprep.subr.mxu0 0.0
    %4045 = vmatpush2.msra.mxu0 0.0
    %4046 = vmatprep.subr.mxu0 0.0
    %4047 = vmatpush2.msra.mxu0 0.0
    %4048 = vmatprep.subr.mxu0 0.0
    %4049 = vmatpush2.msra.mxu0 0.0
    %4050 = vmatprep.subr.mxu0 0.0
    %4051 = vmatpush2.msra.mxu0 0.0
    %4052 = vmatprep.subr.mxu0 0.0
    %4053 = vmatpush2.msra.mxu0 0.0
    %4054 = vmatprep.subr.mxu0 0.0
    %4055 = vmatpush2.msra.mxu0 0.0
    %4056 = vmatprep.subr.mxu0 0.0
    %4057 = vmatpush2.msra.mxu0 0.0
    %4058 = vmatprep.subr.mxu0 0.0
    %4059 = vmatpush2.msra.mxu0 0.0
    %4060 = vmatprep.mubr.f32.mxu0 0.0
    %v4061 = vand.u32 %v3755, 4294901760
    %v4062 = vsub.f32 %v3755, %v4061
    %v4063 = vand.u32 %v4062, 4294901760
    %4064 = vmatmul.mubr.f32.gmra.mxu0 %v4063
    %v4065 = vpop.f32.mrf.mxu0
    %v4066 = vadd.f32 %v3991, %v4065
    %v4067 = vpop.f32.mrf.mxu0
    %4068 = vdwg.mxu0
    %4069 = vmatprep.subr.mxu0 0.0
    %4070 = vmatpush1.msra.mxu0 0.0
    %4071 = vmatprep.subr.mxu0 0.0
    %4072 = vmatpush1.msra.mxu0 0.0
    %4073 = vmatprep.subr.mxu0 0.0
    %4074 = vmatpush1.msra.mxu0 0.0
    %4075 = vmatprep.subr.mxu0 0.0
    %4076 = vmatpush1.msra.mxu0 0.0
    %4077 = vmatprep.subr.mxu0 0.0
    %4078 = vmatpush1.msra.mxu0 0.0
    %4079 = vmatprep.subr.mxu0 0.0
    %4080 = vmatpush1.msra.mxu0 0.0
    %4081 = vmatprep.subr.mxu0 0.0
    %4082 = vmatpush1.msra.mxu0 0.0
    %4083 = vmatprep.subr.mxu0 0.0
    %4084 = vmatpush1.msra.mxu0 0.0
    %4085 = vmatprep.subr.mxu0 0.0
    %4086 = vmatpush1.msra.mxu0 0.0
    %4087 = vmatprep.subr.mxu0 0.0
    %4088 = vmatpush1.msra.mxu0 0.0
    %4089 = vmatprep.subr.mxu0 0.0
    %4090 = vmatpush1.msra.mxu0 0.0
    %4091 = vmatprep.subr.mxu0 0.0
    %4092 = vmatpush1.msra.mxu0 0.0
    %4093 = vmatprep.subr.mxu0 0.0
    %4094 = vmatpush1.msra.mxu0 0.0
    %4095 = vmatprep.subr.mxu0 0.0
    %4096 = vmatpush1.msra.mxu0 0.0
    %4097 = vmatprep.subr.mxu0 0.0
    %v4098 = vand.u32 %v3758, 4294901760
    %v4099 = vsub.f32 %v3758, %v4098
    %v4100 = vand.u32 %v4099, 4294901760
    %4101 = vmatpush1.msra.mxu0 %v4100
    %4102 = vmatprep.subr.mxu0 0.0
    %v4103 = vand.u32 %v3747, 4294901760
    %v4104 = vsub.f32 %v3747, %v4103
    %v4105 = vand.u32 %v4104, 4294901760
    %4106 = vmatpush1.msra.mxu0 %v4105
    %4107 = vmatprep.subr.mxu0 0.0
    %4108 = vmatpush2.msra.mxu0 0.0
    %4109 = vmatprep.subr.mxu0 0.0
    %4110 = vmatpush2.msra.mxu0 0.0
    %4111 = vmatprep.subr.mxu0 0.0
    %4112 = vmatpush2.msra.mxu0 0.0
    %4113 = vmatprep.subr.mxu0 0.0
    %4114 = vmatpush2.msra.mxu0 0.0
    %4115 = vmatprep.subr.mxu0 0.0
    %4116 = vmatpush2.msra.mxu0 0.0
    %4117 = vmatprep.subr.mxu0 0.0
    %4118 = vmatpush2.msra.mxu0 0.0
    %4119 = vmatprep.subr.mxu0 0.0
    %4120 = vmatpush2.msra.mxu0 0.0
    %4121 = vmatprep.subr.mxu0 0.0
    %4122 = vmatpush2.msra.mxu0 0.0
    %4123 = vmatprep.subr.mxu0 0.0
    %4124 = vmatpush2.msra.mxu0 0.0
    %4125 = vmatprep.subr.mxu0 0.0
    %4126 = vmatpush2.msra.mxu0 0.0
    %4127 = vmatprep.subr.mxu0 0.0
    %4128 = vmatpush2.msra.mxu0 0.0
    %4129 = vmatprep.subr.mxu0 0.0
    %4130 = vmatpush2.msra.mxu0 0.0
    %4131 = vmatprep.subr.mxu0 0.0
    %4132 = vmatpush2.msra.mxu0 0.0
    %4133 = vmatprep.subr.mxu0 0.0
    %4134 = vmatpush2.msra.mxu0 0.0
    %4135 = vmatprep.subr.mxu0 0.0
    %4136 = vmatpush2.msra.mxu0 0.0
    %4137 = vmatprep.subr.mxu0 0.0
    %4138 = vmatpush2.msra.mxu0 0.0
    %4139 = vmatprep.mubr.f32.mxu0 0.0
    %v4140 = vand.u32 %v3755, 4294901760
    %4141 = vmatmul.mubr.f32.gmra.mxu0 %v4140
    %v4142 = vpop.f32.mrf.mxu0
    %v4143 = vadd.f32 %v4066, %v4142
    %v4144 = vpop.f32.mrf.mxu0
    %4145 = vdwg.mxu0
    %4146 = vmatprep.subr.mxu0 0.0
    %4147 = vmatpush1.msra.mxu0 0.0
    %4148 = vmatprep.subr.mxu0 0.0
    %4149 = vmatpush1.msra.mxu0 0.0
    %4150 = vmatprep.subr.mxu0 0.0
    %4151 = vmatpush1.msra.mxu0 0.0
    %4152 = vmatprep.subr.mxu0 0.0
    %4153 = vmatpush1.msra.mxu0 0.0
    %4154 = vmatprep.subr.mxu0 0.0
    %4155 = vmatpush1.msra.mxu0 0.0
    %4156 = vmatprep.subr.mxu0 0.0
    %4157 = vmatpush1.msra.mxu0 0.0
    %4158 = vmatprep.subr.mxu0 0.0
    %4159 = vmatpush1.msra.mxu0 0.0
    %4160 = vmatprep.subr.mxu0 0.0
    %4161 = vmatpush1.msra.mxu0 0.0
    %4162 = vmatprep.subr.mxu0 0.0
    %4163 = vmatpush1.msra.mxu0 0.0
    %4164 = vmatprep.subr.mxu0 0.0
    %4165 = vmatpush1.msra.mxu0 0.0
    %4166 = vmatprep.subr.mxu0 0.0
    %4167 = vmatpush1.msra.mxu0 0.0
    %4168 = vmatprep.subr.mxu0 0.0
    %4169 = vmatpush1.msra.mxu0 0.0
    %4170 = vmatprep.subr.mxu0 0.0
    %4171 = vmatpush1.msra.mxu0 0.0
    %4172 = vmatprep.subr.mxu0 0.0
    %4173 = vmatpush1.msra.mxu0 0.0
    %4174 = vmatprep.subr.mxu0 0.0
    %v4175 = vand.u32 %v3758, 4294901760
    %4176 = vmatpush1.msra.mxu0 %v4175
    %4177 = vmatprep.subr.mxu0 0.0
    %v4178 = vand.u32 %v3747, 4294901760
    %4179 = vmatpush1.msra.mxu0 %v4178
    %4180 = vmatprep.subr.mxu0 0.0
    %4181 = vmatpush2.msra.mxu0 0.0
    %4182 = vmatprep.subr.mxu0 0.0
    %4183 = vmatpush2.msra.mxu0 0.0
    %4184 = vmatprep.subr.mxu0 0.0
    %4185 = vmatpush2.msra.mxu0 0.0
    %4186 = vmatprep.subr.mxu0 0.0
    %4187 = vmatpush2.msra.mxu0 0.0
    %4188 = vmatprep.subr.mxu0 0.0
    %4189 = vmatpush2.msra.mxu0 0.0
    %4190 = vmatprep.subr.mxu0 0.0
    %4191 = vmatpush2.msra.mxu0 0.0
    %4192 = vmatprep.subr.mxu0 0.0
    %4193 = vmatpush2.msra.mxu0 0.0
    %4194 = vmatprep.subr.mxu0 0.0
    %4195 = vmatpush2.msra.mxu0 0.0
    %4196 = vmatprep.subr.mxu0 0.0
    %4197 = vmatpush2.msra.mxu0 0.0
    %4198 = vmatprep.subr.mxu0 0.0
    %4199 = vmatpush2.msra.mxu0 0.0
    %4200 = vmatprep.subr.mxu0 0.0
    %4201 = vmatpush2.msra.mxu0 0.0
    %4202 = vmatprep.subr.mxu0 0.0
    %4203 = vmatpush2.msra.mxu0 0.0
    %4204 = vmatprep.subr.mxu0 0.0
    %4205 = vmatpush2.msra.mxu0 0.0
    %4206 = vmatprep.subr.mxu0 0.0
    %4207 = vmatpush2.msra.mxu0 0.0
    %4208 = vmatprep.subr.mxu0 0.0
    %4209 = vmatpush2.msra.mxu0 0.0
    %4210 = vmatprep.subr.mxu0 0.0
    %4211 = vmatpush2.msra.mxu0 0.0
    %4212 = vmatprep.mubr.f32.mxu0 0.0
    %v4213 = vand.u32 %v3755, 4294901760
    %4214 = vmatmul.mubr.f32.gmra.mxu0 %v4213
    %v4215 = vpop.f32.mrf.mxu0
    %v4216 = vadd.f32 %v4143, %v4215
    %v4217 = vpop.f32.mrf.mxu0
    %4218 = vdwg.mxu0
    %v4219 = vtanh.pop %v4216
    %v4220 = vld [vmem:[#allocation2 + $0x70] sm:$0xff]
    %v4221 = vld [vmem:[#allocation2 + $0x78] sm:$0xff]
    %v4222 = vld [vmem:[#allocation2 + $0x80] sm:$0xff]
    %v4223 = vld [vmem:[#allocation2 + $0x88] sm:$0x1]
    %v4224 = vlaneseq
    %v4225 = vshrl.u32 %v4224, 7
    %v4226 = vsub.s32 0, %v4225
    %v4227 = vrot.slane %v4223, %v4226
    %v4229 = vsel %vm496, %v4219, 0
    %4231 = vmatprep.subr.mxu0 0.0
    %4232 = vmatpush1.msra.mxu0 0.0
    %4233 = vmatprep.subr.mxu0 0.0
    %4234 = vmatpush1.msra.mxu0 0.0
    %4235 = vmatprep.subr.mxu0 0.0
    %4236 = vmatpush1.msra.mxu0 0.0
    %4237 = vmatprep.subr.mxu0 0.0
    %4238 = vmatpush1.msra.mxu0 0.0
    %4239 = vmatprep.subr.mxu0 0.0
    %4240 = vmatpush1.msra.mxu0 0.0
    %4241 = vmatprep.subr.mxu0 0.0
    %4242 = vmatpush1.msra.mxu0 0.0
    %4243 = vmatprep.subr.mxu0 0.0
    %4244 = vmatpush1.msra.mxu0 0.0
    %4245 = vmatprep.subr.mxu0 0.0
    %4246 = vmatpush1.msra.mxu0 0.0
    %4247 = vmatprep.subr.mxu0 0.0
    %4248 = vmatpush1.msra.mxu0 0.0
    %4249 = vmatprep.subr.mxu0 0.0
    %4250 = vmatpush1.msra.mxu0 0.0
    %4251 = vmatprep.subr.mxu0 0.0
    %4252 = vmatpush1.msra.mxu0 0.0
    %4253 = vmatprep.subr.mxu0 0.0
    %4254 = vmatpush1.msra.mxu0 0.0
    %4255 = vmatprep.subr.mxu0 0.0
    %4256 = vmatpush1.msra.mxu0 0.0
    %4257 = vmatprep.subr.mxu0 0.0
    %v4258 = vand.u32 %v4222, 4294901760
    %4259 = vmatpush1.msra.mxu0 %v4258
    %4260 = vmatprep.subr.mxu0 0.0
    %v4261 = vand.u32 %v4221, 4294901760
    %4262 = vmatpush1.msra.mxu0 %v4261
    %4263 = vmatprep.subr.mxu0 0.0
    %v4264 = vand.u32 %v4220, 4294901760
    %4265 = vmatpush1.msra.mxu0 %v4264
    %4266 = vmatprep.subr.mxu0 0.0
    %4267 = vmatpush2.msra.mxu0 0.0
    %4268 = vmatprep.subr.mxu0 0.0
    %4269 = vmatpush2.msra.mxu0 0.0
    %4270 = vmatprep.subr.mxu0 0.0
    %4271 = vmatpush2.msra.mxu0 0.0
    %4272 = vmatprep.subr.mxu0 0.0
    %4273 = vmatpush2.msra.mxu0 0.0
    %4274 = vmatprep.subr.mxu0 0.0
    %4275 = vmatpush2.msra.mxu0 0.0
    %4276 = vmatprep.subr.mxu0 0.0
    %4277 = vmatpush2.msra.mxu0 0.0
    %4278 = vmatprep.subr.mxu0 0.0
    %4279 = vmatpush2.msra.mxu0 0.0
    %4280 = vmatprep.subr.mxu0 0.0
    %4281 = vmatpush2.msra.mxu0 0.0
    %4282 = vmatprep.subr.mxu0 0.0
    %4283 = vmatpush2.msra.mxu0 0.0
    %4284 = vmatprep.subr.mxu0 0.0
    %4285 = vmatpush2.msra.mxu0 0.0
    %4286 = vmatprep.subr.mxu0 0.0
    %4287 = vmatpush2.msra.mxu0 0.0
    %4288 = vmatprep.subr.mxu0 0.0
    %4289 = vmatpush2.msra.mxu0 0.0
    %4290 = vmatprep.subr.mxu0 0.0
    %4291 = vmatpush2.msra.mxu0 0.0
    %4292 = vmatprep.subr.mxu0 0.0
    %4293 = vmatpush2.msra.mxu0 0.0
    %4294 = vmatprep.subr.mxu0 0.0
    %4295 = vmatpush2.msra.mxu0 0.0
    %4296 = vmatprep.subr.mxu0 0.0
    %4297 = vmatpush2.msra.mxu0 0.0
    %4298 = vmatprep.mubr.f32.mxu0 0.0
    %v4299 = vand.u32 %v4229, 4294901760
    %v4300 = vsub.f32 %v4229, %v4299
    %v4301 = vand.u32 %v4300, 4294901760
    %v4302 = vsub.f32 %v4300, %v4301
    %v4303 = vand.u32 %v4302, 4294901760
    %4304 = vmatmul.mubr.f32.gmra.mxu0 %v4303
    %v4305 = vpop.f32.mrf.mxu0
    %v4306 = vadd.f32 %v4227, %v4305
    %v4307 = vpop.f32.mrf.mxu0
    %4308 = vdwg.mxu0
    %4309 = vmatprep.subr.mxu0 0.0
    %4310 = vmatpush1.msra.mxu0 0.0
    %4311 = vmatprep.subr.mxu0 0.0
    %4312 = vmatpush1.msra.mxu0 0.0
    %4313 = vmatprep.subr.mxu0 0.0
    %4314 = vmatpush1.msra.mxu0 0.0
    %4315 = vmatprep.subr.mxu0 0.0
    %4316 = vmatpush1.msra.mxu0 0.0
    %4317 = vmatprep.subr.mxu0 0.0
    %4318 = vmatpush1.msra.mxu0 0.0
    %4319 = vmatprep.subr.mxu0 0.0
    %4320 = vmatpush1.msra.mxu0 0.0
    %4321 = vmatprep.subr.mxu0 0.0
    %4322 = vmatpush1.msra.mxu0 0.0
    %4323 = vmatprep.subr.mxu0 0.0
    %4324 = vmatpush1.msra.mxu0 0.0
    %4325 = vmatprep.subr.mxu0 0.0
    %4326 = vmatpush1.msra.mxu0 0.0
    %4327 = vmatprep.subr.mxu0 0.0
    %4328 = vmatpush1.msra.mxu0 0.0
    %4329 = vmatprep.subr.mxu0 0.0
    %4330 = vmatpush1.msra.mxu0 0.0
    %4331 = vmatprep.subr.mxu0 0.0
    %4332 = vmatpush1.msra.mxu0 0.0
    %4333 = vmatprep.subr.mxu0 0.0
    %4334 = vmatpush1.msra.mxu0 0.0
    %4335 = vmatprep.subr.mxu0 0.0
    %v4336 = vand.u32 %v4222, 4294901760
    %v4337 = vsub.f32 %v4222, %v4336
    %v4338 = vand.u32 %v4337, 4294901760
    %v4339 = vsub.f32 %v4337, %v4338
    %v4340 = vand.u32 %v4339, 4294901760
    %4341 = vmatpush1.msra.mxu0 %v4340
    %4342 = vmatprep.subr.mxu0 0.0
    %v4343 = vand.u32 %v4221, 4294901760
    %v4344 = vsub.f32 %v4221, %v4343
    %v4345 = vand.u32 %v4344, 4294901760
    %v4346 = vsub.f32 %v4344, %v4345
    %v4347 = vand.u32 %v4346, 4294901760
    %4348 = vmatpush1.msra.mxu0 %v4347
    %4349 = vmatprep.subr.mxu0 0.0
    %v4350 = vand.u32 %v4220, 4294901760
    %v4351 = vsub.f32 %v4220, %v4350
    %v4352 = vand.u32 %v4351, 4294901760
    %v4353 = vsub.f32 %v4351, %v4352
    %v4354 = vand.u32 %v4353, 4294901760
    %4355 = vmatpush1.msra.mxu0 %v4354
    %4356 = vmatprep.subr.mxu0 0.0
    %4357 = vmatpush2.msra.mxu0 0.0
    %4358 = vmatprep.subr.mxu0 0.0
    %4359 = vmatpush2.msra.mxu0 0.0
    %4360 = vmatprep.subr.mxu0 0.0
    %4361 = vmatpush2.msra.mxu0 0.0
    %4362 = vmatprep.subr.mxu0 0.0
    %4363 = vmatpush2.msra.mxu0 0.0
    %4364 = vmatprep.subr.mxu0 0.0
    %4365 = vmatpush2.msra.mxu0 0.0
    %4366 = vmatprep.subr.mxu0 0.0
    %4367 = vmatpush2.msra.mxu0 0.0
    %4368 = vmatprep.subr.mxu0 0.0
    %4369 = vmatpush2.msra.mxu0 0.0
    %4370 = vmatprep.subr.mxu0 0.0
    %4371 = vmatpush2.msra.mxu0 0.0
    %4372 = vmatprep.subr.mxu0 0.0
    %4373 = vmatpush2.msra.mxu0 0.0
    %4374 = vmatprep.subr.mxu0 0.0
    %4375 = vmatpush2.msra.mxu0 0.0
    %4376 = vmatprep.subr.mxu0 0.0
    %4377 = vmatpush2.msra.mxu0 0.0
    %4378 = vmatprep.subr.mxu0 0.0
    %4379 = vmatpush2.msra.mxu0 0.0
    %4380 = vmatprep.subr.mxu0 0.0
    %4381 = vmatpush2.msra.mxu0 0.0
    %4382 = vmatprep.subr.mxu0 0.0
    %4383 = vmatpush2.msra.mxu0 0.0
    %4384 = vmatprep.subr.mxu0 0.0
    %4385 = vmatpush2.msra.mxu0 0.0
    %4386 = vmatprep.subr.mxu0 0.0
    %4387 = vmatpush2.msra.mxu0 0.0
    %4388 = vmatprep.mubr.f32.mxu0 0.0
    %v4389 = vand.u32 %v4229, 4294901760
    %4390 = vmatmul.mubr.f32.gmra.mxu0 %v4389
    %v4391 = vpop.f32.mrf.mxu0
    %v4392 = vadd.f32 %v4306, %v4391
    %v4393 = vpop.f32.mrf.mxu0
    %4394 = vdwg.mxu0
    %4395 = vmatprep.subr.mxu0 0.0
    %4396 = vmatpush1.msra.mxu0 0.0
    %4397 = vmatprep.subr.mxu0 0.0
    %4398 = vmatpush1.msra.mxu0 0.0
    %4399 = vmatprep.subr.mxu0 0.0
    %4400 = vmatpush1.msra.mxu0 0.0
    %4401 = vmatprep.subr.mxu0 0.0
    %4402 = vmatpush1.msra.mxu0 0.0
    %4403 = vmatprep.subr.mxu0 0.0
    %4404 = vmatpush1.msra.mxu0 0.0
    %4405 = vmatprep.subr.mxu0 0.0
    %4406 = vmatpush1.msra.mxu0 0.0
    %4407 = vmatprep.subr.mxu0 0.0
    %4408 = vmatpush1.msra.mxu0 0.0
    %4409 = vmatprep.subr.mxu0 0.0
    %4410 = vmatpush1.msra.mxu0 0.0
    %4411 = vmatprep.subr.mxu0 0.0
    %4412 = vmatpush1.msra.mxu0 0.0
    %4413 = vmatprep.subr.mxu0 0.0
    %4414 = vmatpush1.msra.mxu0 0.0
    %4415 = vmatprep.subr.mxu0 0.0
    %4416 = vmatpush1.msra.mxu0 0.0
    %4417 = vmatprep.subr.mxu0 0.0
    %4418 = vmatpush1.msra.mxu0 0.0
    %4419 = vmatprep.subr.mxu0 0.0
    %4420 = vmatpush1.msra.mxu0 0.0
    %4421 = vmatprep.subr.mxu0 0.0
    %v4422 = vand.u32 %v4222, 4294901760
    %v4423 = vsub.f32 %v4222, %v4422
    %4424 = vmatpush1.msra.mxu0 %v4423
    %4425 = vmatprep.subr.mxu0 0.0
    %v4426 = vand.u32 %v4221, 4294901760
    %v4427 = vsub.f32 %v4221, %v4426
    %4428 = vmatpush1.msra.mxu0 %v4427
    %4429 = vmatprep.subr.mxu0 0.0
    %v4430 = vand.u32 %v4220, 4294901760
    %v4431 = vsub.f32 %v4220, %v4430
    %4432 = vmatpush1.msra.mxu0 %v4431
    %4433 = vmatprep.subr.mxu0 0.0
    %4434 = vmatpush2.msra.mxu0 0.0
    %4435 = vmatprep.subr.mxu0 0.0
    %4436 = vmatpush2.msra.mxu0 0.0
    %4437 = vmatprep.subr.mxu0 0.0
    %4438 = vmatpush2.msra.mxu0 0.0
    %4439 = vmatprep.subr.mxu0 0.0
    %4440 = vmatpush2.msra.mxu0 0.0
    %4441 = vmatprep.subr.mxu0 0.0
    %4442 = vmatpush2.msra.mxu0 0.0
    %4443 = vmatprep.subr.mxu0 0.0
    %4444 = vmatpush2.msra.mxu0 0.0
    %4445 = vmatprep.subr.mxu0 0.0
    %4446 = vmatpush2.msra.mxu0 0.0
    %4447 = vmatprep.subr.mxu0 0.0
    %4448 = vmatpush2.msra.mxu0 0.0
    %4449 = vmatprep.subr.mxu0 0.0
    %4450 = vmatpush2.msra.mxu0 0.0
    %4451 = vmatprep.subr.mxu0 0.0
    %4452 = vmatpush2.msra.mxu0 0.0
    %4453 = vmatprep.subr.mxu0 0.0
    %4454 = vmatpush2.msra.mxu0 0.0
    %4455 = vmatprep.subr.mxu0 0.0
    %4456 = vmatpush2.msra.mxu0 0.0
    %4457 = vmatprep.subr.mxu0 0.0
    %4458 = vmatpush2.msra.mxu0 0.0
    %4459 = vmatprep.subr.mxu0 0.0
    %4460 = vmatpush2.msra.mxu0 0.0
    %4461 = vmatprep.subr.mxu0 0.0
    %4462 = vmatpush2.msra.mxu0 0.0
    %4463 = vmatprep.subr.mxu0 0.0
    %4464 = vmatpush2.msra.mxu0 0.0
    %4465 = vmatprep.mubr.f32.mxu0 0.0
    %v4466 = vand.u32 %v4229, 4294901760
    %v4467 = vsub.f32 %v4229, %v4466
    %4468 = vmatmul.mubr.f32.gmra.mxu0 %v4467
    %v4469 = vpop.f32.mrf.mxu0
    %v4470 = vadd.f32 %v4392, %v4469
    %v4471 = vpop.f32.mrf.mxu0
    %4472 = vdwg.mxu0
    %4473 = vmatprep.subr.mxu0 0.0
    %4474 = vmatpush1.msra.mxu0 0.0
    %4475 = vmatprep.subr.mxu0 0.0
    %4476 = vmatpush1.msra.mxu0 0.0
    %4477 = vmatprep.subr.mxu0 0.0
    %4478 = vmatpush1.msra.mxu0 0.0
    %4479 = vmatprep.subr.mxu0 0.0
    %4480 = vmatpush1.msra.mxu0 0.0
    %4481 = vmatprep.subr.mxu0 0.0
    %4482 = vmatpush1.msra.mxu0 0.0
    %4483 = vmatprep.subr.mxu0 0.0
    %4484 = vmatpush1.msra.mxu0 0.0
    %4485 = vmatprep.subr.mxu0 0.0
    %4486 = vmatpush1.msra.mxu0 0.0
    %4487 = vmatprep.subr.mxu0 0.0
    %4488 = vmatpush1.msra.mxu0 0.0
    %4489 = vmatprep.subr.mxu0 0.0
    %4490 = vmatpush1.msra.mxu0 0.0
    %4491 = vmatprep.subr.mxu0 0.0
    %4492 = vmatpush1.msra.mxu0 0.0
    %4493 = vmatprep.subr.mxu0 0.0
    %4494 = vmatpush1.msra.mxu0 0.0
    %4495 = vmatprep.subr.mxu0 0.0
    %4496 = vmatpush1.msra.mxu0 0.0
    %4497 = vmatprep.subr.mxu0 0.0
    %4498 = vmatpush1.msra.mxu0 0.0
    %4499 = vmatprep.subr.mxu0 0.0
    %v4500 = vand.u32 %v4222, 4294901760
    %4501 = vmatpush1.msra.mxu0 %v4500
    %4502 = vmatprep.subr.mxu0 0.0
    %v4503 = vand.u32 %v4221, 4294901760
    %4504 = vmatpush1.msra.mxu0 %v4503
    %4505 = vmatprep.subr.mxu0 0.0
    %v4506 = vand.u32 %v4220, 4294901760
    %4507 = vmatpush1.msra.mxu0 %v4506
    %4508 = vmatprep.subr.mxu0 0.0
    %4509 = vmatpush2.msra.mxu0 0.0
    %4510 = vmatprep.subr.mxu0 0.0
    %4511 = vmatpush2.msra.mxu0 0.0
    %4512 = vmatprep.subr.mxu0 0.0
    %4513 = vmatpush2.msra.mxu0 0.0
    %4514 = vmatprep.subr.mxu0 0.0
    %4515 = vmatpush2.msra.mxu0 0.0
    %4516 = vmatprep.subr.mxu0 0.0
    %4517 = vmatpush2.msra.mxu0 0.0
    %4518 = vmatprep.subr.mxu0 0.0
    %4519 = vmatpush2.msra.mxu0 0.0
    %4520 = vmatprep.subr.mxu0 0.0
    %4521 = vmatpush2.msra.mxu0 0.0
    %4522 = vmatprep.subr.mxu0 0.0
    %4523 = vmatpush2.msra.mxu0 0.0
    %4524 = vmatprep.subr.mxu0 0.0
    %4525 = vmatpush2.msra.mxu0 0.0
    %4526 = vmatprep.subr.mxu0 0.0
    %4527 = vmatpush2.msra.mxu0 0.0
    %4528 = vmatprep.subr.mxu0 0.0
    %4529 = vmatpush2.msra.mxu0 0.0
    %4530 = vmatprep.subr.mxu0 0.0
    %4531 = vmatpush2.msra.mxu0 0.0
    %4532 = vmatprep.subr.mxu0 0.0
    %4533 = vmatpush2.msra.mxu0 0.0
    %4534 = vmatprep.subr.mxu0 0.0
    %4535 = vmatpush2.msra.mxu0 0.0
    %4536 = vmatprep.subr.mxu0 0.0
    %4537 = vmatpush2.msra.mxu0 0.0
    %4538 = vmatprep.subr.mxu0 0.0
    %4539 = vmatpush2.msra.mxu0 0.0
    %4540 = vmatprep.mubr.f32.mxu0 0.0
    %v4541 = vand.u32 %v4229, 4294901760
    %v4542 = vsub.f32 %v4229, %v4541
    %v4543 = vand.u32 %v4542, 4294901760
    %4544 = vmatmul.mubr.f32.gmra.mxu0 %v4543
    %v4545 = vpop.f32.mrf.mxu0
    %v4546 = vadd.f32 %v4470, %v4545
    %v4547 = vpop.f32.mrf.mxu0
    %4548 = vdwg.mxu0
    %4549 = vmatprep.subr.mxu0 0.0
    %4550 = vmatpush1.msra.mxu0 0.0
    %4551 = vmatprep.subr.mxu0 0.0
    %4552 = vmatpush1.msra.mxu0 0.0
    %4553 = vmatprep.subr.mxu0 0.0
    %4554 = vmatpush1.msra.mxu0 0.0
    %4555 = vmatprep.subr.mxu0 0.0
    %4556 = vmatpush1.msra.mxu0 0.0
    %4557 = vmatprep.subr.mxu0 0.0
    %4558 = vmatpush1.msra.mxu0 0.0
    %4559 = vmatprep.subr.mxu0 0.0
    %4560 = vmatpush1.msra.mxu0 0.0
    %4561 = vmatprep.subr.mxu0 0.0
    %4562 = vmatpush1.msra.mxu0 0.0
    %4563 = vmatprep.subr.mxu0 0.0
    %4564 = vmatpush1.msra.mxu0 0.0
    %4565 = vmatprep.subr.mxu0 0.0
    %4566 = vmatpush1.msra.mxu0 0.0
    %4567 = vmatprep.subr.mxu0 0.0
    %4568 = vmatpush1.msra.mxu0 0.0
    %4569 = vmatprep.subr.mxu0 0.0
    %4570 = vmatpush1.msra.mxu0 0.0
    %4571 = vmatprep.subr.mxu0 0.0
    %4572 = vmatpush1.msra.mxu0 0.0
    %4573 = vmatprep.subr.mxu0 0.0
    %4574 = vmatpush1.msra.mxu0 0.0
    %4575 = vmatprep.subr.mxu0 0.0
    %v4576 = vand.u32 %v4222, 4294901760
    %v4577 = vsub.f32 %v4222, %v4576
    %v4578 = vand.u32 %v4577, 4294901760
    %4579 = vmatpush1.msra.mxu0 %v4578
    %4580 = vmatprep.subr.mxu0 0.0
    %v4581 = vand.u32 %v4221, 4294901760
    %v4582 = vsub.f32 %v4221, %v4581
    %v4583 = vand.u32 %v4582, 4294901760
    %4584 = vmatpush1.msra.mxu0 %v4583
    %4585 = vmatprep.subr.mxu0 0.0
    %v4586 = vand.u32 %v4220, 4294901760
    %v4587 = vsub.f32 %v4220, %v4586
    %v4588 = vand.u32 %v4587, 4294901760
    %4589 = vmatpush1.msra.mxu0 %v4588
    %4590 = vmatprep.subr.mxu0 0.0
    %4591 = vmatpush2.msra.mxu0 0.0
    %4592 = vmatprep.subr.mxu0 0.0
    %4593 = vmatpush2.msra.mxu0 0.0
    %4594 = vmatprep.subr.mxu0 0.0
    %4595 = vmatpush2.msra.mxu0 0.0
    %4596 = vmatprep.subr.mxu0 0.0
    %4597 = vmatpush2.msra.mxu0 0.0
    %4598 = vmatprep.subr.mxu0 0.0
    %4599 = vmatpush2.msra.mxu0 0.0
    %4600 = vmatprep.subr.mxu0 0.0
    %4601 = vmatpush2.msra.mxu0 0.0
    %4602 = vmatprep.subr.mxu0 0.0
    %4603 = vmatpush2.msra.mxu0 0.0
    %4604 = vmatprep.subr.mxu0 0.0
    %4605 = vmatpush2.msra.mxu0 0.0
    %4606 = vmatprep.subr.mxu0 0.0
    %4607 = vmatpush2.msra.mxu0 0.0
    %4608 = vmatprep.subr.mxu0 0.0
    %4609 = vmatpush2.msra.mxu0 0.0
    %4610 = vmatprep.subr.mxu0 0.0
    %4611 = vmatpush2.msra.mxu0 0.0
    %4612 = vmatprep.subr.mxu0 0.0
    %4613 = vmatpush2.msra.mxu0 0.0
    %4614 = vmatprep.subr.mxu0 0.0
    %4615 = vmatpush2.msra.mxu0 0.0
    %4616 = vmatprep.subr.mxu0 0.0
    %4617 = vmatpush2.msra.mxu0 0.0
    %4618 = vmatprep.subr.mxu0 0.0
    %4619 = vmatpush2.msra.mxu0 0.0
    %4620 = vmatprep.subr.mxu0 0.0
    %4621 = vmatpush2.msra.mxu0 0.0
    %4622 = vmatprep.mubr.f32.mxu0 0.0
    %v4623 = vand.u32 %v4229, 4294901760
    %4624 = vmatmul.mubr.f32.gmra.mxu0 %v4623
    %v4625 = vpop.f32.mrf.mxu0
    %v4626 = vadd.f32 %v4546, %v4625
    %v4627 = vpop.f32.mrf.mxu0
    %4628 = vdwg.mxu0
    %4629 = vmatprep.subr.mxu0 0.0
    %4630 = vmatpush1.msra.mxu0 0.0
    %4631 = vmatprep.subr.mxu0 0.0
    %4632 = vmatpush1.msra.mxu0 0.0
    %4633 = vmatprep.subr.mxu0 0.0
    %4634 = vmatpush1.msra.mxu0 0.0
    %4635 = vmatprep.subr.mxu0 0.0
    %4636 = vmatpush1.msra.mxu0 0.0
    %4637 = vmatprep.subr.mxu0 0.0
    %4638 = vmatpush1.msra.mxu0 0.0
    %4639 = vmatprep.subr.mxu0 0.0
    %4640 = vmatpush1.msra.mxu0 0.0
    %4641 = vmatprep.subr.mxu0 0.0
    %4642 = vmatpush1.msra.mxu0 0.0
    %4643 = vmatprep.subr.mxu0 0.0
    %4644 = vmatpush1.msra.mxu0 0.0
    %4645 = vmatprep.subr.mxu0 0.0
    %4646 = vmatpush1.msra.mxu0 0.0
    %4647 = vmatprep.subr.mxu0 0.0
    %4648 = vmatpush1.msra.mxu0 0.0
    %4649 = vmatprep.subr.mxu0 0.0
    %4650 = vmatpush1.msra.mxu0 0.0
    %4651 = vmatprep.subr.mxu0 0.0
    %4652 = vmatpush1.msra.mxu0 0.0
    %4653 = vmatprep.subr.mxu0 0.0
    %4654 = vmatpush1.msra.mxu0 0.0
    %4655 = vmatprep.subr.mxu0 0.0
    %v4656 = vand.u32 %v4222, 4294901760
    %4657 = vmatpush1.msra.mxu0 %v4656
    %4658 = vmatprep.subr.mxu0 0.0
    %v4659 = vand.u32 %v4221, 4294901760
    %4660 = vmatpush1.msra.mxu0 %v4659
    %4661 = vmatprep.subr.mxu0 0.0
    %v4662 = vand.u32 %v4220, 4294901760
    %4663 = vmatpush1.msra.mxu0 %v4662
    %4664 = vmatprep.subr.mxu0 0.0
    %4665 = vmatpush2.msra.mxu0 0.0
    %4666 = vmatprep.subr.mxu0 0.0
    %4667 = vmatpush2.msra.mxu0 0.0
    %4668 = vmatprep.subr.mxu0 0.0
    %4669 = vmatpush2.msra.mxu0 0.0
    %4670 = vmatprep.subr.mxu0 0.0
    %4671 = vmatpush2.msra.mxu0 0.0
    %4672 = vmatprep.subr.mxu0 0.0
    %4673 = vmatpush2.msra.mxu0 0.0
    %4674 = vmatprep.subr.mxu0 0.0
    %4675 = vmatpush2.msra.mxu0 0.0
    %4676 = vmatprep.subr.mxu0 0.0
    %4677 = vmatpush2.msra.mxu0 0.0
    %4678 = vmatprep.subr.mxu0 0.0
    %4679 = vmatpush2.msra.mxu0 0.0
    %4680 = vmatprep.subr.mxu0 0.0
    %4681 = vmatpush2.msra.mxu0 0.0
    %4682 = vmatprep.subr.mxu0 0.0
    %4683 = vmatpush2.msra.mxu0 0.0
    %4684 = vmatprep.subr.mxu0 0.0
    %4685 = vmatpush2.msra.mxu0 0.0
    %4686 = vmatprep.subr.mxu0 0.0
    %4687 = vmatpush2.msra.mxu0 0.0
    %4688 = vmatprep.subr.mxu0 0.0
    %4689 = vmatpush2.msra.mxu0 0.0
    %4690 = vmatprep.subr.mxu0 0.0
    %4691 = vmatpush2.msra.mxu0 0.0
    %4692 = vmatprep.subr.mxu0 0.0
    %4693 = vmatpush2.msra.mxu0 0.0
    %4694 = vmatprep.subr.mxu0 0.0
    %4695 = vmatpush2.msra.mxu0 0.0
    %4696 = vmatprep.mubr.f32.mxu0 0.0
    %v4697 = vand.u32 %v4229, 4294901760
    %4698 = vmatmul.mubr.f32.gmra.mxu0 %v4697
    %v4699 = vpop.f32.mrf.mxu0
    %v4700 = vadd.f32 %v4626, %v4699
    %v4701 = vpop.f32.mrf.mxu0
    %4702 = vdwg.mxu0
    %v4703 = vmul.f32 %v4700, %v4700
    %v4704 = vsel %vm33, %v4703, 0.0
    %4705 = vadd.xlane.f32.xlu0 %v4704
    %v4706 = vpop.xlane.xlu0 %4705
    %v4707 = vrsqrt.pop %v4706
    %v4708 = vmul.f32 %v4707, 0.01
    %v4709 = vmul.f32 %v4700, %v4708
    %v4710 = vadd.f32 %v26, %v4709
    %v4711 = vld [vmem:[#allocation2 + $0x90] sm:$0x7]
    %v4712 = vld [vmem:[#allocation2 + $0x93] sm:$0x1]
    %v4713 = vlaneseq
    %v4714 = vshrl.u32 %v4713, 7
    %v4715 = vsub.s32 0, %v4714
    %v4716 = vrot.slane %v4712, %v4715
    %v4718 = vsel %vm33, %v4710, 0
    %v4721 = vsel %vm37, %v4711, 0
    %4723 = vmatprep.subr.mxu0 0.0
    %4724 = vmatpush1.msra.mxu0 0.0
    %4725 = vmatprep.subr.mxu0 0.0
    %4726 = vmatpush1.msra.mxu0 0.0
    %4727 = vmatprep.subr.mxu0 0.0
    %4728 = vmatpush1.msra.mxu0 0.0
    %4729 = vmatprep.subr.mxu0 0.0
    %4730 = vmatpush1.msra.mxu0 0.0
    %4731 = vmatprep.subr.mxu0 0.0
    %4732 = vmatpush1.msra.mxu0 0.0
    %4733 = vmatprep.subr.mxu0 0.0
    %4734 = vmatpush1.msra.mxu0 0.0
    %4735 = vmatprep.subr.mxu0 0.0
    %4736 = vmatpush1.msra.mxu0 0.0
    %4737 = vmatprep.subr.mxu0 0.0
    %4738 = vmatpush1.msra.mxu0 0.0
    %4739 = vmatprep.subr.mxu0 0.0
    %4740 = vmatpush1.msra.mxu0 0.0
    %4741 = vmatprep.subr.mxu0 0.0
    %4742 = vmatpush1.msra.mxu0 0.0
    %4743 = vmatprep.subr.mxu0 0.0
    %4744 = vmatpush1.msra.mxu0 0.0
    %4745 = vmatprep.subr.mxu0 0.0
    %4746 = vmatpush1.msra.mxu0 0.0
    %4747 = vmatprep.subr.mxu0 0.0
    %4748 = vmatpush1.msra.mxu0 0.0
    %4749 = vmatprep.subr.mxu0 0.0
    %4750 = vmatpush1.msra.mxu0 0.0
    %4751 = vmatprep.subr.mxu0 0.0
    %4752 = vmatpush1.msra.mxu0 0.0
    %4753 = vmatprep.subr.mxu0 0.0
    %v4754 = vand.u32 %v4721, 4294901760
    %4755 = vmatpush1.msra.mxu0 %v4754
    %4756 = vmatprep.subr.mxu0 0.0
    %4757 = vmatpush2.msra.mxu0 0.0
    %4758 = vmatprep.subr.mxu0 0.0
    %4759 = vmatpush2.msra.mxu0 0.0
    %4760 = vmatprep.subr.mxu0 0.0
    %4761 = vmatpush2.msra.mxu0 0.0
    %4762 = vmatprep.subr.mxu0 0.0
    %4763 = vmatpush2.msra.mxu0 0.0
    %4764 = vmatprep.subr.mxu0 0.0
    %4765 = vmatpush2.msra.mxu0 0.0
    %4766 = vmatprep.subr.mxu0 0.0
    %4767 = vmatpush2.msra.mxu0 0.0
    %4768 = vmatprep.subr.mxu0 0.0
    %4769 = vmatpush2.msra.mxu0 0.0
    %4770 = vmatprep.subr.mxu0 0.0
    %4771 = vmatpush2.msra.mxu0 0.0
    %4772 = vmatprep.subr.mxu0 0.0
    %4773 = vmatpush2.msra.mxu0 0.0
    %4774 = vmatprep.subr.mxu0 0.0
    %4775 = vmatpush2.msra.mxu0 0.0
    %4776 = vmatprep.subr.mxu0 0.0
    %4777 = vmatpush2.msra.mxu0 0.0
    %4778 = vmatprep.subr.mxu0 0.0
    %4779 = vmatpush2.msra.mxu0 0.0
    %4780 = vmatprep.subr.mxu0 0.0
    %4781 = vmatpush2.msra.mxu0 0.0
    %4782 = vmatprep.subr.mxu0 0.0
    %4783 = vmatpush2.msra.mxu0 0.0
    %4784 = vmatprep.subr.mxu0 0.0
    %4785 = vmatpush2.msra.mxu0 0.0
    %4786 = vmatprep.subr.mxu0 0.0
    %4787 = vmatpush2.msra.mxu0 0.0
    %4788 = vmatprep.mubr.f32.mxu0 0.0
    %v4789 = vand.u32 %v4718, 4294901760
    %v4790 = vsub.f32 %v4718, %v4789
    %v4791 = vand.u32 %v4790, 4294901760
    %v4792 = vsub.f32 %v4790, %v4791
    %v4793 = vand.u32 %v4792, 4294901760
    %4794 = vmatmul.mubr.f32.gmra.mxu0 %v4793
    %v4795 = vpop.f32.mrf.mxu0
    %v4796 = vadd.f32 %v4716, %v4795
    %v4797 = vpop.f32.mrf.mxu0
    %4798 = vdwg.mxu0
    %4799 = vmatprep.subr.mxu0 0.0
    %4800 = vmatpush1.msra.mxu0 0.0
    %4801 = vmatprep.subr.mxu0 0.0
    %4802 = vmatpush1.msra.mxu0 0.0
    %4803 = vmatprep.subr.mxu0 0.0
    %4804 = vmatpush1.msra.mxu0 0.0
    %4805 = vmatprep.subr.mxu0 0.0
    %4806 = vmatpush1.msra.mxu0 0.0
    %4807 = vmatprep.subr.mxu0 0.0
    %4808 = vmatpush1.msra.mxu0 0.0
    %4809 = vmatprep.subr.mxu0 0.0
    %4810 = vmatpush1.msra.mxu0 0.0
    %4811 = vmatprep.subr.mxu0 0.0
    %4812 = vmatpush1.msra.mxu0 0.0
    %4813 = vmatprep.subr.mxu0 0.0
    %4814 = vmatpush1.msra.mxu0 0.0
    %4815 = vmatprep.subr.mxu0 0.0
    %4816 = vmatpush1.msra.mxu0 0.0
    %4817 = vmatprep.subr.mxu0 0.0
    %4818 = vmatpush1.msra.mxu0 0.0
    %4819 = vmatprep.subr.mxu0 0.0
    %4820 = vmatpush1.msra.mxu0 0.0
    %4821 = vmatprep.subr.mxu0 0.0
    %4822 = vmatpush1.msra.mxu0 0.0
    %4823 = vmatprep.subr.mxu0 0.0
    %4824 = vmatpush1.msra.mxu0 0.0
    %4825 = vmatprep.subr.mxu0 0.0
    %4826 = vmatpush1.msra.mxu0 0.0
    %4827 = vmatprep.subr.mxu0 0.0
    %4828 = vmatpush1.msra.mxu0 0.0
    %4829 = vmatprep.subr.mxu0 0.0
    %v4830 = vand.u32 %v4721, 4294901760
    %v4831 = vsub.f32 %v4721, %v4830
    %v4832 = vand.u32 %v4831, 4294901760
    %v4833 = vsub.f32 %v4831, %v4832
    %v4834 = vand.u32 %v4833, 4294901760
    %4835 = vmatpush1.msra.mxu0 %v4834
    %4836 = vmatprep.subr.mxu0 0.0
    %4837 = vmatpush2.msra.mxu0 0.0
    %4838 = vmatprep.subr.mxu0 0.0
    %4839 = vmatpush2.msra.mxu0 0.0
    %4840 = vmatprep.subr.mxu0 0.0
    %4841 = vmatpush2.msra.mxu0 0.0
    %4842 = vmatprep.subr.mxu0 0.0
    %4843 = vmatpush2.msra.mxu0 0.0
    %4844 = vmatprep.subr.mxu0 0.0
    %4845 = vmatpush2.msra.mxu0 0.0
    %4846 = vmatprep.subr.mxu0 0.0
    %4847 = vmatpush2.msra.mxu0 0.0
    %4848 = vmatprep.subr.mxu0 0.0
    %4849 = vmatpush2.msra.mxu0 0.0
    %4850 = vmatprep.subr.mxu0 0.0
    %4851 = vmatpush2.msra.mxu0 0.0
    %4852 = vmatprep.subr.mxu0 0.0
    %4853 = vmatpush2.msra.mxu0 0.0
    %4854 = vmatprep.subr.mxu0 0.0
    %4855 = vmatpush2.msra.mxu0 0.0
    %4856 = vmatprep.subr.mxu0 0.0
    %4857 = vmatpush2.msra.mxu0 0.0
    %4858 = vmatprep.subr.mxu0 0.0
    %4859 = vmatpush2.msra.mxu0 0.0
    %4860 = vmatprep.subr.mxu0 0.0
    %4861 = vmatpush2.msra.mxu0 0.0
    %4862 = vmatprep.subr.mxu0 0.0
    %4863 = vmatpush2.msra.mxu0 0.0
    %4864 = vmatprep.subr.mxu0 0.0
    %4865 = vmatpush2.msra.mxu0 0.0
    %4866 = vmatprep.subr.mxu0 0.0
    %4867 = vmatpush2.msra.mxu0 0.0
    %4868 = vmatprep.mubr.f32.mxu0 0.0
    %v4869 = vand.u32 %v4718, 4294901760
    %4870 = vmatmul.mubr.f32.gmra.mxu0 %v4869
    %v4871 = vpop.f32.mrf.mxu0
    %v4872 = vadd.f32 %v4796, %v4871
    %v4873 = vpop.f32.mrf.mxu0
    %4874 = vdwg.mxu0
    %4875 = vmatprep.subr.mxu0 0.0
    %4876 = vmatpush1.msra.mxu0 0.0
    %4877 = vmatprep.subr.mxu0 0.0
    %4878 = vmatpush1.msra.mxu0 0.0
    %4879 = vmatprep.subr.mxu0 0.0
    %4880 = vmatpush1.msra.mxu0 0.0
    %4881 = vmatprep.subr.mxu0 0.0
    %4882 = vmatpush1.msra.mxu0 0.0
    %4883 = vmatprep.subr.mxu0 0.0
    %4884 = vmatpush1.msra.mxu0 0.0
    %4885 = vmatprep.subr.mxu0 0.0
    %4886 = vmatpush1.msra.mxu0 0.0
    %4887 = vmatprep.subr.mxu0 0.0
    %4888 = vmatpush1.msra.mxu0 0.0
    %4889 = vmatprep.subr.mxu0 0.0
    %4890 = vmatpush1.msra.mxu0 0.0
    %4891 = vmatprep.subr.mxu0 0.0
    %4892 = vmatpush1.msra.mxu0 0.0
    %4893 = vmatprep.subr.mxu0 0.0
    %4894 = vmatpush1.msra.mxu0 0.0
    %4895 = vmatprep.subr.mxu0 0.0
    %4896 = vmatpush1.msra.mxu0 0.0
    %4897 = vmatprep.subr.mxu0 0.0
    %4898 = vmatpush1.msra.mxu0 0.0
    %4899 = vmatprep.subr.mxu0 0.0
    %4900 = vmatpush1.msra.mxu0 0.0
    %4901 = vmatprep.subr.mxu0 0.0
    %4902 = vmatpush1.msra.mxu0 0.0
    %4903 = vmatprep.subr.mxu0 0.0
    %4904 = vmatpush1.msra.mxu0 0.0
    %4905 = vmatprep.subr.mxu0 0.0
    %v4906 = vand.u32 %v4721, 4294901760
    %v4907 = vsub.f32 %v4721, %v4906
    %4908 = vmatpush1.msra.mxu0 %v4907
    %4909 = vmatprep.subr.mxu0 0.0
    %4910 = vmatpush2.msra.mxu0 0.0
    %4911 = vmatprep.subr.mxu0 0.0
    %4912 = vmatpush2.msra.mxu0 0.0
    %4913 = vmatprep.subr.mxu0 0.0
    %4914 = vmatpush2.msra.mxu0 0.0
    %4915 = vmatprep.subr.mxu0 0.0
    %4916 = vmatpush2.msra.mxu0 0.0
    %4917 = vmatprep.subr.mxu0 0.0
    %4918 = vmatpush2.msra.mxu0 0.0
    %4919 = vmatprep.subr.mxu0 0.0
    %4920 = vmatpush2.msra.mxu0 0.0
    %4921 = vmatprep.subr.mxu0 0.0
    %4922 = vmatpush2.msra.mxu0 0.0
    %4923 = vmatprep.subr.mxu0 0.0
    %4924 = vmatpush2.msra.mxu0 0.0
    %4925 = vmatprep.subr.mxu0 0.0
    %4926 = vmatpush2.msra.mxu0 0.0
    %4927 = vmatprep.subr.mxu0 0.0
    %4928 = vmatpush2.msra.mxu0 0.0
    %4929 = vmatprep.subr.mxu0 0.0
    %4930 = vmatpush2.msra.mxu0 0.0
    %4931 = vmatprep.subr.mxu0 0.0
    %4932 = vmatpush2.msra.mxu0 0.0
    %4933 = vmatprep.subr.mxu0 0.0
    %4934 = vmatpush2.msra.mxu0 0.0
    %4935 = vmatprep.subr.mxu0 0.0
    %4936 = vmatpush2.msra.mxu0 0.0
    %4937 = vmatprep.subr.mxu0 0.0
    %4938 = vmatpush2.msra.mxu0 0.0
    %4939 = vmatprep.subr.mxu0 0.0
    %4940 = vmatpush2.msra.mxu0 0.0
    %4941 = vmatprep.mubr.f32.mxu0 0.0
    %v4942 = vand.u32 %v4718, 4294901760
    %v4943 = vsub.f32 %v4718, %v4942
    %4944 = vmatmul.mubr.f32.gmra.mxu0 %v4943
    %v4945 = vpop.f32.mrf.mxu0
    %v4946 = vadd.f32 %v4872, %v4945
    %v4947 = vpop.f32.mrf.mxu0
    %4948 = vdwg.mxu0
    %4949 = vmatprep.subr.mxu0 0.0
    %4950 = vmatpush1.msra.mxu0 0.0
    %4951 = vmatprep.subr.mxu0 0.0
    %4952 = vmatpush1.msra.mxu0 0.0
    %4953 = vmatprep.subr.mxu0 0.0
    %4954 = vmatpush1.msra.mxu0 0.0
    %4955 = vmatprep.subr.mxu0 0.0
    %4956 = vmatpush1.msra.mxu0 0.0
    %4957 = vmatprep.subr.mxu0 0.0
    %4958 = vmatpush1.msra.mxu0 0.0
    %4959 = vmatprep.subr.mxu0 0.0
    %4960 = vmatpush1.msra.mxu0 0.0
    %4961 = vmatprep.subr.mxu0 0.0
    %4962 = vmatpush1.msra.mxu0 0.0
    %4963 = vmatprep.subr.mxu0 0.0
    %4964 = vmatpush1.msra.mxu0 0.0
    %4965 = vmatprep.subr.mxu0 0.0
    %4966 = vmatpush1.msra.mxu0 0.0
    %4967 = vmatprep.subr.mxu0 0.0
    %4968 = vmatpush1.msra.mxu0 0.0
    %4969 = vmatprep.subr.mxu0 0.0
    %4970 = vmatpush1.msra.mxu0 0.0
    %4971 = vmatprep.subr.mxu0 0.0
    %4972 = vmatpush1.msra.mxu0 0.0
    %4973 = vmatprep.subr.mxu0 0.0
    %4974 = vmatpush1.msra.mxu0 0.0
    %4975 = vmatprep.subr.mxu0 0.0
    %4976 = vmatpush1.msra.mxu0 0.0
    %4977 = vmatprep.subr.mxu0 0.0
    %4978 = vmatpush1.msra.mxu0 0.0
    %4979 = vmatprep.subr.mxu0 0.0
    %v4980 = vand.u32 %v4721, 4294901760
    %4981 = vmatpush1.msra.mxu0 %v4980
    %4982 = vmatprep.subr.mxu0 0.0
    %4983 = vmatpush2.msra.mxu0 0.0
    %4984 = vmatprep.subr.mxu0 0.0
    %4985 = vmatpush2.msra.mxu0 0.0
    %4986 = vmatprep.subr.mxu0 0.0
    %4987 = vmatpush2.msra.mxu0 0.0
    %4988 = vmatprep.subr.mxu0 0.0
    %4989 = vmatpush2.msra.mxu0 0.0
    %4990 = vmatprep.subr.mxu0 0.0
    %4991 = vmatpush2.msra.mxu0 0.0
    %4992 = vmatprep.subr.mxu0 0.0
    %4993 = vmatpush2.msra.mxu0 0.0
    %4994 = vmatprep.subr.mxu0 0.0
    %4995 = vmatpush2.msra.mxu0 0.0
    %4996 = vmatprep.subr.mxu0 0.0
    %4997 = vmatpush2.msra.mxu0 0.0
    %4998 = vmatprep.subr.mxu0 0.0
    %4999 = vmatpush2.msra.mxu0 0.0
    %5000 = vmatprep.subr.mxu0 0.0
    %5001 = vmatpush2.msra.mxu0 0.0
    %5002 = vmatprep.subr.mxu0 0.0
    %5003 = vmatpush2.msra.mxu0 0.0
    %5004 = vmatprep.subr.mxu0 0.0
    %5005 = vmatpush2.msra.mxu0 0.0
    %5006 = vmatprep.subr.mxu0 0.0
    %5007 = vmatpush2.msra.mxu0 0.0
    %5008 = vmatprep.subr.mxu0 0.0
    %5009 = vmatpush2.msra.mxu0 0.0
    %5010 = vmatprep.subr.mxu0 0.0
    %5011 = vmatpush2.msra.mxu0 0.0
    %5012 = vmatprep.subr.mxu0 0.0
    %5013 = vmatpush2.msra.mxu0 0.0
    %5014 = vmatprep.mubr.f32.mxu0 0.0
    %v5015 = vand.u32 %v4718, 4294901760
    %v5016 = vsub.f32 %v4718, %v5015
    %v5017 = vand.u32 %v5016, 4294901760
    %5018 = vmatmul.mubr.f32.gmra.mxu0 %v5017
    %v5019 = vpop.f32.mrf.mxu0
    %v5020 = vadd.f32 %v4946, %v5019
    %v5021 = vpop.f32.mrf.mxu0
    %5022 = vdwg.mxu0
    %5023 = vmatprep.subr.mxu0 0.0
    %5024 = vmatpush1.msra.mxu0 0.0
    %5025 = vmatprep.subr.mxu0 0.0
    %5026 = vmatpush1.msra.mxu0 0.0
    %5027 = vmatprep.subr.mxu0 0.0
    %5028 = vmatpush1.msra.mxu0 0.0
    %5029 = vmatprep.subr.mxu0 0.0
    %5030 = vmatpush1.msra.mxu0 0.0
    %5031 = vmatprep.subr.mxu0 0.0
    %5032 = vmatpush1.msra.mxu0 0.0
    %5033 = vmatprep.subr.mxu0 0.0
    %5034 = vmatpush1.msra.mxu0 0.0
    %5035 = vmatprep.subr.mxu0 0.0
    %5036 = vmatpush1.msra.mxu0 0.0
    %5037 = vmatprep.subr.mxu0 0.0
    %5038 = vmatpush1.msra.mxu0 0.0
    %5039 = vmatprep.subr.mxu0 0.0
    %5040 = vmatpush1.msra.mxu0 0.0
    %5041 = vmatprep.subr.mxu0 0.0
    %5042 = vmatpush1.msra.mxu0 0.0
    %5043 = vmatprep.subr.mxu0 0.0
    %5044 = vmatpush1.msra.mxu0 0.0
    %5045 = vmatprep.subr.mxu0 0.0
    %5046 = vmatpush1.msra.mxu0 0.0
    %5047 = vmatprep.subr.mxu0 0.0
    %5048 = vmatpush1.msra.mxu0 0.0
    %5049 = vmatprep.subr.mxu0 0.0
    %5050 = vmatpush1.msra.mxu0 0.0
    %5051 = vmatprep.subr.mxu0 0.0
    %5052 = vmatpush1.msra.mxu0 0.0
    %5053 = vmatprep.subr.mxu0 0.0
    %v5054 = vand.u32 %v4721, 4294901760
    %v5055 = vsub.f32 %v4721, %v5054
    %v5056 = vand.u32 %v5055, 4294901760
    %5057 = vmatpush1.msra.mxu0 %v5056
    %5058 = vmatprep.subr.mxu0 0.0
    %5059 = vmatpush2.msra.mxu0 0.0
    %5060 = vmatprep.subr.mxu0 0.0
    %5061 = vmatpush2.msra.mxu0 0.0
    %5062 = vmatprep.subr.mxu0 0.0
    %5063 = vmatpush2.msra.mxu0 0.0
    %5064 = vmatprep.subr.mxu0 0.0
    %5065 = vmatpush2.msra.mxu0 0.0
    %5066 = vmatprep.subr.mxu0 0.0
    %5067 = vmatpush2.msra.mxu0 0.0
    %5068 = vmatprep.subr.mxu0 0.0
    %5069 = vmatpush2.msra.mxu0 0.0
    %5070 = vmatprep.subr.mxu0 0.0
    %5071 = vmatpush2.msra.mxu0 0.0
    %5072 = vmatprep.subr.mxu0 0.0
    %5073 = vmatpush2.msra.mxu0 0.0
    %5074 = vmatprep.subr.mxu0 0.0
    %5075 = vmatpush2.msra.mxu0 0.0
    %5076 = vmatprep.subr.mxu0 0.0
    %5077 = vmatpush2.msra.mxu0 0.0
    %5078 = vmatprep.subr.mxu0 0.0
    %5079 = vmatpush2.msra.mxu0 0.0
    %5080 = vmatprep.subr.mxu0 0.0
    %5081 = vmatpush2.msra.mxu0 0.0
    %5082 = vmatprep.subr.mxu0 0.0
    %5083 = vmatpush2.msra.mxu0 0.0
    %5084 = vmatprep.subr.mxu0 0.0
    %5085 = vmatpush2.msra.mxu0 0.0
    %5086 = vmatprep.subr.mxu0 0.0
    %5087 = vmatpush2.msra.mxu0 0.0
    %5088 = vmatprep.subr.mxu0 0.0
    %5089 = vmatpush2.msra.mxu0 0.0
    %5090 = vmatprep.mubr.f32.mxu0 0.0
    %v5091 = vand.u32 %v4718, 4294901760
    %5092 = vmatmul.mubr.f32.gmra.mxu0 %v5091
    %v5093 = vpop.f32.mrf.mxu0
    %v5094 = vadd.f32 %v5020, %v5093
    %v5095 = vpop.f32.mrf.mxu0
    %5096 = vdwg.mxu0
    %5097 = vmatprep.subr.mxu0 0.0
    %5098 = vmatpush1.msra.mxu0 0.0
    %5099 = vmatprep.subr.mxu0 0.0
    %5100 = vmatpush1.msra.mxu0 0.0
    %5101 = vmatprep.subr.mxu0 0.0
    %5102 = vmatpush1.msra.mxu0 0.0
    %5103 = vmatprep.subr.mxu0 0.0
    %5104 = vmatpush1.msra.mxu0 0.0
    %5105 = vmatprep.subr.mxu0 0.0
    %5106 = vmatpush1.msra.mxu0 0.0
    %5107 = vmatprep.subr.mxu0 0.0
    %5108 = vmatpush1.msra.mxu0 0.0
    %5109 = vmatprep.subr.mxu0 0.0
    %5110 = vmatpush1.msra.mxu0 0.0
    %5111 = vmatprep.subr.mxu0 0.0
    %5112 = vmatpush1.msra.mxu0 0.0
    %5113 = vmatprep.subr.mxu0 0.0
    %5114 = vmatpush1.msra.mxu0 0.0
    %5115 = vmatprep.subr.mxu0 0.0
    %5116 = vmatpush1.msra.mxu0 0.0
    %5117 = vmatprep.subr.mxu0 0.0
    %5118 = vmatpush1.msra.mxu0 0.0
    %5119 = vmatprep.subr.mxu0 0.0
    %5120 = vmatpush1.msra.mxu0 0.0
    %5121 = vmatprep.subr.mxu0 0.0
    %5122 = vmatpush1.msra.mxu0 0.0
    %5123 = vmatprep.subr.mxu0 0.0
    %5124 = vmatpush1.msra.mxu0 0.0
    %5125 = vmatprep.subr.mxu0 0.0
    %5126 = vmatpush1.msra.mxu0 0.0
    %5127 = vmatprep.subr.mxu0 0.0
    %v5128 = vand.u32 %v4721, 4294901760
    %5129 = vmatpush1.msra.mxu0 %v5128
    %5130 = vmatprep.subr.mxu0 0.0
    %5131 = vmatpush2.msra.mxu0 0.0
    %5132 = vmatprep.subr.mxu0 0.0
    %5133 = vmatpush2.msra.mxu0 0.0
    %5134 = vmatprep.subr.mxu0 0.0
    %5135 = vmatpush2.msra.mxu0 0.0
    %5136 = vmatprep.subr.mxu0 0.0
    %5137 = vmatpush2.msra.mxu0 0.0
    %5138 = vmatprep.subr.mxu0 0.0
    %5139 = vmatpush2.msra.mxu0 0.0
    %5140 = vmatprep.subr.mxu0 0.0
    %5141 = vmatpush2.msra.mxu0 0.0
    %5142 = vmatprep.subr.mxu0 0.0
    %5143 = vmatpush2.msra.mxu0 0.0
    %5144 = vmatprep.subr.mxu0 0.0
    %5145 = vmatpush2.msra.mxu0 0.0
    %5146 = vmatprep.subr.mxu0 0.0
    %5147 = vmatpush2.msra.mxu0 0.0
    %5148 = vmatprep.subr.mxu0 0.0
    %5149 = vmatpush2.msra.mxu0 0.0
    %5150 = vmatprep.subr.mxu0 0.0
    %5151 = vmatpush2.msra.mxu0 0.0
    %5152 = vmatprep.subr.mxu0 0.0
    %5153 = vmatpush2.msra.mxu0 0.0
    %5154 = vmatprep.subr.mxu0 0.0
    %5155 = vmatpush2.msra.mxu0 0.0
    %5156 = vmatprep.subr.mxu0 0.0
    %5157 = vmatpush2.msra.mxu0 0.0
    %5158 = vmatprep.subr.mxu0 0.0
    %5159 = vmatpush2.msra.mxu0 0.0
    %5160 = vmatprep.subr.mxu0 0.0
    %5161 = vmatpush2.msra.mxu0 0.0
    %5162 = vmatprep.mubr.f32.mxu0 0.0
    %v5163 = vand.u32 %v4718, 4294901760
    %5164 = vmatmul.mubr.f32.gmra.mxu0 %v5163
    %v5165 = vpop.f32.mrf.mxu0
    %v5166 = vadd.f32 %v5094, %v5165
    %v5167 = vpop.f32.mrf.mxu0
    %5168 = vdwg.mxu0
    %v5169 = vld [vmem:[#allocation2 + $0x98] sm:$0xff]
    %v5170 = vld [vmem:[#allocation2 + $0xa0] sm:$0xff]
    %v5171 = vld [vmem:[#allocation2 + $0xa8] sm:$0xff]
    %v5172 = vld [vmem:[#allocation2 + $0xb0] sm:$0x1]
    %v5173 = vlaneseq
    %v5174 = vshrl.u32 %v5173, 7
    %v5175 = vsub.s32 0, %v5174
    %v5176 = vrot.slane %v5172, %v5175
    %v5178 = vsel %vm496, %v5166, 0
    %5180 = vmatprep.subr.mxu0 0.0
    %5181 = vmatpush1.msra.mxu0 0.0
    %5182 = vmatprep.subr.mxu0 0.0
    %5183 = vmatpush1.msra.mxu0 0.0
    %5184 = vmatprep.subr.mxu0 0.0
    %5185 = vmatpush1.msra.mxu0 0.0
    %5186 = vmatprep.subr.mxu0 0.0
    %5187 = vmatpush1.msra.mxu0 0.0
    %5188 = vmatprep.subr.mxu0 0.0
    %5189 = vmatpush1.msra.mxu0 0.0
    %5190 = vmatprep.subr.mxu0 0.0
    %5191 = vmatpush1.msra.mxu0 0.0
    %5192 = vmatprep.subr.mxu0 0.0
    %5193 = vmatpush1.msra.mxu0 0.0
    %5194 = vmatprep.subr.mxu0 0.0
    %5195 = vmatpush1.msra.mxu0 0.0
    %5196 = vmatprep.subr.mxu0 0.0
    %5197 = vmatpush1.msra.mxu0 0.0
    %5198 = vmatprep.subr.mxu0 0.0
    %5199 = vmatpush1.msra.mxu0 0.0
    %5200 = vmatprep.subr.mxu0 0.0
    %5201 = vmatpush1.msra.mxu0 0.0
    %5202 = vmatprep.subr.mxu0 0.0
    %5203 = vmatpush1.msra.mxu0 0.0
    %5204 = vmatprep.subr.mxu0 0.0
    %5205 = vmatpush1.msra.mxu0 0.0
    %5206 = vmatprep.subr.mxu0 0.0
    %v5207 = vand.u32 %v5171, 4294901760
    %5208 = vmatpush1.msra.mxu0 %v5207
    %5209 = vmatprep.subr.mxu0 0.0
    %v5210 = vand.u32 %v5170, 4294901760
    %5211 = vmatpush1.msra.mxu0 %v5210
    %5212 = vmatprep.subr.mxu0 0.0
    %v5213 = vand.u32 %v5169, 4294901760
    %5214 = vmatpush1.msra.mxu0 %v5213
    %5215 = vmatprep.subr.mxu0 0.0
    %5216 = vmatpush2.msra.mxu0 0.0
    %5217 = vmatprep.subr.mxu0 0.0
    %5218 = vmatpush2.msra.mxu0 0.0
    %5219 = vmatprep.subr.mxu0 0.0
    %5220 = vmatpush2.msra.mxu0 0.0
    %5221 = vmatprep.subr.mxu0 0.0
    %5222 = vmatpush2.msra.mxu0 0.0
    %5223 = vmatprep.subr.mxu0 0.0
    %5224 = vmatpush2.msra.mxu0 0.0
    %5225 = vmatprep.subr.mxu0 0.0
    %5226 = vmatpush2.msra.mxu0 0.0
    %5227 = vmatprep.subr.mxu0 0.0
    %5228 = vmatpush2.msra.mxu0 0.0
    %5229 = vmatprep.subr.mxu0 0.0
    %5230 = vmatpush2.msra.mxu0 0.0
    %5231 = vmatprep.subr.mxu0 0.0
    %5232 = vmatpush2.msra.mxu0 0.0
    %5233 = vmatprep.subr.mxu0 0.0
    %5234 = vmatpush2.msra.mxu0 0.0
    %5235 = vmatprep.subr.mxu0 0.0
    %5236 = vmatpush2.msra.mxu0 0.0
    %5237 = vmatprep.subr.mxu0 0.0
    %5238 = vmatpush2.msra.mxu0 0.0
    %5239 = vmatprep.subr.mxu0 0.0
    %5240 = vmatpush2.msra.mxu0 0.0
    %5241 = vmatprep.subr.mxu0 0.0
    %5242 = vmatpush2.msra.mxu0 0.0
    %5243 = vmatprep.subr.mxu0 0.0
    %5244 = vmatpush2.msra.mxu0 0.0
    %5245 = vmatprep.subr.mxu0 0.0
    %5246 = vmatpush2.msra.mxu0 0.0
    %5247 = vmatprep.mubr.f32.mxu0 0.0
    %v5248 = vand.u32 %v5178, 4294901760
    %v5249 = vsub.f32 %v5178, %v5248
    %v5250 = vand.u32 %v5249, 4294901760
    %v5251 = vsub.f32 %v5249, %v5250
    %v5252 = vand.u32 %v5251, 4294901760
    %5253 = vmatmul.mubr.f32.gmra.mxu0 %v5252
    %v5254 = vpop.f32.mrf.mxu0
    %v5255 = vadd.f32 %v5176, %v5254
    %v5256 = vpop.f32.mrf.mxu0
    %5257 = vdwg.mxu0
    %5258 = vmatprep.subr.mxu0 0.0
    %5259 = vmatpush1.msra.mxu0 0.0
    %5260 = vmatprep.subr.mxu0 0.0
    %5261 = vmatpush1.msra.mxu0 0.0
    %5262 = vmatprep.subr.mxu0 0.0
    %5263 = vmatpush1.msra.mxu0 0.0
    %5264 = vmatprep.subr.mxu0 0.0
    %5265 = vmatpush1.msra.mxu0 0.0
    %5266 = vmatprep.subr.mxu0 0.0
    %5267 = vmatpush1.msra.mxu0 0.0
    %5268 = vmatprep.subr.mxu0 0.0
    %5269 = vmatpush1.msra.mxu0 0.0
    %5270 = vmatprep.subr.mxu0 0.0
    %5271 = vmatpush1.msra.mxu0 0.0
    %5272 = vmatprep.subr.mxu0 0.0
    %5273 = vmatpush1.msra.mxu0 0.0
    %5274 = vmatprep.subr.mxu0 0.0
    %5275 = vmatpush1.msra.mxu0 0.0
    %5276 = vmatprep.subr.mxu0 0.0
    %5277 = vmatpush1.msra.mxu0 0.0
    %5278 = vmatprep.subr.mxu0 0.0
    %5279 = vmatpush1.msra.mxu0 0.0
    %5280 = vmatprep.subr.mxu0 0.0
    %5281 = vmatpush1.msra.mxu0 0.0
    %5282 = vmatprep.subr.mxu0 0.0
    %5283 = vmatpush1.msra.mxu0 0.0
    %5284 = vmatprep.subr.mxu0 0.0
    %v5285 = vand.u32 %v5171, 4294901760
    %v5286 = vsub.f32 %v5171, %v5285
    %v5287 = vand.u32 %v5286, 4294901760
    %v5288 = vsub.f32 %v5286, %v5287
    %v5289 = vand.u32 %v5288, 4294901760
    %5290 = vmatpush1.msra.mxu0 %v5289
    %5291 = vmatprep.subr.mxu0 0.0
    %v5292 = vand.u32 %v5170, 4294901760
    %v5293 = vsub.f32 %v5170, %v5292
    %v5294 = vand.u32 %v5293, 4294901760
    %v5295 = vsub.f32 %v5293, %v5294
    %v5296 = vand.u32 %v5295, 4294901760
    %5297 = vmatpush1.msra.mxu0 %v5296
    %5298 = vmatprep.subr.mxu0 0.0
    %v5299 = vand.u32 %v5169, 4294901760
    %v5300 = vsub.f32 %v5169, %v5299
    %v5301 = vand.u32 %v5300, 4294901760
    %v5302 = vsub.f32 %v5300, %v5301
    %v5303 = vand.u32 %v5302, 4294901760
    %5304 = vmatpush1.msra.mxu0 %v5303
    %5305 = vmatprep.subr.mxu0 0.0
    %5306 = vmatpush2.msra.mxu0 0.0
    %5307 = vmatprep.subr.mxu0 0.0
    %5308 = vmatpush2.msra.mxu0 0.0
    %5309 = vmatprep.subr.mxu0 0.0
    %5310 = vmatpush2.msra.mxu0 0.0
    %5311 = vmatprep.subr.mxu0 0.0
    %5312 = vmatpush2.msra.mxu0 0.0
    %5313 = vmatprep.subr.mxu0 0.0
    %5314 = vmatpush2.msra.mxu0 0.0
    %5315 = vmatprep.subr.mxu0 0.0
    %5316 = vmatpush2.msra.mxu0 0.0
    %5317 = vmatprep.subr.mxu0 0.0
    %5318 = vmatpush2.msra.mxu0 0.0
    %5319 = vmatprep.subr.mxu0 0.0
    %5320 = vmatpush2.msra.mxu0 0.0
    %5321 = vmatprep.subr.mxu0 0.0
    %5322 = vmatpush2.msra.mxu0 0.0
    %5323 = vmatprep.subr.mxu0 0.0
    %5324 = vmatpush2.msra.mxu0 0.0
    %5325 = vmatprep.subr.mxu0 0.0
    %5326 = vmatpush2.msra.mxu0 0.0
    %5327 = vmatprep.subr.mxu0 0.0
    %5328 = vmatpush2.msra.mxu0 0.0
    %5329 = vmatprep.subr.mxu0 0.0
    %5330 = vmatpush2.msra.mxu0 0.0
    %5331 = vmatprep.subr.mxu0 0.0
    %5332 = vmatpush2.msra.mxu0 0.0
    %5333 = vmatprep.subr.mxu0 0.0
    %5334 = vmatpush2.msra.mxu0 0.0
    %5335 = vmatprep.subr.mxu0 0.0
    %5336 = vmatpush2.msra.mxu0 0.0
    %5337 = vmatprep.mubr.f32.mxu0 0.0
    %v5338 = vand.u32 %v5178, 4294901760
    %5339 = vmatmul.mubr.f32.gmra.mxu0 %v5338
    %v5340 = vpop.f32.mrf.mxu0
    %v5341 = vadd.f32 %v5255, %v5340
    %v5342 = vpop.f32.mrf.mxu0
    %5343 = vdwg.mxu0
    %5344 = vmatprep.subr.mxu0 0.0
    %5345 = vmatpush1.msra.mxu0 0.0
    %5346 = vmatprep.subr.mxu0 0.0
    %5347 = vmatpush1.msra.mxu0 0.0
    %5348 = vmatprep.subr.mxu0 0.0
    %5349 = vmatpush1.msra.mxu0 0.0
    %5350 = vmatprep.subr.mxu0 0.0
    %5351 = vmatpush1.msra.mxu0 0.0
    %5352 = vmatprep.subr.mxu0 0.0
    %5353 = vmatpush1.msra.mxu0 0.0
    %5354 = vmatprep.subr.mxu0 0.0
    %5355 = vmatpush1.msra.mxu0 0.0
    %5356 = vmatprep.subr.mxu0 0.0
    %5357 = vmatpush1.msra.mxu0 0.0
    %5358 = vmatprep.subr.mxu0 0.0
    %5359 = vmatpush1.msra.mxu0 0.0
    %5360 = vmatprep.subr.mxu0 0.0
    %5361 = vmatpush1.msra.mxu0 0.0
    %5362 = vmatprep.subr.mxu0 0.0
    %5363 = vmatpush1.msra.mxu0 0.0
    %5364 = vmatprep.subr.mxu0 0.0
    %5365 = vmatpush1.msra.mxu0 0.0
    %5366 = vmatprep.subr.mxu0 0.0
    %5367 = vmatpush1.msra.mxu0 0.0
    %5368 = vmatprep.subr.mxu0 0.0
    %5369 = vmatpush1.msra.mxu0 0.0
    %5370 = vmatprep.subr.mxu0 0.0
    %v5371 = vand.u32 %v5171, 4294901760
    %v5372 = vsub.f32 %v5171, %v5371
    %5373 = vmatpush1.msra.mxu0 %v5372
    %5374 = vmatprep.subr.mxu0 0.0
    %v5375 = vand.u32 %v5170, 4294901760
    %v5376 = vsub.f32 %v5170, %v5375
    %5377 = vmatpush1.msra.mxu0 %v5376
    %5378 = vmatprep.subr.mxu0 0.0
    %v5379 = vand.u32 %v5169, 4294901760
    %v5380 = vsub.f32 %v5169, %v5379
    %5381 = vmatpush1.msra.mxu0 %v5380
    %5382 = vmatprep.subr.mxu0 0.0
    %5383 = vmatpush2.msra.mxu0 0.0
    %5384 = vmatprep.subr.mxu0 0.0
    %5385 = vmatpush2.msra.mxu0 0.0
    %5386 = vmatprep.subr.mxu0 0.0
    %5387 = vmatpush2.msra.mxu0 0.0
    %5388 = vmatprep.subr.mxu0 0.0
    %5389 = vmatpush2.msra.mxu0 0.0
    %5390 = vmatprep.subr.mxu0 0.0
    %5391 = vmatpush2.msra.mxu0 0.0
    %5392 = vmatprep.subr.mxu0 0.0
    %5393 = vmatpush2.msra.mxu0 0.0
    %5394 = vmatprep.subr.mxu0 0.0
    %5395 = vmatpush2.msra.mxu0 0.0
    %5396 = vmatprep.subr.mxu0 0.0
    %5397 = vmatpush2.msra.mxu0 0.0
    %5398 = vmatprep.subr.mxu0 0.0
    %5399 = vmatpush2.msra.mxu0 0.0
    %5400 = vmatprep.subr.mxu0 0.0
    %5401 = vmatpush2.msra.mxu0 0.0
    %5402 = vmatprep.subr.mxu0 0.0
    %5403 = vmatpush2.msra.mxu0 0.0
    %5404 = vmatprep.subr.mxu0 0.0
    %5405 = vmatpush2.msra.mxu0 0.0
    %5406 = vmatprep.subr.mxu0 0.0
    %5407 = vmatpush2.msra.mxu0 0.0
    %5408 = vmatprep.subr.mxu0 0.0
    %5409 = vmatpush2.msra.mxu0 0.0
    %5410 = vmatprep.subr.mxu0 0.0
    %5411 = vmatpush2.msra.mxu0 0.0
    %5412 = vmatprep.subr.mxu0 0.0
    %5413 = vmatpush2.msra.mxu0 0.0
    %5414 = vmatprep.mubr.f32.mxu0 0.0
    %v5415 = vand.u32 %v5178, 4294901760
    %v5416 = vsub.f32 %v5178, %v5415
    %5417 = vmatmul.mubr.f32.gmra.mxu0 %v5416
    %v5418 = vpop.f32.mrf.mxu0
    %v5419 = vadd.f32 %v5341, %v5418
    %v5420 = vpop.f32.mrf.mxu0
    %5421 = vdwg.mxu0
    %5422 = vmatprep.subr.mxu0 0.0
    %5423 = vmatpush1.msra.mxu0 0.0
    %5424 = vmatprep.subr.mxu0 0.0
    %5425 = vmatpush1.msra.mxu0 0.0
    %5426 = vmatprep.subr.mxu0 0.0
    %5427 = vmatpush1.msra.mxu0 0.0
    %5428 = vmatprep.subr.mxu0 0.0
    %5429 = vmatpush1.msra.mxu0 0.0
    %5430 = vmatprep.subr.mxu0 0.0
    %5431 = vmatpush1.msra.mxu0 0.0
    %5432 = vmatprep.subr.mxu0 0.0
    %5433 = vmatpush1.msra.mxu0 0.0
    %5434 = vmatprep.subr.mxu0 0.0
    %5435 = vmatpush1.msra.mxu0 0.0
    %5436 = vmatprep.subr.mxu0 0.0
    %5437 = vmatpush1.msra.mxu0 0.0
    %5438 = vmatprep.subr.mxu0 0.0
    %5439 = vmatpush1.msra.mxu0 0.0
    %5440 = vmatprep.subr.mxu0 0.0
    %5441 = vmatpush1.msra.mxu0 0.0
    %5442 = vmatprep.subr.mxu0 0.0
    %5443 = vmatpush1.msra.mxu0 0.0
    %5444 = vmatprep.subr.mxu0 0.0
    %5445 = vmatpush1.msra.mxu0 0.0
    %5446 = vmatprep.subr.mxu0 0.0
    %5447 = vmatpush1.msra.mxu0 0.0
    %5448 = vmatprep.subr.mxu0 0.0
    %v5449 = vand.u32 %v5171, 4294901760
    %5450 = vmatpush1.msra.mxu0 %v5449
    %5451 = vmatprep.subr.mxu0 0.0
    %v5452 = vand.u32 %v5170, 4294901760
    %5453 = vmatpush1.msra.mxu0 %v5452
    %5454 = vmatprep.subr.mxu0 0.0
    %v5455 = vand.u32 %v5169, 4294901760
    %5456 = vmatpush1.msra.mxu0 %v5455
    %5457 = vmatprep.subr.mxu0 0.0
    %5458 = vmatpush2.msra.mxu0 0.0
    %5459 = vmatprep.subr.mxu0 0.0
    %5460 = vmatpush2.msra.mxu0 0.0
    %5461 = vmatprep.subr.mxu0 0.0
    %5462 = vmatpush2.msra.mxu0 0.0
    %5463 = vmatprep.subr.mxu0 0.0
    %5464 = vmatpush2.msra.mxu0 0.0
    %5465 = vmatprep.subr.mxu0 0.0
    %5466 = vmatpush2.msra.mxu0 0.0
    %5467 = vmatprep.subr.mxu0 0.0
    %5468 = vmatpush2.msra.mxu0 0.0
    %5469 = vmatprep.subr.mxu0 0.0
    %5470 = vmatpush2.msra.mxu0 0.0
    %5471 = vmatprep.subr.mxu0 0.0
    %5472 = vmatpush2.msra.mxu0 0.0
    %5473 = vmatprep.subr.mxu0 0.0
    %5474 = vmatpush2.msra.mxu0 0.0
    %5475 = vmatprep.subr.mxu0 0.0
    %5476 = vmatpush2.msra.mxu0 0.0
    %5477 = vmatprep.subr.mxu0 0.0
    %5478 = vmatpush2.msra.mxu0 0.0
    %5479 = vmatprep.subr.mxu0 0.0
    %5480 = vmatpush2.msra.mxu0 0.0
    %5481 = vmatprep.subr.mxu0 0.0
    %5482 = vmatpush2.msra.mxu0 0.0
    %5483 = vmatprep.subr.mxu0 0.0
    %5484 = vmatpush2.msra.mxu0 0.0
    %5485 = vmatprep.subr.mxu0 0.0
    %5486 = vmatpush2.msra.mxu0 0.0
    %5487 = vmatprep.subr.mxu0 0.0
    %5488 = vmatpush2.msra.mxu0 0.0
    %5489 = vmatprep.mubr.f32.mxu0 0.0
    %v5490 = vand.u32 %v5178, 4294901760
    %v5491 = vsub.f32 %v5178, %v5490
    %v5492 = vand.u32 %v5491, 4294901760
    %5493 = vmatmul.mubr.f32.gmra.mxu0 %v5492
    %v5494 = vpop.f32.mrf.mxu0
    %v5495 = vadd.f32 %v5419, %v5494
    %v5496 = vpop.f32.mrf.mxu0
    %5497 = vdwg.mxu0
    %5498 = vmatprep.subr.mxu0 0.0
    %5499 = vmatpush1.msra.mxu0 0.0
    %5500 = vmatprep.subr.mxu0 0.0
    %5501 = vmatpush1.msra.mxu0 0.0
    %5502 = vmatprep.subr.mxu0 0.0
    %5503 = vmatpush1.msra.mxu0 0.0
    %5504 = vmatprep.subr.mxu0 0.0
    %5505 = vmatpush1.msra.mxu0 0.0
    %5506 = vmatprep.subr.mxu0 0.0
    %5507 = vmatpush1.msra.mxu0 0.0
    %5508 = vmatprep.subr.mxu0 0.0
    %5509 = vmatpush1.msra.mxu0 0.0
    %5510 = vmatprep.subr.mxu0 0.0
    %5511 = vmatpush1.msra.mxu0 0.0
    %5512 = vmatprep.subr.mxu0 0.0
    %5513 = vmatpush1.msra.mxu0 0.0
    %5514 = vmatprep.subr.mxu0 0.0
    %5515 = vmatpush1.msra.mxu0 0.0
    %5516 = vmatprep.subr.mxu0 0.0
    %5517 = vmatpush1.msra.mxu0 0.0
    %5518 = vmatprep.subr.mxu0 0.0
    %5519 = vmatpush1.msra.mxu0 0.0
    %5520 = vmatprep.subr.mxu0 0.0
    %5521 = vmatpush1.msra.mxu0 0.0
    %5522 = vmatprep.subr.mxu0 0.0
    %5523 = vmatpush1.msra.mxu0 0.0
    %5524 = vmatprep.subr.mxu0 0.0
    %v5525 = vand.u32 %v5171, 4294901760
    %v5526 = vsub.f32 %v5171, %v5525
    %v5527 = vand.u32 %v5526, 4294901760
    %5528 = vmatpush1.msra.mxu0 %v5527
    %5529 = vmatprep.subr.mxu0 0.0
    %v5530 = vand.u32 %v5170, 4294901760
    %v5531 = vsub.f32 %v5170, %v5530
    %v5532 = vand.u32 %v5531, 4294901760
    %5533 = vmatpush1.msra.mxu0 %v5532
    %5534 = vmatprep.subr.mxu0 0.0
    %v5535 = vand.u32 %v5169, 4294901760
    %v5536 = vsub.f32 %v5169, %v5535
    %v5537 = vand.u32 %v5536, 4294901760
    %5538 = vmatpush1.msra.mxu0 %v5537
    %5539 = vmatprep.subr.mxu0 0.0
    %5540 = vmatpush2.msra.mxu0 0.0
    %5541 = vmatprep.subr.mxu0 0.0
    %5542 = vmatpush2.msra.mxu0 0.0
    %5543 = vmatprep.subr.mxu0 0.0
    %5544 = vmatpush2.msra.mxu0 0.0
    %5545 = vmatprep.subr.mxu0 0.0
    %5546 = vmatpush2.msra.mxu0 0.0
    %5547 = vmatprep.subr.mxu0 0.0
    %5548 = vmatpush2.msra.mxu0 0.0
    %5549 = vmatprep.subr.mxu0 0.0
    %5550 = vmatpush2.msra.mxu0 0.0
    %5551 = vmatprep.subr.mxu0 0.0
    %5552 = vmatpush2.msra.mxu0 0.0
    %5553 = vmatprep.subr.mxu0 0.0
    %5554 = vmatpush2.msra.mxu0 0.0
    %5555 = vmatprep.subr.mxu0 0.0
    %5556 = vmatpush2.msra.mxu0 0.0
    %5557 = vmatprep.subr.mxu0 0.0
    %5558 = vmatpush2.msra.mxu0 0.0
    %5559 = vmatprep.subr.mxu0 0.0
    %5560 = vmatpush2.msra.mxu0 0.0
    %5561 = vmatprep.subr.mxu0 0.0
    %5562 = vmatpush2.msra.mxu0 0.0
    %5563 = vmatprep.subr.mxu0 0.0
    %5564 = vmatpush2.msra.mxu0 0.0
    %5565 = vmatprep.subr.mxu0 0.0
    %5566 = vmatpush2.msra.mxu0 0.0
    %5567 = vmatprep.subr.mxu0 0.0
    %5568 = vmatpush2.msra.mxu0 0.0
    %5569 = vmatprep.subr.mxu0 0.0
    %5570 = vmatpush2.msra.mxu0 0.0
    %5571 = vmatprep.mubr.f32.mxu0 0.0
    %v5572 = vand.u32 %v5178, 4294901760
    %5573 = vmatmul.mubr.f32.gmra.mxu0 %v5572
    %v5574 = vpop.f32.mrf.mxu0
    %v5575 = vadd.f32 %v5495, %v5574
    %v5576 = vpop.f32.mrf.mxu0
    %5577 = vdwg.mxu0
    %5578 = vmatprep.subr.mxu0 0.0
    %5579 = vmatpush1.msra.mxu0 0.0
    %5580 = vmatprep.subr.mxu0 0.0
    %5581 = vmatpush1.msra.mxu0 0.0
    %5582 = vmatprep.subr.mxu0 0.0
    %5583 = vmatpush1.msra.mxu0 0.0
    %5584 = vmatprep.subr.mxu0 0.0
    %5585 = vmatpush1.msra.mxu0 0.0
    %5586 = vmatprep.subr.mxu0 0.0
    %5587 = vmatpush1.msra.mxu0 0.0
    %5588 = vmatprep.subr.mxu0 0.0
    %5589 = vmatpush1.msra.mxu0 0.0
    %5590 = vmatprep.subr.mxu0 0.0
    %5591 = vmatpush1.msra.mxu0 0.0
    %5592 = vmatprep.subr.mxu0 0.0
    %5593 = vmatpush1.msra.mxu0 0.0
    %5594 = vmatprep.subr.mxu0 0.0
    %5595 = vmatpush1.msra.mxu0 0.0
    %5596 = vmatprep.subr.mxu0 0.0
    %5597 = vmatpush1.msra.mxu0 0.0
    %5598 = vmatprep.subr.mxu0 0.0
    %5599 = vmatpush1.msra.mxu0 0.0
    %5600 = vmatprep.subr.mxu0 0.0
    %5601 = vmatpush1.msra.mxu0 0.0
    %5602 = vmatprep.subr.mxu0 0.0
    %5603 = vmatpush1.msra.mxu0 0.0
    %5604 = vmatprep.subr.mxu0 0.0
    %v5605 = vand.u32 %v5171, 4294901760
    %5606 = vmatpush1.msra.mxu0 %v5605
    %5607 = vmatprep.subr.mxu0 0.0
    %v5608 = vand.u32 %v5170, 4294901760
    %5609 = vmatpush1.msra.mxu0 %v5608
    %5610 = vmatprep.subr.mxu0 0.0
    %v5611 = vand.u32 %v5169, 4294901760
    %5612 = vmatpush1.msra.mxu0 %v5611
    %5613 = vmatprep.subr.mxu0 0.0
    %5614 = vmatpush2.msra.mxu0 0.0
    %5615 = vmatprep.subr.mxu0 0.0
    %5616 = vmatpush2.msra.mxu0 0.0
    %5617 = vmatprep.subr.mxu0 0.0
    %5618 = vmatpush2.msra.mxu0 0.0
    %5619 = vmatprep.subr.mxu0 0.0
    %5620 = vmatpush2.msra.mxu0 0.0
    %5621 = vmatprep.subr.mxu0 0.0
    %5622 = vmatpush2.msra.mxu0 0.0
    %5623 = vmatprep.subr.mxu0 0.0
    %5624 = vmatpush2.msra.mxu0 0.0
    %5625 = vmatprep.subr.mxu0 0.0
    %5626 = vmatpush2.msra.mxu0 0.0
    %5627 = vmatprep.subr.mxu0 0.0
    %5628 = vmatpush2.msra.mxu0 0.0
    %5629 = vmatprep.subr.mxu0 0.0
    %5630 = vmatpush2.msra.mxu0 0.0
    %5631 = vmatprep.subr.mxu0 0.0
    %5632 = vmatpush2.msra.mxu0 0.0
    %5633 = vmatprep.subr.mxu0 0.0
    %5634 = vmatpush2.msra.mxu0 0.0
    %5635 = vmatprep.subr.mxu0 0.0
    %5636 = vmatpush2.msra.mxu0 0.0
    %5637 = vmatprep.subr.mxu0 0.0
    %5638 = vmatpush2.msra.mxu0 0.0
    %5639 = vmatprep.subr.mxu0 0.0
    %5640 = vmatpush2.msra.mxu0 0.0
    %5641 = vmatprep.subr.mxu0 0.0
    %5642 = vmatpush2.msra.mxu0 0.0
    %5643 = vmatprep.subr.mxu0 0.0
    %5644 = vmatpush2.msra.mxu0 0.0
    %5645 = vmatprep.mubr.f32.mxu0 0.0
    %v5646 = vand.u32 %v5178, 4294901760
    %5647 = vmatmul.mubr.f32.gmra.mxu0 %v5646
    %v5648 = vpop.f32.mrf.mxu0
    %v5649 = vadd.f32 %v5575, %v5648
    %v5650 = vpop.f32.mrf.mxu0
    %5651 = vdwg.mxu0
    %vm5652 = vcmask 64512
    %5653 = vst.msk [vmem:[#allocation5] sm:$0xff] %vm5652, %v5649
    // Predicated region
    $region14: #{_traced_forward.1} parent=1 // pred_check
      _
    $region15: #{_traced_forward.1} parent=1 // pred_check_branch
      %5655 = sbr.rel (0) target = $region17
    $region16: #{_traced_forward.1} parent=1 // pred_region
      %s5657 = ssub.s32 128, 128
      %5658 = vsyncadd [#allocation4], %s5657
      %s5660 = sshll.u32 [#allocation5], 4
      %s5661 = int_to_ptr.vmem [resolvable:$true] %s5660
      %5663 = dma.vmem_to_hbm [thread:$0]  %s5661, 128, %s2, [#allocation4]
    $region17: #{_traced_forward.1} parent=1 // pred_fallthru
      _
    // Predicated region
    $region18: #{_traced_forward.1} parent=1 // pred_check
      _
    $region19: #{_traced_forward.1} parent=1 // pred_check_branch
      %5665 = sbr.rel (0) target = $region21
    $region20: #{_traced_forward.1} parent=1 // pred_region
      %5666 = dma.done [#allocation4], 128
    $region21: #{_traced_forward.1} parent=1 // pred_fallthru
      _
    %5667 = vsyncpa [#allocation3], 1
    %5668 = vsyncpa [#allocation4], 1

</llo_original>
